<compile_context>
chip_gen: v7x
topology: tpu7x:2x2x1
jax: 0.10.0
libtpu: 0.0.40
codegen_flags: <defaults>
</compile_context>

<pallas_src>
import functools

import jax
import jax.numpy as jnp
from jax.experimental import pallas as pl
from jax.experimental.pallas import tpu as pltpu

LANE = 128


def _round_up(x, m):
    return (x + m - 1) // m * m


def _double_conv_kernel(x_hbm, w1_ref, b1_ref, w2_ref, b2_ref, o_ref,
                        xbuf, cp_sem, mid_ref, *, H, W, TH, C1, C2):
    """Fused conv3x3+ReLU -> conv3x3+ReLU for one (batch, row-tile) grid step.

    x_hbm:   (N, Hp+4, W+2, C1)  zero-padded input, left in HBM (manual DMA).
    w1_ref:  (9, C1, C2)         conv1 weights, one (C1, C2) slab per tap.
    w2_ref:  (9, C2, C2)         conv2 weights.
    b1_ref, b2_ref: (1, C2)      f32 biases.
    o_ref:   (1, TH, W, C2)      lane-dense output tile.
    xbuf:    (2, TH+4, W+2, C1)  VMEM double buffer for the halo'd input row slab.
    cp_sem:  DMA semaphores (2,).
    mid_ref: (TH+2, W+2, C2)     VMEM scratch: conv1 activation + 1-row/1-col halo.
    """
    n = pl.program_id(0)
    t = pl.program_id(1)
    n_tiles = pl.num_programs(1)

    def slab(slot, row0):
        # (TH+4)-row halo'd slab of batch element n starting at padded row `row0`.
        return pltpu.make_async_copy(
            x_hbm.at[n, pl.ds(row0, TH + 4), :, :], xbuf.at[slot], cp_sem.at[slot])

    slot = t % 2

    # Prime the per-batch-element DMA chain (t iterates in order on one core:
    # the t axis is "arbitrary", so megacore can only shard the batch axis).
    @pl.when(t == 0)
    def _():
        slab(0, 0).start()

    # Wait for this tile's input slab; prefetch the next tile of the same image.
    slab(slot, t * TH).wait()

    @pl.when(t + 1 < n_tiles)
    def _():
        slab(1 - slot, (t + 1) * TH).start()

    xw = xbuf[slot]                                   # (TH+4, W+2, C1), compute dtype

    # ---- conv1 over TH+2 rows (1-row halo recompute so conv2 needs no HBM halo) ----
    # 9 accumulating per-tap matmuls: same MXU cycles as one wide K=9*C1 dot, but no
    # (TH+2)*W x 9*C1 im2col slab in VMEM.
    m1 = (TH + 2) * W
    acc1 = jnp.zeros((m1, C2), jnp.float32)
    for k in range(9):
        dy, dx = divmod(k, 3)
        a = xw[dy:dy + TH + 2, dx:dx + W, :].reshape(m1, C1)
        acc1 = acc1 + jnp.dot(a, w1_ref[k], preferred_element_type=jnp.float32)
    y1 = jnp.maximum(acc1 + b1_ref[...], 0.0).reshape(TH + 2, W, C2)

    # Halo rows outside the real image must act as conv2's zero padding, not conv1
    # applied to padded input -> mask them to zero (also handles the H%TH tail tile).
    row = jax.lax.broadcasted_iota(jnp.int32, (TH + 2, 1, 1), 0) + (t * TH - 1)
    y1 = jnp.where((row >= 0) & (row < H), y1, 0.0)

    # ---- intermediate activation stays in VMEM (never written to HBM) ----
    # Only the two halo columns need zeros; the interior is fully overwritten.
    zcol = jnp.zeros((TH + 2, 1, C2), mid_ref.dtype)
    mid_ref[:, 0:1, :] = zcol
    mid_ref[:, W + 1:W + 2, :] = zcol
    mid_ref[:, 1:W + 1, :] = y1.astype(mid_ref.dtype)

    # ---- conv2 over the TH output rows (9 accumulating per-tap matmuls) ----
    m2 = TH * W
    acc2 = jnp.zeros((m2, C2), jnp.float32)
    for k in range(9):
        dy, dx = divmod(k, 3)
        a = mid_ref[dy:dy + TH, dx:dx + W, :].reshape(m2, C2)
        acc2 = acc2 + jnp.dot(a, w2_ref[k], preferred_element_type=jnp.float32)
    y2 = jnp.maximum(acc2 + b2_ref[...], 0.0)
    o_ref[0] = y2.reshape(TH, W, C2).astype(o_ref.dtype)


def _weights_to_taps(w_oihw, cin_p, cout_p):
    """OIHW (Cout, Cin, 3, 3) -> (9, cin_p, cout_p), one lane-dense slab per tap."""
    cout, cin, kh, kw = w_oihw.shape
    w = jnp.pad(w_oihw, ((0, cout_p - cout), (0, cin_p - cin), (0, 0), (0, 0)))
    w = jnp.transpose(w, (2, 3, 1, 0))                # (3, 3, cin_p, cout_p)
    return w.reshape(kh * kw, cin_p, cout_p)


def double_conv(x_nchw, params, *, tile_rows=32, compute_dtype=jnp.bfloat16,
                vmem_limit_bytes=64 * 1024 * 1024):
    """Matches doubleConv.forward: NCHW in, NCHW out. Single fused Pallas kernel.

    compute_dtype=bf16 -> bf16 MXU operands, f32 accumulation (recommended).
    tile_rows: output rows per grid step (halo recompute cost ~2/tile_rows);
               reduce for v7x's 64 MiB VMEM at very wide feature maps.
    """
    w1, b1, w2, b2 = params                           # PyTorch OIHW weights, (Cout,) biases
    N, C_in, H, W = x_nchw.shape
    C_out = w1.shape[0]
    Cp_in = _round_up(C_in, LANE)
    Cp_out = _round_up(C_out, LANE)

    TH = min(tile_rows, H)
    Hp = _round_up(H, TH)                             # pad rows up; tail masked in-kernel
    n_tiles = Hp // TH

    # Layout glue (NCHW -> lane-padded NHWC).  The conv1 intermediate never touches HBM.
    # TODO(synk): carry lane-padded NHWC end-to-end across layers to drop these
    # wrapper-side transposes/pads/slices (extra HBM round trips on mem-bound shapes).
    x = jnp.transpose(x_nchw, (0, 2, 3, 1))
    x = jnp.pad(x, ((0, 0), (2, 2 + Hp - H), (1, 1), (0, Cp_in - C_in)))
    x = x.astype(compute_dtype)                       # halves input DMA bytes in bf16

    w1t = _weights_to_taps(w1, Cp_in, Cp_out).astype(compute_dtype)
    w2t = _weights_to_taps(w2, Cp_out, Cp_out).astype(compute_dtype)
    b1p = jnp.pad(b1, (0, Cp_out - C_out)).reshape(1, Cp_out).astype(jnp.float32)
    b2p = jnp.pad(b2, (0, Cp_out - C_out)).reshape(1, Cp_out).astype(jnp.float32)

    kernel = functools.partial(_double_conv_kernel, H=H, W=W, TH=TH,
                               C1=Cp_in, C2=Cp_out)
    out_padded = pl.pallas_call(
        kernel,
        out_shape=jax.ShapeDtypeStruct((N, Hp, W, Cp_out), x_nchw.dtype),
        grid_spec=pltpu.PrefetchScalarGridSpec(
            num_scalar_prefetch=0,
            grid=(N, n_tiles),
            in_specs=[
                # Input stays in HBM; the kernel DMAs only its halo'd row slab.
                pl.BlockSpec(memory_space=pl.ANY),
                pl.BlockSpec((9, Cp_in, Cp_out), lambda n, t: (0, 0, 0)),
                pl.BlockSpec((1, Cp_out), lambda n, t: (0, 0)),
                pl.BlockSpec((9, Cp_out, Cp_out), lambda n, t: (0, 0, 0)),
                pl.BlockSpec((1, Cp_out), lambda n, t: (0, 0)),
            ],
            out_specs=pl.BlockSpec((1, TH, W, Cp_out), lambda n, t: (n, t, 0, 0)),
            scratch_shapes=[
                pltpu.VMEM((2, TH + 4, W + 2, Cp_in), compute_dtype),  # input slab dbuf
                pltpu.SemaphoreType.DMA((2,)),
                pltpu.VMEM((TH + 2, W + 2, Cp_out), compute_dtype),    # conv1 activation
            ],
        ),
        compiler_params=pltpu.CompilerParams(
            # Batch axis shards across TensorCores; the row-tile axis must stay
            # "arbitrary" so the manual per-image DMA prefetch chain runs in order.
            dimension_semantics=("parallel", "arbitrary"),
            vmem_limit_bytes=vmem_limit_bytes,
        ),
    )(x, w1t, b1p, w2t, b2p)

    # Drop padded rows/lanes; back to NCHW (module contract).
    return jnp.transpose(out_padded[:, :H, :, :C_out], (0, 3, 1, 2))


def init_params(key, c_in, c_out):
    """Deterministic synthetic init, PyTorch OIHW weight layout."""
    k1, k2, k3, k4 = jax.random.split(key, 4)
    lim1 = 1.0 / jnp.sqrt(c_in * 9.0)
    lim2 = 1.0 / jnp.sqrt(c_out * 9.0)
    w1 = jax.random.uniform(k1, (c_out, c_in, 3, 3), jnp.float32, -lim1, lim1)
    b1 = jax.random.uniform(k2, (c_out,), jnp.float32, -lim1, lim1)
    w2 = jax.random.uniform(k3, (c_out, c_out, 3, 3), jnp.float32, -lim2, lim2)
    b2 = jax.random.uniform(k4, (c_out,), jnp.float32, -lim2, lim2)
    return w1, b1, w2, b2


def _reference(x_nchw, params):
    """Pure-JAX reference (lax conv) for correctness check."""
    w1, b1, w2, b2 = params
    dn = ("NCHW", "OIHW", "NCHW")
    y = jax.lax.conv_general_dilated(x_nchw, w1, (1, 1), "SAME", dimension_numbers=dn)
    y = jnp.maximum(y + b1[None, :, None, None], 0.0)
    y = jax.lax.conv_general_dilated(y, w2, (1, 1), "SAME", dimension_numbers=dn)
    y = jnp.maximum(y + b2[None, :, None, None], 0.0)
    return y


if __name__ == "__main__":
    key = jax.random.PRNGKey(0)
    kx, kp, kx2, kp2 = jax.random.split(key, 4)

    run = jax.jit(double_conv,
                  static_argnames=("tile_rows", "compute_dtype", "vmem_limit_bytes"))

    # Primary config.
    N, C_IN, C_OUT, H, W = 2, 4, 8, 16, 16
    x = jax.random.normal(kx, (N, C_IN, H, W), dtype=jnp.float32)
    params = init_params(kp, C_IN, C_OUT)
    ref = _reference(x, params)

    # 1) f32 compute path: tight check of fused-conv indexing / halo / masking / DMA chain.
    out_f32 = jax.block_until_ready(run(x, params, tile_rows=8, compute_dtype=jnp.float32))
    assert out_f32.shape == (N, C_OUT, H, W), out_f32.shape
    assert jnp.allclose(out_f32, ref, atol=1e-4, rtol=1e-4), "f32 mismatch vs reference"

    # 2) bf16-operand / f32-accumulate path (the fast MXU configuration).
    out_bf16 = jax.block_until_ready(run(x, params, tile_rows=8, compute_dtype=jnp.bfloat16))
    assert jnp.allclose(out_bf16, ref, atol=5e-2, rtol=5e-2), "bf16 mismatch vs reference"

    # 3) Ragged height + odd channel count: exercises H % tile_rows tail masking.
    N2, C_IN2, C_OUT2, H2, W2 = 1, 3, 8, 13, 16
    x2 = jax.random.normal(kx2, (N2, C_IN2, H2, W2), dtype=jnp.float32)
    params2 = init_params(kp2, C_IN2, C_OUT2)
    out2 = jax.block_until_ready(run(x2, params2, tile_rows=8, compute_dtype=jnp.float32))
    ref2 = _reference(x2, params2)
    assert out2.shape == (N2, C_OUT2, H2, W2), out2.shape
    assert jnp.allclose(out2, ref2, atol=1e-4, rtol=1e-4), "ragged-H mismatch vs reference"

    print("KERNEL_OK")
</pallas_src>

<mosaic_0001>
module attributes {stable_mosaic.version = 11 : i64} {
  func.func @_double_conv_kernel(%arg0: i32, %arg1: i32, %arg2: memref<2x20x18x128xf32, #tpu.memory_space<any>>, %arg3: memref<9x128x128xf32, #tpu.memory_space<vmem>>, %arg4: memref<1x128xf32, #tpu.memory_space<vmem>>, %arg5: memref<9x128x128xf32, #tpu.memory_space<vmem>>, %arg6: memref<1x128xf32, #tpu.memory_space<vmem>>, %arg7: memref<1x8x16x128xf32, #tpu.memory_space<vmem>>, %arg8: memref<2x12x18x128xf32, #tpu.memory_space<vmem>>, %arg9: memref<2x!tpu.dma_semaphore, #tpu.memory_space<semaphore_mem>>, %arg10: memref<10x18x128xf32, #tpu.memory_space<vmem>>) attributes {dimension_semantics = [#tpu.dimension_semantics<parallel>, #tpu.dimension_semantics<arbitrary>], iteration_bounds = array<i64: 2, 2>, scalar_prefetch = 0 : i64, scratch_operands = 3 : i64, tpu.core_type = #tpu.core_type<tc>, window_params = [{}, {pipeline_mode = #tpu.pipeline_mode<synchronous>, transform_indices = @transform_1, window_bounds = array<i64: 9, 128, 128>}, {pipeline_mode = #tpu.pipeline_mode<synchronous>, transform_indices = @transform_2, window_bounds = array<i64: 1, 128>}, {pipeline_mode = #tpu.pipeline_mode<synchronous>, transform_indices = @transform_3, window_bounds = array<i64: 9, 128, 128>}, {pipeline_mode = #tpu.pipeline_mode<synchronous>, transform_indices = @transform_4, window_bounds = array<i64: 1, 128>}, {transform_indices = @transform_5, window_bounds = array<i64: 1, 8, 16, 128>}]} {
    %c2_i32 = arith.constant 2 : i32
    %c0_i32 = arith.constant 0 : i32
    %0 = arith.cmpi eq, %c2_i32, %c0_i32 : i32
    %c1_i32 = arith.constant 1 : i32
    %1 = arith.select %0, %c1_i32, %c2_i32 : i32
    %2 = arith.remsi %arg1, %1 : i32
    %c0_i32_0 = arith.constant 0 : i32
    %3 = arith.cmpi ne, %2, %c0_i32_0 : i32
    %c0_i32_1 = arith.constant 0 : i32
    %4 = arith.cmpi slt, %2, %c0_i32_1 : i32
    %c0_i32_2 = arith.constant 0 : i32
    %5 = arith.cmpi slt, %1, %c0_i32_2 : i32
    %6 = arith.xori %4, %5 : i1
    %7 = arith.andi %6, %3 : i1
    %8 = arith.addi %2, %1 : i32
    %9 = arith.select %7, %8, %2 : i32
    %c0_i32_3 = arith.constant 0 : i32
    %10 = arith.cmpi eq, %arg1, %c0_i32_3 : i32
    %11 = arith.extui %10 : i1 to i32
    %c0_i32_4 = arith.constant 0 : i32
    %12 = arith.cmpi ne, %11, %c0_i32_4 : i32
    scf.if %12 {
      %c0_i32_130 = arith.constant 0 : i32
      %c0_i32_131 = arith.constant 0 : i32
      %c0_i32_132 = arith.constant 0 : i32
      %c0_i32_133 = arith.constant 0 : i32
      %c0_i32_134 = arith.constant 0 : i32
      %170 = tpu.memref_slice %arg2[%arg0, %c0_i32_132, %c0_i32_133, %c0_i32_134] : memref<2x20x18x128xf32, #tpu.memory_space<any>> -> memref<1x12x18x128xf32, #tpu.memory_space<any>>
      %171 = tpu.memref_squeeze %170 : memref<1x12x18x128xf32, #tpu.memory_space<any>> -> memref<12x18x128xf32, #tpu.memory_space<any>>
      %c0_i32_135 = arith.constant 0 : i32
      %c0_i32_136 = arith.constant 0 : i32
      %c0_i32_137 = arith.constant 0 : i32
      %172 = tpu.memref_slice %arg8[%c0_i32_130, %c0_i32_135, %c0_i32_136, %c0_i32_137] : memref<2x12x18x128xf32, #tpu.memory_space<vmem>> -> memref<1x12x18x128xf32, #tpu.memory_space<vmem>>
      %173 = tpu.memref_squeeze %172 : memref<1x12x18x128xf32, #tpu.memory_space<vmem>> -> memref<12x18x128xf32, #tpu.memory_space<vmem>>
      %174 = tpu.memref_slice %arg9[%c0_i32_131] : memref<2x!tpu.dma_semaphore, #tpu.memory_space<semaphore_mem>> -> memref<1x!tpu.dma_semaphore, #tpu.memory_space<semaphore_mem>>
      %175 = tpu.memref_squeeze %174 : memref<1x!tpu.dma_semaphore, #tpu.memory_space<semaphore_mem>> -> memref<!tpu.dma_semaphore, #tpu.memory_space<semaphore_mem>>
      tpu.enqueue_dma source(%171 : memref<12x18x128xf32, #tpu.memory_space<any>>) target(%173 : memref<12x18x128xf32, #tpu.memory_space<vmem>>) target_semaphore(%175 : memref<!tpu.dma_semaphore, #tpu.memory_space<semaphore_mem>>)
    } else {
    }
    %c8_i32 = arith.constant 8 : i32
    %13 = arith.muli %arg1, %c8_i32 : i32
    %c0_i32_5 = arith.constant 0 : i32
    %c0_i32_6 = arith.constant 0 : i32
    %14 = tpu.memref_slice %arg2[%arg0, %13, %c0_i32_5, %c0_i32_6] : memref<2x20x18x128xf32, #tpu.memory_space<any>> -> memref<1x12x18x128xf32, #tpu.memory_space<any>>
    %15 = tpu.memref_squeeze %14 : memref<1x12x18x128xf32, #tpu.memory_space<any>> -> memref<12x18x128xf32, #tpu.memory_space<any>>
    %c0_i32_7 = arith.constant 0 : i32
    %c0_i32_8 = arith.constant 0 : i32
    %c0_i32_9 = arith.constant 0 : i32
    %16 = tpu.memref_slice %arg8[%9, %c0_i32_7, %c0_i32_8, %c0_i32_9] : memref<2x12x18x128xf32, #tpu.memory_space<vmem>> -> memref<1x12x18x128xf32, #tpu.memory_space<vmem>>
    %17 = tpu.memref_squeeze %16 : memref<1x12x18x128xf32, #tpu.memory_space<vmem>> -> memref<12x18x128xf32, #tpu.memory_space<vmem>>
    %18 = tpu.memref_slice %arg9[%9] : memref<2x!tpu.dma_semaphore, #tpu.memory_space<semaphore_mem>> -> memref<1x!tpu.dma_semaphore, #tpu.memory_space<semaphore_mem>>
    %19 = tpu.memref_squeeze %18 : memref<1x!tpu.dma_semaphore, #tpu.memory_space<semaphore_mem>> -> memref<!tpu.dma_semaphore, #tpu.memory_space<semaphore_mem>>
    tpu.wait_dma2 semaphore(%19 : memref<!tpu.dma_semaphore, #tpu.memory_space<semaphore_mem>>) src(%15 : memref<12x18x128xf32, #tpu.memory_space<any>>) dst(%17 : memref<12x18x128xf32, #tpu.memory_space<vmem>>)
    %c1_i32_10 = arith.constant 1 : i32
    %20 = arith.addi %arg1, %c1_i32_10 : i32
    %c2_i32_11 = arith.constant 2 : i32
    %21 = arith.cmpi slt, %20, %c2_i32_11 : i32
    %22 = arith.extui %21 : i1 to i32
    %c0_i32_12 = arith.constant 0 : i32
    %23 = arith.cmpi ne, %22, %c0_i32_12 : i32
    scf.if %23 {
      %c1_i32_130 = arith.constant 1 : i32
      %170 = arith.subi %c1_i32_130, %9 : i32
      %c1_i32_131 = arith.constant 1 : i32
      %171 = arith.addi %arg1, %c1_i32_131 : i32
      %c8_i32_132 = arith.constant 8 : i32
      %172 = arith.muli %171, %c8_i32_132 : i32
      %c0_i32_133 = arith.constant 0 : i32
      %c0_i32_134 = arith.constant 0 : i32
      %173 = tpu.memref_slice %arg2[%arg0, %172, %c0_i32_133, %c0_i32_134] : memref<2x20x18x128xf32, #tpu.memory_space<any>> -> memref<1x12x18x128xf32, #tpu.memory_space<any>>
      %174 = tpu.memref_squeeze %173 : memref<1x12x18x128xf32, #tpu.memory_space<any>> -> memref<12x18x128xf32, #tpu.memory_space<any>>
      %c0_i32_135 = arith.constant 0 : i32
      %c0_i32_136 = arith.constant 0 : i32
      %c0_i32_137 = arith.constant 0 : i32
      %175 = tpu.memref_slice %arg8[%170, %c0_i32_135, %c0_i32_136, %c0_i32_137] : memref<2x12x18x128xf32, #tpu.memory_space<vmem>> -> memref<1x12x18x128xf32, #tpu.memory_space<vmem>>
      %176 = tpu.memref_squeeze %175 : memref<1x12x18x128xf32, #tpu.memory_space<vmem>> -> memref<12x18x128xf32, #tpu.memory_space<vmem>>
      %177 = tpu.memref_slice %arg9[%170] : memref<2x!tpu.dma_semaphore, #tpu.memory_space<semaphore_mem>> -> memref<1x!tpu.dma_semaphore, #tpu.memory_space<semaphore_mem>>
      %178 = tpu.memref_squeeze %177 : memref<1x!tpu.dma_semaphore, #tpu.memory_space<semaphore_mem>> -> memref<!tpu.dma_semaphore, #tpu.memory_space<semaphore_mem>>
      tpu.enqueue_dma source(%174 : memref<12x18x128xf32, #tpu.memory_space<any>>) target(%176 : memref<12x18x128xf32, #tpu.memory_space<vmem>>) target_semaphore(%178 : memref<!tpu.dma_semaphore, #tpu.memory_space<semaphore_mem>>)
    } else {
    }
    %24 = arith.index_cast %9 : i32 to index
    %c0 = arith.constant 0 : index
    %c0_13 = arith.constant 0 : index
    %c0_14 = arith.constant 0 : index
    %25 = vector.load %arg8[%24, %c0, %c0_13, %c0_14] : memref<2x12x18x128xf32, #tpu.memory_space<vmem>>, vector<1x12x18x128xf32>
    %26 = vector.shape_cast %25 : vector<1x12x18x128xf32> to vector<12x18x128xf32>
    %cst = arith.constant 0.000000e+00 : f32
    %27 = vector.broadcast %cst : f32 to vector<160x128xf32>
    %28 = vector.extract_strided_slice %26 {offsets = [0, 0, 0], sizes = [10, 16, 128], strides = [1, 1, 1]} : vector<12x18x128xf32> to vector<10x16x128xf32>
    %29 = vector.shape_cast %28 : vector<10x16x128xf32> to vector<160x128xf32>
    %c0_15 = arith.constant 0 : index
    %c0_16 = arith.constant 0 : index
    %c0_17 = arith.constant 0 : index
    %30 = vector.load %arg3[%c0_15, %c0_16, %c0_17] : memref<9x128x128xf32, #tpu.memory_space<vmem>>, vector<1x128x128xf32>
    %31 = vector.shape_cast %30 : vector<1x128x128xf32> to vector<128x128xf32>
    %cst_18 = arith.constant dense<0.000000e+00> : vector<160x128xf32>
    %32 = tpu.matmul %29, %31, %cst_18 {dimension_numbers = #tpu.dot_dimension_numbers<[1], [0], [0], [1], [0, 0, 1, 1], [], []>} : vector<160x128xf32>, vector<128x128xf32>, vector<160x128xf32> -> vector<160x128xf32>
    %33 = arith.addf %27, %32 : vector<160x128xf32>
    %34 = vector.extract_strided_slice %26 {offsets = [0, 1, 0], sizes = [10, 16, 128], strides = [1, 1, 1]} : vector<12x18x128xf32> to vector<10x16x128xf32>
    %35 = vector.shape_cast %34 : vector<10x16x128xf32> to vector<160x128xf32>
    %c1 = arith.constant 1 : index
    %c0_19 = arith.constant 0 : index
    %c0_20 = arith.constant 0 : index
    %36 = vector.load %arg3[%c1, %c0_19, %c0_20] : memref<9x128x128xf32, #tpu.memory_space<vmem>>, vector<1x128x128xf32>
    %37 = vector.shape_cast %36 : vector<1x128x128xf32> to vector<128x128xf32>
    %cst_21 = arith.constant dense<0.000000e+00> : vector<160x128xf32>
    %38 = tpu.matmul %35, %37, %cst_21 {dimension_numbers = #tpu.dot_dimension_numbers<[1], [0], [0], [1], [0, 0, 1, 1], [], []>} : vector<160x128xf32>, vector<128x128xf32>, vector<160x128xf32> -> vector<160x128xf32>
    %39 = arith.addf %33, %38 : vector<160x128xf32>
    %40 = vector.extract_strided_slice %26 {offsets = [0, 2, 0], sizes = [10, 16, 128], strides = [1, 1, 1]} : vector<12x18x128xf32> to vector<10x16x128xf32>
    %41 = vector.shape_cast %40 : vector<10x16x128xf32> to vector<160x128xf32>
    %c2 = arith.constant 2 : index
    %c0_22 = arith.constant 0 : index
    %c0_23 = arith.constant 0 : index
    %42 = vector.load %arg3[%c2, %c0_22, %c0_23] : memref<9x128x128xf32, #tpu.memory_space<vmem>>, vector<1x128x128xf32>
    %43 = vector.shape_cast %42 : vector<1x128x128xf32> to vector<128x128xf32>
    %cst_24 = arith.constant dense<0.000000e+00> : vector<160x128xf32>
    %44 = tpu.matmul %41, %43, %cst_24 {dimension_numbers = #tpu.dot_dimension_numbers<[1], [0], [0], [1], [0, 0, 1, 1], [], []>} : vector<160x128xf32>, vector<128x128xf32>, vector<160x128xf32> -> vector<160x128xf32>
    %45 = arith.addf %39, %44 : vector<160x128xf32>
    %46 = vector.extract_strided_slice %26 {offsets = [1, 0, 0], sizes = [10, 16, 128], strides = [1, 1, 1]} : vector<12x18x128xf32> to vector<10x16x128xf32>
    %47 = vector.shape_cast %46 : vector<10x16x128xf32> to vector<160x128xf32>
    %c3 = arith.constant 3 : index
    %c0_25 = arith.constant 0 : index
    %c0_26 = arith.constant 0 : index
    %48 = vector.load %arg3[%c3, %c0_25, %c0_26] : memref<9x128x128xf32, #tpu.memory_space<vmem>>, vector<1x128x128xf32>
    %49 = vector.shape_cast %48 : vector<1x128x128xf32> to vector<128x128xf32>
    %cst_27 = arith.constant dense<0.000000e+00> : vector<160x128xf32>
    %50 = tpu.matmul %47, %49, %cst_27 {dimension_numbers = #tpu.dot_dimension_numbers<[1], [0], [0], [1], [0, 0, 1, 1], [], []>} : vector<160x128xf32>, vector<128x128xf32>, vector<160x128xf32> -> vector<160x128xf32>
    %51 = arith.addf %45, %50 : vector<160x128xf32>
    %52 = vector.extract_strided_slice %26 {offsets = [1, 1, 0], sizes = [10, 16, 128], strides = [1, 1, 1]} : vector<12x18x128xf32> to vector<10x16x128xf32>
    %53 = vector.shape_cast %52 : vector<10x16x128xf32> to vector<160x128xf32>
    %c4 = arith.constant 4 : index
    %c0_28 = arith.constant 0 : index
    %c0_29 = arith.constant 0 : index
    %54 = vector.load %arg3[%c4, %c0_28, %c0_29] : memref<9x128x128xf32, #tpu.memory_space<vmem>>, vector<1x128x128xf32>
    %55 = vector.shape_cast %54 : vector<1x128x128xf32> to vector<128x128xf32>
    %cst_30 = arith.constant dense<0.000000e+00> : vector<160x128xf32>
    %56 = tpu.matmul %53, %55, %cst_30 {dimension_numbers = #tpu.dot_dimension_numbers<[1], [0], [0], [1], [0, 0, 1, 1], [], []>} : vector<160x128xf32>, vector<128x128xf32>, vector<160x128xf32> -> vector<160x128xf32>
    %57 = arith.addf %51, %56 : vector<160x128xf32>
    %58 = vector.extract_strided_slice %26 {offsets = [1, 2, 0], sizes = [10, 16, 128], strides = [1, 1, 1]} : vector<12x18x128xf32> to vector<10x16x128xf32>
    %59 = vector.shape_cast %58 : vector<10x16x128xf32> to vector<160x128xf32>
    %c5 = arith.constant 5 : index
    %c0_31 = arith.constant 0 : index
    %c0_32 = arith.constant 0 : index
    %60 = vector.load %arg3[%c5, %c0_31, %c0_32] : memref<9x128x128xf32, #tpu.memory_space<vmem>>, vector<1x128x128xf32>
    %61 = vector.shape_cast %60 : vector<1x128x128xf32> to vector<128x128xf32>
    %cst_33 = arith.constant dense<0.000000e+00> : vector<160x128xf32>
    %62 = tpu.matmul %59, %61, %cst_33 {dimension_numbers = #tpu.dot_dimension_numbers<[1], [0], [0], [1], [0, 0, 1, 1], [], []>} : vector<160x128xf32>, vector<128x128xf32>, vector<160x128xf32> -> vector<160x128xf32>
    %63 = arith.addf %57, %62 : vector<160x128xf32>
    %64 = vector.extract_strided_slice %26 {offsets = [2, 0, 0], sizes = [10, 16, 128], strides = [1, 1, 1]} : vector<12x18x128xf32> to vector<10x16x128xf32>
    %65 = vector.shape_cast %64 : vector<10x16x128xf32> to vector<160x128xf32>
    %c6 = arith.constant 6 : index
    %c0_34 = arith.constant 0 : index
    %c0_35 = arith.constant 0 : index
    %66 = vector.load %arg3[%c6, %c0_34, %c0_35] : memref<9x128x128xf32, #tpu.memory_space<vmem>>, vector<1x128x128xf32>
    %67 = vector.shape_cast %66 : vector<1x128x128xf32> to vector<128x128xf32>
    %cst_36 = arith.constant dense<0.000000e+00> : vector<160x128xf32>
    %68 = tpu.matmul %65, %67, %cst_36 {dimension_numbers = #tpu.dot_dimension_numbers<[1], [0], [0], [1], [0, 0, 1, 1], [], []>} : vector<160x128xf32>, vector<128x128xf32>, vector<160x128xf32> -> vector<160x128xf32>
    %69 = arith.addf %63, %68 : vector<160x128xf32>
    %70 = vector.extract_strided_slice %26 {offsets = [2, 1, 0], sizes = [10, 16, 128], strides = [1, 1, 1]} : vector<12x18x128xf32> to vector<10x16x128xf32>
    %71 = vector.shape_cast %70 : vector<10x16x128xf32> to vector<160x128xf32>
    %c7 = arith.constant 7 : index
    %c0_37 = arith.constant 0 : index
    %c0_38 = arith.constant 0 : index
    %72 = vector.load %arg3[%c7, %c0_37, %c0_38] : memref<9x128x128xf32, #tpu.memory_space<vmem>>, vector<1x128x128xf32>
    %73 = vector.shape_cast %72 : vector<1x128x128xf32> to vector<128x128xf32>
    %cst_39 = arith.constant dense<0.000000e+00> : vector<160x128xf32>
    %74 = tpu.matmul %71, %73, %cst_39 {dimension_numbers = #tpu.dot_dimension_numbers<[1], [0], [0], [1], [0, 0, 1, 1], [], []>} : vector<160x128xf32>, vector<128x128xf32>, vector<160x128xf32> -> vector<160x128xf32>
    %75 = arith.addf %69, %74 : vector<160x128xf32>
    %76 = vector.extract_strided_slice %26 {offsets = [2, 2, 0], sizes = [10, 16, 128], strides = [1, 1, 1]} : vector<12x18x128xf32> to vector<10x16x128xf32>
    %77 = vector.shape_cast %76 : vector<10x16x128xf32> to vector<160x128xf32>
    %c8 = arith.constant 8 : index
    %c0_40 = arith.constant 0 : index
    %c0_41 = arith.constant 0 : index
    %78 = vector.load %arg3[%c8, %c0_40, %c0_41] : memref<9x128x128xf32, #tpu.memory_space<vmem>>, vector<1x128x128xf32>
    %79 = vector.shape_cast %78 : vector<1x128x128xf32> to vector<128x128xf32>
    %cst_42 = arith.constant dense<0.000000e+00> : vector<160x128xf32>
    %80 = tpu.matmul %77, %79, %cst_42 {dimension_numbers = #tpu.dot_dimension_numbers<[1], [0], [0], [1], [0, 0, 1, 1], [], []>} : vector<160x128xf32>, vector<128x128xf32>, vector<160x128xf32> -> vector<160x128xf32>
    %81 = arith.addf %75, %80 : vector<160x128xf32>
    %c0_43 = arith.constant 0 : index
    %c0_44 = arith.constant 0 : index
    %82 = vector.load %arg4[%c0_43, %c0_44] : memref<1x128xf32, #tpu.memory_space<vmem>>, vector<1x128xf32>
    %83 = vector.broadcast %82 : vector<1x128xf32> to vector<160x128xf32>
    %84 = arith.addf %81, %83 : vector<160x128xf32>
    %cst_45 = arith.constant 0.000000e+00 : f32
    %85 = vector.broadcast %cst_45 : f32 to vector<160x128xf32>
    %86 = arith.maximumf %84, %85 : vector<160x128xf32>
    %87 = vector.shape_cast %86 : vector<160x128xf32> to vector<10x16x128xf32>
    %88 = tpu.iota {dimensions = array<i32: 0>} : vector<10x1x1xi32>
    %c8_i32_46 = arith.constant 8 : i32
    %89 = arith.muli %arg1, %c8_i32_46 : i32
    %c1_i32_47 = arith.constant 1 : i32
    %90 = arith.subi %89, %c1_i32_47 : i32
    %91 = vector.broadcast %90 : i32 to vector<10x1x1xi32>
    %92 = arith.addi %88, %91 : vector<10x1x1xi32>
    %c0_i32_48 = arith.constant 0 : i32
    %93 = vector.broadcast %c0_i32_48 : i32 to vector<10x1x1xi32>
    %94 = arith.cmpi sge, %92, %93 : vector<10x1x1xi32>
    %c16_i32 = arith.constant 16 : i32
    %95 = vector.broadcast %c16_i32 : i32 to vector<10x1x1xi32>
    %96 = arith.cmpi slt, %92, %95 : vector<10x1x1xi32>
    %97 = arith.andi %94, %96 : vector<10x1x1xi1>
    %cst_49 = arith.constant 0.000000e+00 : f32
    %98 = vector.shape_cast %97 : vector<10x1x1xi1> to vector<10x1x1xi1>
    %99 = vector.broadcast %98 : vector<10x1x1xi1> to vector<10x16x128xi1>
    %100 = vector.broadcast %cst_49 : f32 to vector<10x16x128xf32>
    %101 = arith.select %99, %87, %100 : vector<10x16x128xi1>, vector<10x16x128xf32>
    %cst_50 = arith.constant 0.000000e+00 : f32
    %102 = vector.broadcast %cst_50 : f32 to vector<10x1x128xf32>
    %c0_51 = arith.constant 0 : index
    %c0_52 = arith.constant 0 : index
    %c0_53 = arith.constant 0 : index
    %103 = vector.load %arg10[%c0_51, %c0_52, %c0_53] : memref<10x18x128xf32, #tpu.memory_space<vmem>>, vector<10x1x128xf32>
    tpu.vector_store %arg10[%c0_51, %c0_52, %c0_53], %102 {strides = array<i32>} : memref<10x18x128xf32, #tpu.memory_space<vmem>>, vector<10x1x128xf32>,
    %c0_54 = arith.constant 0 : index
    %c17 = arith.constant 17 : index
    %c0_55 = arith.constant 0 : index
    %104 = vector.load %arg10[%c0_54, %c17, %c0_55] : memref<10x18x128xf32, #tpu.memory_space<vmem>>, vector<10x1x128xf32>
    tpu.vector_store %arg10[%c0_54, %c17, %c0_55], %102 {strides = array<i32>} : memref<10x18x128xf32, #tpu.memory_space<vmem>>, vector<10x1x128xf32>,
    %c0_56 = arith.constant 0 : index
    %c1_57 = arith.constant 1 : index
    %c0_58 = arith.constant 0 : index
    %105 = vector.load %arg10[%c0_56, %c1_57, %c0_58] : memref<10x18x128xf32, #tpu.memory_space<vmem>>, vector<10x16x128xf32>
    tpu.vector_store %arg10[%c0_56, %c1_57, %c0_58], %101 {strides = array<i32>} : memref<10x18x128xf32, #tpu.memory_space<vmem>>, vector<10x16x128xf32>,
    %cst_59 = arith.constant 0.000000e+00 : f32
    %106 = vector.broadcast %cst_59 : f32 to vector<128x128xf32>
    %c0_60 = arith.constant 0 : index
    %c0_61 = arith.constant 0 : index
    %c0_62 = arith.constant 0 : index
    %107 = vector.load %arg10[%c0_60, %c0_61, %c0_62] : memref<10x18x128xf32, #tpu.memory_space<vmem>>, vector<8x16x128xf32>
    %108 = vector.shape_cast %107 : vector<8x16x128xf32> to vector<128x128xf32>
    %c0_63 = arith.constant 0 : index
    %c0_64 = arith.constant 0 : index
    %c0_65 = arith.constant 0 : index
    %109 = vector.load %arg5[%c0_63, %c0_64, %c0_65] : memref<9x128x128xf32, #tpu.memory_space<vmem>>, vector<1x128x128xf32>
    %110 = vector.shape_cast %109 : vector<1x128x128xf32> to vector<128x128xf32>
    %cst_66 = arith.constant dense<0.000000e+00> : vector<128x128xf32>
    %111 = tpu.matmul %108, %110, %cst_66 {dimension_numbers = #tpu.dot_dimension_numbers<[1], [0], [0], [1], [0, 0, 1, 1], [], []>} : vector<128x128xf32>, vector<128x128xf32>, vector<128x128xf32> -> vector<128x128xf32>
    %112 = arith.addf %106, %111 : vector<128x128xf32>
    %c0_67 = arith.constant 0 : index
    %c1_68 = arith.constant 1 : index
    %c0_69 = arith.constant 0 : index
    %113 = vector.load %arg10[%c0_67, %c1_68, %c0_69] : memref<10x18x128xf32, #tpu.memory_space<vmem>>, vector<8x16x128xf32>
    %114 = vector.shape_cast %113 : vector<8x16x128xf32> to vector<128x128xf32>
    %c1_70 = arith.constant 1 : index
    %c0_71 = arith.constant 0 : index
    %c0_72 = arith.constant 0 : index
    %115 = vector.load %arg5[%c1_70, %c0_71, %c0_72] : memref<9x128x128xf32, #tpu.memory_space<vmem>>, vector<1x128x128xf32>
    %116 = vector.shape_cast %115 : vector<1x128x128xf32> to vector<128x128xf32>
    %cst_73 = arith.constant dense<0.000000e+00> : vector<128x128xf32>
    %117 = tpu.matmul %114, %116, %cst_73 {dimension_numbers = #tpu.dot_dimension_numbers<[1], [0], [0], [1], [0, 0, 1, 1], [], []>} : vector<128x128xf32>, vector<128x128xf32>, vector<128x128xf32> -> vector<128x128xf32>
    %118 = arith.addf %112, %117 : vector<128x128xf32>
    %c0_74 = arith.constant 0 : index
    %c2_75 = arith.constant 2 : index
    %c0_76 = arith.constant 0 : index
    %119 = vector.load %arg10[%c0_74, %c2_75, %c0_76] : memref<10x18x128xf32, #tpu.memory_space<vmem>>, vector<8x16x128xf32>
    %120 = vector.shape_cast %119 : vector<8x16x128xf32> to vector<128x128xf32>
    %c2_77 = arith.constant 2 : index
    %c0_78 = arith.constant 0 : index
    %c0_79 = arith.constant 0 : index
    %121 = vector.load %arg5[%c2_77, %c0_78, %c0_79] : memref<9x128x128xf32, #tpu.memory_space<vmem>>, vector<1x128x128xf32>
    %122 = vector.shape_cast %121 : vector<1x128x128xf32> to vector<128x128xf32>
    %cst_80 = arith.constant dense<0.000000e+00> : vector<128x128xf32>
    %123 = tpu.matmul %120, %122, %cst_80 {dimension_numbers = #tpu.dot_dimension_numbers<[1], [0], [0], [1], [0, 0, 1, 1], [], []>} : vector<128x128xf32>, vector<128x128xf32>, vector<128x128xf32> -> vector<128x128xf32>
    %124 = arith.addf %118, %123 : vector<128x128xf32>
    %c1_81 = arith.constant 1 : index
    %c0_82 = arith.constant 0 : index
    %c0_83 = arith.constant 0 : index
    %125 = vector.load %arg10[%c1_81, %c0_82, %c0_83] : memref<10x18x128xf32, #tpu.memory_space<vmem>>, vector<8x16x128xf32>
    %126 = vector.shape_cast %125 : vector<8x16x128xf32> to vector<128x128xf32>
    %c3_84 = arith.constant 3 : index
    %c0_85 = arith.constant 0 : index
    %c0_86 = arith.constant 0 : index
    %127 = vector.load %arg5[%c3_84, %c0_85, %c0_86] : memref<9x128x128xf32, #tpu.memory_space<vmem>>, vector<1x128x128xf32>
    %128 = vector.shape_cast %127 : vector<1x128x128xf32> to vector<128x128xf32>
    %cst_87 = arith.constant dense<0.000000e+00> : vector<128x128xf32>
    %129 = tpu.matmul %126, %128, %cst_87 {dimension_numbers = #tpu.dot_dimension_numbers<[1], [0], [0], [1], [0, 0, 1, 1], [], []>} : vector<128x128xf32>, vector<128x128xf32>, vector<128x128xf32> -> vector<128x128xf32>
    %130 = arith.addf %124, %129 : vector<128x128xf32>
    %c1_88 = arith.constant 1 : index
    %c1_89 = arith.constant 1 : index
    %c0_90 = arith.constant 0 : index
    %131 = vector.load %arg10[%c1_88, %c1_89, %c0_90] : memref<10x18x128xf32, #tpu.memory_space<vmem>>, vector<8x16x128xf32>
    %132 = vector.shape_cast %131 : vector<8x16x128xf32> to vector<128x128xf32>
    %c4_91 = arith.constant 4 : index
    %c0_92 = arith.constant 0 : index
    %c0_93 = arith.constant 0 : index
    %133 = vector.load %arg5[%c4_91, %c0_92, %c0_93] : memref<9x128x128xf32, #tpu.memory_space<vmem>>, vector<1x128x128xf32>
    %134 = vector.shape_cast %133 : vector<1x128x128xf32> to vector<128x128xf32>
    %cst_94 = arith.constant dense<0.000000e+00> : vector<128x128xf32>
    %135 = tpu.matmul %132, %134, %cst_94 {dimension_numbers = #tpu.dot_dimension_numbers<[1], [0], [0], [1], [0, 0, 1, 1], [], []>} : vector<128x128xf32>, vector<128x128xf32>, vector<128x128xf32> -> vector<128x128xf32>
    %136 = arith.addf %130, %135 : vector<128x128xf32>
    %c1_95 = arith.constant 1 : index
    %c2_96 = arith.constant 2 : index
    %c0_97 = arith.constant 0 : index
    %137 = vector.load %arg10[%c1_95, %c2_96, %c0_97] : memref<10x18x128xf32, #tpu.memory_space<vmem>>, vector<8x16x128xf32>
    %138 = vector.shape_cast %137 : vector<8x16x128xf32> to vector<128x128xf32>
    %c5_98 = arith.constant 5 : index
    %c0_99 = arith.constant 0 : index
    %c0_100 = arith.constant 0 : index
    %139 = vector.load %arg5[%c5_98, %c0_99, %c0_100] : memref<9x128x128xf32, #tpu.memory_space<vmem>>, vector<1x128x128xf32>
    %140 = vector.shape_cast %139 : vector<1x128x128xf32> to vector<128x128xf32>
    %cst_101 = arith.constant dense<0.000000e+00> : vector<128x128xf32>
    %141 = tpu.matmul %138, %140, %cst_101 {dimension_numbers = #tpu.dot_dimension_numbers<[1], [0], [0], [1], [0, 0, 1, 1], [], []>} : vector<128x128xf32>, vector<128x128xf32>, vector<128x128xf32> -> vector<128x128xf32>
    %142 = arith.addf %136, %141 : vector<128x128xf32>
    %c2_102 = arith.constant 2 : index
    %c0_103 = arith.constant 0 : index
    %c0_104 = arith.constant 0 : index
    %143 = vector.load %arg10[%c2_102, %c0_103, %c0_104] : memref<10x18x128xf32, #tpu.memory_space<vmem>>, vector<8x16x128xf32>
    %144 = vector.shape_cast %143 : vector<8x16x128xf32> to vector<128x128xf32>
    %c6_105 = arith.constant 6 : index
    %c0_106 = arith.constant 0 : index
    %c0_107 = arith.constant 0 : index
    %145 = vector.load %arg5[%c6_105, %c0_106, %c0_107] : memref<9x128x128xf32, #tpu.memory_space<vmem>>, vector<1x128x128xf32>
    %146 = vector.shape_cast %145 : vector<1x128x128xf32> to vector<128x128xf32>
    %cst_108 = arith.constant dense<0.000000e+00> : vector<128x128xf32>
    %147 = tpu.matmul %144, %146, %cst_108 {dimension_numbers = #tpu.dot_dimension_numbers<[1], [0], [0], [1], [0, 0, 1, 1], [], []>} : vector<128x128xf32>, vector<128x128xf32>, vector<128x128xf32> -> vector<128x128xf32>
    %148 = arith.addf %142, %147 : vector<128x128xf32>
    %c2_109 = arith.constant 2 : index
    %c1_110 = arith.constant 1 : index
    %c0_111 = arith.constant 0 : index
    %149 = vector.load %arg10[%c2_109, %c1_110, %c0_111] : memref<10x18x128xf32, #tpu.memory_space<vmem>>, vector<8x16x128xf32>
    %150 = vector.shape_cast %149 : vector<8x16x128xf32> to vector<128x128xf32>
    %c7_112 = arith.constant 7 : index
    %c0_113 = arith.constant 0 : index
    %c0_114 = arith.constant 0 : index
    %151 = vector.load %arg5[%c7_112, %c0_113, %c0_114] : memref<9x128x128xf32, #tpu.memory_space<vmem>>, vector<1x128x128xf32>
    %152 = vector.shape_cast %151 : vector<1x128x128xf32> to vector<128x128xf32>
    %cst_115 = arith.constant dense<0.000000e+00> : vector<128x128xf32>
    %153 = tpu.matmul %150, %152, %cst_115 {dimension_numbers = #tpu.dot_dimension_numbers<[1], [0], [0], [1], [0, 0, 1, 1], [], []>} : vector<128x128xf32>, vector<128x128xf32>, vector<128x128xf32> -> vector<128x128xf32>
    %154 = arith.addf %148, %153 : vector<128x128xf32>
    %c2_116 = arith.constant 2 : index
    %c2_117 = arith.constant 2 : index
    %c0_118 = arith.constant 0 : index
    %155 = vector.load %arg10[%c2_116, %c2_117, %c0_118] : memref<10x18x128xf32, #tpu.memory_space<vmem>>, vector<8x16x128xf32>
    %156 = vector.shape_cast %155 : vector<8x16x128xf32> to vector<128x128xf32>
    %c8_119 = arith.constant 8 : index
    %c0_120 = arith.constant 0 : index
    %c0_121 = arith.constant 0 : index
    %157 = vector.load %arg5[%c8_119, %c0_120, %c0_121] : memref<9x128x128xf32, #tpu.memory_space<vmem>>, vector<1x128x128xf32>
    %158 = vector.shape_cast %157 : vector<1x128x128xf32> to vector<128x128xf32>
    %cst_122 = arith.constant dense<0.000000e+00> : vector<128x128xf32>
    %159 = tpu.matmul %156, %158, %cst_122 {dimension_numbers = #tpu.dot_dimension_numbers<[1], [0], [0], [1], [0, 0, 1, 1], [], []>} : vector<128x128xf32>, vector<128x128xf32>, vector<128x128xf32> -> vector<128x128xf32>
    %160 = arith.addf %154, %159 : vector<128x128xf32>
    %c0_123 = arith.constant 0 : index
    %c0_124 = arith.constant 0 : index
    %161 = vector.load %arg6[%c0_123, %c0_124] : memref<1x128xf32, #tpu.memory_space<vmem>>, vector<1x128xf32>
    %162 = vector.broadcast %161 : vector<1x128xf32> to vector<128x128xf32>
    %163 = arith.addf %160, %162 : vector<128x128xf32>
    %cst_125 = arith.constant 0.000000e+00 : f32
    %164 = vector.broadcast %cst_125 : f32 to vector<128x128xf32>
    %165 = arith.maximumf %163, %164 : vector<128x128xf32>
    %166 = vector.shape_cast %165 : vector<128x128xf32> to vector<8x16x128xf32>
    %c0_126 = arith.constant 0 : index
    %c0_127 = arith.constant 0 : index
    %c0_128 = arith.constant 0 : index
    %c0_129 = arith.constant 0 : index
    %167 = vector.load %arg7[%c0_126, %c0_127, %c0_128, %c0_129] : memref<1x8x16x128xf32, #tpu.memory_space<vmem>>, vector<1x8x16x128xf32>
    %168 = vector.shape_cast %167 : vector<1x8x16x128xf32> to vector<8x16x128xf32>
    %169 = vector.shape_cast %166 : vector<8x16x128xf32> to vector<1x8x16x128xf32>
    tpu.vector_store %arg7[%c0_126, %c0_127, %c0_128, %c0_129], %169 {strides = array<i32>} : memref<1x8x16x128xf32, #tpu.memory_space<vmem>>, vector<1x8x16x128xf32>,
    return
  }
  func.func @transform_1(%arg0: i32, %arg1: i32) -> (i32, i32, i32) {
    %c0_i32 = arith.constant 0 : i32
    %c0_i32_0 = arith.constant 0 : i32
    %c0_i32_1 = arith.constant 0 : i32
    %c0_i32_2 = arith.constant 0 : i32
    return %c0_i32, %c0_i32_0, %c0_i32_1 : i32, i32, i32
  }
  func.func @transform_2(%arg0: i32, %arg1: i32) -> (i32, i32) {
    %c0_i32 = arith.constant 0 : i32
    %c0_i32_0 = arith.constant 0 : i32
    %c0_i32_1 = arith.constant 0 : i32
    return %c0_i32, %c0_i32_0 : i32, i32
  }
  func.func @transform_3(%arg0: i32, %arg1: i32) -> (i32, i32, i32) {
    %c0_i32 = arith.constant 0 : i32
    %c0_i32_0 = arith.constant 0 : i32
    %c0_i32_1 = arith.constant 0 : i32
    %c0_i32_2 = arith.constant 0 : i32
    return %c0_i32, %c0_i32_0, %c0_i32_1 : i32, i32, i32
  }
  func.func @transform_4(%arg0: i32, %arg1: i32) -> (i32, i32) {
    %c0_i32 = arith.constant 0 : i32
    %c0_i32_0 = arith.constant 0 : i32
    %c0_i32_1 = arith.constant 0 : i32
    return %c0_i32, %c0_i32_0 : i32, i32
  }
  func.func @transform_5(%arg0: i32, %arg1: i32) -> (i32, i32, i32, i32) {
    %c0_i32 = arith.constant 0 : i32
    %c0_i32_0 = arith.constant 0 : i32
    %c0_i32_1 = arith.constant 0 : i32
    return %arg0, %arg1, %c0_i32, %c0_i32_0 : i32, i32, i32, i32
  }
}

</mosaic_0001>

<llo_original>
// kernel: double_conv.1
$region0: #{double_conv.1}
  #allocation0 [shape = 'u32[]', space=smem, size = 0x4, offset = 0x4, fixed_abs, tag = 'smem constant byte address 0x4 - core index']
  #allocation1 [shape = 'u32[144,128]{1,0:T(1,128)}', space=vmem, size = 0x12000, scoped, tag = 'internal scratch']
  #allocation2 [shape = 'f32[2,12,18,128]{3,2,1,0:T(8,128)}', space=vmem, size = 0x48000, scoped, tag = 'scratch operand']
  #allocation3 [shape = 's32[2]{0}', space=sflag, size = 0x8, scoped, tag = 'scratch operand']
  #allocation4 [shape = 'f32[10,18,128]{2,1,0:T(8,128)}', space=vmem, size = 0x1e000, scoped, tag = 'scratch operand']
  #allocation14 [shape = 's32[]', space=sflag, size = 0x4, offset = 0, fixed_abs, tag = 'sflag constant byte address 0x0 - dummy sync flag']
  #allocation15 [shape = 's32[]', space=sflag, size = 0x4, offset = 0, fixed_abs, tag = 'sflag constant byte address 0x0 - dummy sync flag']
  %s0 = inlined_call_operand.hbm [shape: f32[2,20,18,128], index: 0, kind: input, shape index: {}]
  %s1 = inlined_call_operand.hbm [shape: f32[9,128,128], index: 1, kind: input, shape index: {}]
  %s2 = inlined_call_operand.hbm [shape: f32[1,128], index: 2, kind: input, shape index: {}]
  %s3 = inlined_call_operand.hbm [shape: f32[9,128,128], index: 3, kind: input, shape index: {}]
  %s4 = inlined_call_operand.hbm [shape: f32[1,128], index: 4, kind: input, shape index: {}]
  %s5 = inlined_call_operand.hbm [shape: f32[2,16,16,128], index: 5, kind: output, shape index: {}]
  %s6 = sld [smem:[#allocation0]]
  $region73: #{double_conv.1} parent=0
    _
  %s8 = ssub.s32 1, %s6
  %s9 = scalar_select 0, %s8, %s6
  $region1: #{double_conv.1} parent=0
    #allocation5 [shape = 'u8[589824]{0}', space=vmem, size = 0x90000, scoped, tag = 'input window, operand 1, single buffered']
    #allocation6 [shape = 's32[2]{0}', space=sflag, size = 0x8, scoped, tag = 'scoped memory for double_conv.1']
    #allocation7 [shape = 's32[2]{0}', space=sflag, size = 0x8, scoped, tag = 'scoped memory for double_conv.1']
    #allocation8 [shape = 'u8[512]{0}', space=vmem, size = 0x400, scoped, tag = 'input window, operand 2, single buffered']
    #allocation9 [shape = 's32[1]{0}', space=sflag, size = 0x4, scoped, tag = 'scoped memory for double_conv.1']
    #allocation10 [shape = 'u8[589824]{0}', space=vmem, size = 0x90000, scoped, tag = 'input window, operand 3, single buffered']
    #allocation11 [shape = 'u8[512]{0}', space=vmem, size = 0x400, scoped, tag = 'input window, operand 4, single buffered']
    #allocation12 [shape = 's32[1]{0}', space=sflag, size = 0x4, scoped, tag = 'scoped memory for double_conv.1']
    #allocation13 [shape = 'u8[131072]{0}', space=vmem, size = 0x20000, scoped, tag = 'output window, operand 0']
    %10 = vsyncpa [#allocation6], 0
    %11 = vsyncpa [#allocation9], 0
    %12 = vsyncpa [#allocation12], 0
    %13 = vsyncpa [#allocation7], 0
    %s14 = scalar_lea.sflag [#allocation7], 1
    %15 = vsyncpa %s14, 0
    loop: start=0, step=1, limit=6
    $region2: #{double_conv.1} parent=1 // loop_pre_header
      _
    $region3: #{double_conv.1} parent=1 // loop_header
      %s17 = sphi 0, %s21
      %p18 = scmp.ge.s32.totalorder %s17, 6
      %s24 = sphi 0, %s36
      %s25 = sphi 0, %s32
      %s26 = sphi 0, %s24
      %s27 = sphi 0, %s25
      %s28 = sphi 0, %s26
      %s29 = sphi 0, %s27
      %s37 = sphi 0, %s37
      %s39 = sphi 0, %s37
      %s40 = sphi 0, %s39
      %s54 = sphi 0, %s40
      %s58 = sphi 0, %s58
      %s60 = sphi 0, %s58
      %s61 = sphi 0, %s60
      %s75 = sphi 0, %s61
      %s79 = sphi 0, %s79
      %s81 = sphi 0, %s79
      %s82 = sphi 0, %s81
      %s96 = sphi 0, %s82
      %s100 = sphi 0, %s100
      %s102 = sphi 0, %s100
      %s103 = sphi 0, %s102
      %s117 = sphi 0, %s103
      %s125 = sphi 0, %s127
      %s128 = sphi 0, %s125
      %s129 = sphi 0, %s128
      %s145 = sphi 0, %s129
    $region4: #{double_conv.1} parent=1 // loop_header_branch
      %20 = sbr.rel (%p18) target = $region8
    $region5: #{double_conv.1} parent=1 // loop_body
      %s22 = ssub.s32 %s17, 1
      %s23 = ssub.s32 %s17, 2
      %s30 = sadd.s32 1, %s25
      %p31 = scmp.ge.s32.totalorder %s30, 2
      %s32 = scalar_select %p31, 0, %s30
      %s33 = sadd.s32 1, %s24
      %s34 = scalar_select %p31, %s33, %s24
      %p35 = scmp.ge.s32.totalorder %s34, 2
      %s36 = scalar_select %p35, 0, %s34
      %s38 = sadd.s32 %s37, 1
      %p41 = scmp.eq.s32.totalorder %s17, 3
      %p42 = scmp.ne.s32.totalorder %s37, %s39
      %p43 = scmp.eq.s32.totalorder %s17, 0
      %p44 = por %p42, %p43
      %p45 = scmp.ne.s32.totalorder %s37, %s39
      %p46 = scmp.eq.s32.totalorder %s22, 3
      %p47 = por %p45, %p46
      %p48 = scmp.ne.s32.totalorder %s39, %s40
      %p49 = scmp.eq.s32.totalorder %s22, 0
      %p50 = por %p48, %p49
      %p51 = scmp.ne.s32.totalorder %s39, %s40
      %p52 = scmp.eq.s32.totalorder %s23, 3
      %p53 = por %p51, %p52
      %p55 = scmp.ne.s32.totalorder %s40, %s54
      %p56 = scmp.eq.s32.totalorder %s23, 0
      %p57 = por %p55, %p56
      %s59 = sadd.s32 %s58, 1
      %p62 = scmp.eq.s32.totalorder %s17, 3
      %p63 = scmp.ne.s32.totalorder %s58, %s60
      %p64 = scmp.eq.s32.totalorder %s17, 0
      %p65 = por %p63, %p64
      %p66 = scmp.ne.s32.totalorder %s58, %s60
      %p67 = scmp.eq.s32.totalorder %s22, 3
      %p68 = por %p66, %p67
      %p69 = scmp.ne.s32.totalorder %s60, %s61
      %p70 = scmp.eq.s32.totalorder %s22, 0
      %p71 = por %p69, %p70
      %p72 = scmp.ne.s32.totalorder %s60, %s61
      %p73 = scmp.eq.s32.totalorder %s23, 3
      %p74 = por %p72, %p73
      %p76 = scmp.ne.s32.totalorder %s61, %s75
      %p77 = scmp.eq.s32.totalorder %s23, 0
      %p78 = por %p76, %p77
      %s80 = sadd.s32 %s79, 1
      %p83 = scmp.eq.s32.totalorder %s17, 3
      %p84 = scmp.ne.s32.totalorder %s79, %s81
      %p85 = scmp.eq.s32.totalorder %s17, 0
      %p86 = por %p84, %p85
      %p87 = scmp.ne.s32.totalorder %s79, %s81
      %p88 = scmp.eq.s32.totalorder %s22, 3
      %p89 = por %p87, %p88
      %p90 = scmp.ne.s32.totalorder %s81, %s82
      %p91 = scmp.eq.s32.totalorder %s22, 0
      %p92 = por %p90, %p91
      %p93 = scmp.ne.s32.totalorder %s81, %s82
      %p94 = scmp.eq.s32.totalorder %s23, 3
      %p95 = por %p93, %p94
      %p97 = scmp.ne.s32.totalorder %s82, %s96
      %p98 = scmp.eq.s32.totalorder %s23, 0
      %p99 = por %p97, %p98
      %s101 = sadd.s32 %s100, 1
      %p104 = scmp.eq.s32.totalorder %s17, 3
      %p105 = scmp.ne.s32.totalorder %s100, %s102
      %p106 = scmp.eq.s32.totalorder %s17, 0
      %p107 = por %p105, %p106
      %p108 = scmp.ne.s32.totalorder %s100, %s102
      %p109 = scmp.eq.s32.totalorder %s22, 3
      %p110 = por %p108, %p109
      %p111 = scmp.ne.s32.totalorder %s102, %s103
      %p112 = scmp.eq.s32.totalorder %s22, 0
      %p113 = por %p111, %p112
      %p114 = scmp.ne.s32.totalorder %s102, %s103
      %p115 = scmp.eq.s32.totalorder %s23, 3
      %p116 = por %p114, %p115
      %p118 = scmp.ne.s32.totalorder %s103, %s117
      %p119 = scmp.eq.s32.totalorder %s23, 0
      %p120 = por %p118, %p119
      %s121 = ssub.s32 %s24, %s36
      %s122 = ssub.s32 %s25, %s32
      %s123 = sor.u32 %s121, %s122
      %p124 = scmp.eq.s32.totalorder %s123, 0
      %s126 = sadd.s32 %s125, 1
      %s127 = scalar_select %p124, %s125, %s126
      %p130 = pneg %p124
      %p131 = scmp.eq.s32.totalorder %s17, 3
      %p132 = por %p130, %p131
      %p133 = scmp.ne.s32.totalorder %s125, %s128
      %p134 = scmp.eq.s32.totalorder %s17, 0
      %p135 = por %p133, %p134
      %p136 = scmp.ne.s32.totalorder %s125, %s128
      %p137 = scmp.eq.s32.totalorder %s22, 3
      %p138 = por %p136, %p137
      %p139 = scmp.ne.s32.totalorder %s128, %s129
      %p140 = scmp.eq.s32.totalorder %s22, 0
      %p141 = por %p139, %p140
      %p142 = scmp.ne.s32.totalorder %s128, %s129
      %p143 = scmp.eq.s32.totalorder %s23, 3
      %p144 = por %p142, %p143
      %p146 = scmp.ne.s32.totalorder %s129, %s145
      %p147 = scmp.eq.s32.totalorder %s23, 0
      %p148 = por %p146, %p147
      %p149 = scmp.le.s32.totalorder 1, %s17
      %p150 = scmp.lt.s32.totalorder %s17, 5
      %p151 = pnand %p149, %p150
      %p152 = pneg %p151
      // Predicated region
      $region9: #{double_conv.1} parent=5 // pred_check
        _
      $region10: #{double_conv.1} parent=5 // pred_check_branch
        %154 = sbr.rel (%p151) target = $region12
      $region11: #{double_conv.1} parent=5 // pred_region
        %s155 = ssub.s32 %s17, 1
        // Predicated region
        $region13: #{double_conv.1} parent=11 // pred_check
          %p156 = pneg %p50
        $region14: #{double_conv.1} parent=11 // pred_check_branch
          %158 = sbr.rel (%p156) target = $region16
        $region15: #{double_conv.1} parent=11 // pred_region
          %s160 = ssub.s32 18432, 18432
          %161 = vsyncadd [#allocation6], %s160
          %s162 = sshll.u32 [#allocation5], 4
          %s163 = int_to_ptr.vmem [resolvable:$true] %s162
          %168 = dma.hbm_to_vmem [thread:$0]  %s1, 18432, %s163, [#allocation6], 128, 128, 8
        $region16: #{double_conv.1} parent=11 // pred_fallthru
          _
        // Predicated region
        $region17: #{double_conv.1} parent=11 // pred_check
          %p169 = pneg %p71
        $region18: #{double_conv.1} parent=11 // pred_check_branch
          %171 = sbr.rel (%p169) target = $region20
        $region19: #{double_conv.1} parent=11 // pred_region
          %s173 = ssub.s32 16, 16
          %174 = vsyncadd [#allocation9], %s173
          %s176 = sshll.u32 [#allocation8], 4
          %s177 = int_to_ptr.vmem [resolvable:$true] %s176
          %179 = dma.hbm_to_vmem [thread:$0]  %s2, 16, %s177, [#allocation9]
        $region20: #{double_conv.1} parent=11 // pred_fallthru
          _
        // Predicated region
        $region21: #{double_conv.1} parent=11 // pred_check
          %p180 = pneg %p92
        $region22: #{double_conv.1} parent=11 // pred_check_branch
          %182 = sbr.rel (%p180) target = $region24
        $region23: #{double_conv.1} parent=11 // pred_region
          %s184 = ssub.s32 18432, 18432
          %185 = vsyncadd [#allocation9], %s184
          %s186 = sshll.u32 [#allocation10], 4
          %s187 = int_to_ptr.vmem [resolvable:$true] %s186
          %192 = dma.hbm_to_vmem [thread:$0]  %s3, 18432, %s187, [#allocation9], 128, 128, 8
        $region24: #{double_conv.1} parent=11 // pred_fallthru
          _
        // Predicated region
        $region25: #{double_conv.1} parent=11 // pred_check
          %p193 = pneg %p113
        $region26: #{double_conv.1} parent=11 // pred_check_branch
          %195 = sbr.rel (%p193) target = $region28
        $region27: #{double_conv.1} parent=11 // pred_region
          %s197 = ssub.s32 16, 16
          %198 = vsyncadd [#allocation12], %s197
          %s200 = sshll.u32 [#allocation11], 4
          %s201 = int_to_ptr.vmem [resolvable:$true] %s200
          %203 = dma.hbm_to_vmem [thread:$0]  %s4, 16, %s201, [#allocation12]
        $region28: #{double_conv.1} parent=11 // pred_fallthru
          _
      $region12: #{double_conv.1} parent=5 // pred_fallthru
        _
      %p204 = scmp.lt.s32.totalorder %s17, 4
      // Predicated region
      $region29: #{double_conv.1} parent=5 // pred_check
        %p205 = pneg %p204
      $region30: #{double_conv.1} parent=5 // pred_check_branch
        %207 = sbr.rel (%p205) target = $region32
      $region31: #{double_conv.1} parent=5 // pred_region
        _
      $region32: #{double_conv.1} parent=5 // pred_fallthru
        _
      %p208 = scmp.le.s32.totalorder 1, %s17
      %p209 = scmp.lt.s32.totalorder %s17, 5
      %p210 = pnand %p208, %p209
      %p211 = pneg %p210
      // Predicated region
      $region33: #{double_conv.1} parent=5 // pred_check
        _
      $region34: #{double_conv.1} parent=5 // pred_check_branch
        %213 = sbr.rel (%p210) target = $region36
      $region35: #{double_conv.1} parent=5 // pred_region
        %s214 = ssub.s32 %s17, 1
        // Predicated region
        $region37: #{double_conv.1} parent=35 // pred_check
          %p215 = pneg %p50
        $region38: #{double_conv.1} parent=35 // pred_check_branch
          %217 = sbr.rel (%p215) target = $region40
        $region39: #{double_conv.1} parent=35 // pred_region
          %218 = dma.done [#allocation6], 18432
        $region40: #{double_conv.1} parent=35 // pred_fallthru
          _
        // Predicated region
        $region41: #{double_conv.1} parent=35 // pred_check
          %p219 = pneg %p71
        $region42: #{double_conv.1} parent=35 // pred_check_branch
          %221 = sbr.rel (%p219) target = $region44
        $region43: #{double_conv.1} parent=35 // pred_region
          %222 = dma.done [#allocation9], 16
        $region44: #{double_conv.1} parent=35 // pred_fallthru
          _
        // Predicated region
        $region45: #{double_conv.1} parent=35 // pred_check
          %p223 = pneg %p92
        $region46: #{double_conv.1} parent=35 // pred_check_branch
          %225 = sbr.rel (%p223) target = $region48
        $region47: #{double_conv.1} parent=35 // pred_region
          %226 = dma.done [#allocation9], 18432
        $region48: #{double_conv.1} parent=35 // pred_fallthru
          _
        // Predicated region
        $region49: #{double_conv.1} parent=35 // pred_check
          %p227 = pneg %p113
        $region50: #{double_conv.1} parent=35 // pred_check_branch
          %229 = sbr.rel (%p227) target = $region52
        $region51: #{double_conv.1} parent=35 // pred_region
          %230 = dma.done [#allocation12], 16
        $region52: #{double_conv.1} parent=35 // pred_fallthru
          _
        %p231 = pneg %p50
        %p232 = pneg %p47
        %p233 = pneg %p71
        %p234 = pneg %p68
        %p235 = pneg %p92
        %p236 = pneg %p89
        %p237 = pneg %p113
        %p238 = pneg %p110
        %p239 = pneg %p141
        %p240 = pneg %p138
        %s241 = sand.u32 %s128, 1
        %s242 = scalar_lea.sflag [#allocation7], %s241
        %s243 = sand.u32 %s128, 1
        %s244 = smul.addr %s243, 128
        %s245 = scalar_lea.vmem [#allocation13], %s244
        %s246 = smul.u32 8, %s27
        %p247 = scmp.lt.s32.totalorder %s27, 0
        %s248 = ssub.s32 0, %s27
        %s249 = scalar_select %p247, %s248, %s27
        %s250 = sand.u32 %s249, 1
        %s251 = ssub.s32 0, %s250
        %s252 = scalar_select %p247, %s251, %s250
        %p253 = scmp.ne.s32.totalorder %s252, 0
        %p254 = scmp.lt.s32.totalorder %s252, 0
        %p255 = pnand %p254, %p253
        %p256 = pneg %p255
        %s257 = sadd.s32 %s252, 2
        %s258 = scalar_select %p256, %s257, %s252
        %p259 = scmp.eq.s32.totalorder %s27, 0
        // Predicated region
        $region53: #{double_conv.1} parent=35 // pred_check
          %p260 = pneg %p259
        $region54: #{double_conv.1} parent=35 // pred_check_branch
          %262 = sbr.rel (%p260) target = $region56
        $region55: #{double_conv.1} parent=35 // pred_region
          %s263 = smul.u32 %s26, 480
          %s264 = smul.addr %s263, 16
          %s265 = scalar_lea.hbm %s0, %s264
          %s267 = sshll.u32 [#allocation2], 4
          %s268 = int_to_ptr.vmem [resolvable:$true] %s267
          %270 = dma.hbm_to_vmem [thread:$0]  %s265, 3456, %s268, [#allocation3], 384, 384, 18
        $region56: #{double_conv.1} parent=35 // pred_fallthru
          _
        %s271 = smul.u32 %s27, 8
        %s272 = smul.u32 %s258, 288
        %s273 = scalar_lea.vmem [#allocation2], %s272
        %s274 = scalar_lea.sflag [#allocation3], %s258
        %s275 = smul.u32 12, 18
        %s276 = smul.u32 %s275, 1
        %s277 = sshll.u32 %s276, 4
        %278 = dma.done %s274, %s277
        %s279 = sadd.s32 %s27, 1
        %p280 = scmp.lt.s32.totalorder %s279, 2
        // Predicated region
        $region57: #{double_conv.1} parent=35 // pred_check
          %p281 = pneg %p280
        $region58: #{double_conv.1} parent=35 // pred_check_branch
          %283 = sbr.rel (%p281) target = $region60
        $region59: #{double_conv.1} parent=35 // pred_region
          %s284 = ssub.s32 1, %s258
          %s285 = smul.u32 %s279, 8
          %s286 = smul.u32 %s285, 24
          %s287 = smul.u32 %s26, 480
          %s288 = sadd.s32 %s286, %s287
          %s289 = smul.addr %s288, 16
          %s290 = scalar_lea.hbm %s0, %s289
          %s291 = smul.u32 %s284, 288
          %s292 = scalar_lea.vmem [#allocation2], %s291
          %s293 = scalar_lea.sflag [#allocation3], %s284
          %s295 = sshll.u32 %s292, 4
          %s296 = int_to_ptr.vmem [resolvable:$true] %s295
          %298 = dma.hbm_to_vmem [thread:$0]  %s290, 3456, %s296, %s293, 384, 384, 18
        $region60: #{double_conv.1} parent=35 // pred_fallthru
          _
        %v299 = vld [vmem:[%s273] sm:$0xff]
        %v300 = vld [vmem:[%s273 + $0x8] sm:$0xff]
        %v301 = vld [vmem:[%s273 + $0x10] sm:$0x3]
        %v302 = vld [vmem:[%s273 + $0x18] sm:$0xff]
        %v303 = vld [vmem:[%s273 + $0x20] sm:$0xff]
        %v304 = vld [vmem:[%s273 + $0x28] sm:$0x3]
        %v305 = vld [vmem:[%s273 + $0x30] sm:$0xff]
        %v306 = vld [vmem:[%s273 + $0x38] sm:$0xff]
        %v307 = vld [vmem:[%s273 + $0x40] sm:$0x3]
        %v308 = vld [vmem:[%s273 + $0x48] sm:$0xff]
        %v309 = vld [vmem:[%s273 + $0x50] sm:$0xff]
        %v310 = vld [vmem:[%s273 + $0x58] sm:$0x3]
        %v311 = vld [vmem:[%s273 + $0x60] sm:$0xff]
        %v312 = vld [vmem:[%s273 + $0x68] sm:$0xff]
        %v313 = vld [vmem:[%s273 + $0x70] sm:$0x3]
        %v314 = vld [vmem:[%s273 + $0x78] sm:$0xff]
        %v315 = vld [vmem:[%s273 + $0x80] sm:$0xff]
        %v316 = vld [vmem:[%s273 + $0x88] sm:$0x3]
        %v317 = vld [vmem:[%s273 + $0x90] sm:$0xff]
        %v318 = vld [vmem:[%s273 + $0x98] sm:$0xff]
        %v319 = vld [vmem:[%s273 + $0xa0] sm:$0x3]
        %v320 = vld [vmem:[%s273 + $0xa8] sm:$0xff]
        %v321 = vld [vmem:[%s273 + $0xb0] sm:$0xff]
        %v322 = vld [vmem:[%s273 + $0xb8] sm:$0x3]
        %v323 = vld [vmem:[%s273 + $0xc0] sm:$0xff]
        %v324 = vld [vmem:[%s273 + $0xc8] sm:$0xff]
        %v325 = vld [vmem:[%s273 + $0xd0] sm:$0x3]
        %v326 = vld [vmem:[%s273 + $0xd8] sm:$0xff]
        %v327 = vld [vmem:[%s273 + $0xe0] sm:$0xff]
        %v328 = vld [vmem:[%s273 + $0xe8] sm:$0x3]
        %v329 = vld [vmem:[%s273 + $0xf0] sm:$0xff]
        %v330 = vld [vmem:[%s273 + $0xf8] sm:$0xff]
        %v331 = vld [vmem:[%s273 + $0x100] sm:$0x3]
        %v332 = vld [vmem:[%s273 + $0x108] sm:$0xff]
        %v333 = vld [vmem:[%s273 + $0x110] sm:$0xff]
        %v334 = vld [vmem:[%s273 + $0x118] sm:$0x3]
        %v335 = vld [vmem:[#allocation5] sm:$0xff]
        %v336 = vld [vmem:[#allocation5 + $0x8] sm:$0xff]
        %v337 = vld [vmem:[#allocation5 + $0x10] sm:$0xff]
        %v338 = vld [vmem:[#allocation5 + $0x18] sm:$0xff]
        %v339 = vld [vmem:[#allocation5 + $0x20] sm:$0xff]
        %v340 = vld [vmem:[#allocation5 + $0x28] sm:$0xff]
        %v341 = vld [vmem:[#allocation5 + $0x30] sm:$0xff]
        %v342 = vld [vmem:[#allocation5 + $0x38] sm:$0xff]
        %v343 = vld [vmem:[#allocation5 + $0x40] sm:$0xff]
        %v344 = vld [vmem:[#allocation5 + $0x48] sm:$0xff]
        %v345 = vld [vmem:[#allocation5 + $0x50] sm:$0xff]
        %v346 = vld [vmem:[#allocation5 + $0x58] sm:$0xff]
        %v347 = vld [vmem:[#allocation5 + $0x60] sm:$0xff]
        %v348 = vld [vmem:[#allocation5 + $0x68] sm:$0xff]
        %v349 = vld [vmem:[#allocation5 + $0x70] sm:$0xff]
        %v350 = vld [vmem:[#allocation5 + $0x78] sm:$0xff]
        %vm381 = vcmask 1046528
        %v382 = vrot.slane %v299, 1
        %v383 = vrot.slane %v300, 1
        %v384 = vsel %vm381, %v382, %v383
        %v385 = vrot.slane %v301, 1
        %v386 = vsel %vm381, %v383, %v385
        %v387 = vrot.slane %v302, 1
        %v388 = vrot.slane %v303, 1
        %v389 = vsel %vm381, %v387, %v388
        %v390 = vrot.slane %v304, 1
        %v391 = vsel %vm381, %v388, %v390
        %v392 = vrot.slane %v305, 1
        %v393 = vrot.slane %v306, 1
        %v394 = vsel %vm381, %v392, %v393
        %v395 = vrot.slane %v307, 1
        %v396 = vsel %vm381, %v393, %v395
        %v397 = vrot.slane %v308, 1
        %v398 = vrot.slane %v309, 1
        %v399 = vsel %vm381, %v397, %v398
        %v400 = vrot.slane %v310, 1
        %v401 = vsel %vm381, %v398, %v400
        %v402 = vrot.slane %v311, 1
        %v403 = vrot.slane %v312, 1
        %v404 = vsel %vm381, %v402, %v403
        %v405 = vrot.slane %v313, 1
        %v406 = vsel %vm381, %v403, %v405
        %v407 = vrot.slane %v314, 1
        %v408 = vrot.slane %v315, 1
        %v409 = vsel %vm381, %v407, %v408
        %v410 = vrot.slane %v316, 1
        %v411 = vsel %vm381, %v408, %v410
        %v412 = vrot.slane %v317, 1
        %v413 = vrot.slane %v318, 1
        %v414 = vsel %vm381, %v412, %v413
        %v415 = vrot.slane %v319, 1
        %v416 = vsel %vm381, %v413, %v415
        %v417 = vrot.slane %v320, 1
        %v418 = vrot.slane %v321, 1
        %v419 = vsel %vm381, %v417, %v418
        %v420 = vrot.slane %v322, 1
        %v421 = vsel %vm381, %v418, %v420
        %v422 = vrot.slane %v323, 1
        %v423 = vrot.slane %v324, 1
        %v424 = vsel %vm381, %v422, %v423
        %v425 = vrot.slane %v325, 1
        %v426 = vsel %vm381, %v423, %v425
        %v427 = vrot.slane %v326, 1
        %v428 = vrot.slane %v327, 1
        %v429 = vsel %vm381, %v427, %v428
        %v430 = vrot.slane %v328, 1
        %v431 = vsel %vm381, %v428, %v430
        %s452 = scalar_lea.vmem [#allocation5], 128
        %v453 = vld [vmem:[%s452] sm:$0xff]
        %v454 = vld [vmem:[%s452 + $0x8] sm:$0xff]
        %v455 = vld [vmem:[%s452 + $0x10] sm:$0xff]
        %v456 = vld [vmem:[%s452 + $0x18] sm:$0xff]
        %v457 = vld [vmem:[%s452 + $0x20] sm:$0xff]
        %v458 = vld [vmem:[%s452 + $0x28] sm:$0xff]
        %v459 = vld [vmem:[%s452 + $0x30] sm:$0xff]
        %v460 = vld [vmem:[%s452 + $0x38] sm:$0xff]
        %v461 = vld [vmem:[%s452 + $0x40] sm:$0xff]
        %v462 = vld [vmem:[%s452 + $0x48] sm:$0xff]
        %v463 = vld [vmem:[%s452 + $0x50] sm:$0xff]
        %v464 = vld [vmem:[%s452 + $0x58] sm:$0xff]
        %v465 = vld [vmem:[%s452 + $0x60] sm:$0xff]
        %v466 = vld [vmem:[%s452 + $0x68] sm:$0xff]
        %v467 = vld [vmem:[%s452 + $0x70] sm:$0xff]
        %v468 = vld [vmem:[%s452 + $0x78] sm:$0xff]
        %469 = vmatprep.subr.mxu0 0.0
        %470 = vmatpush1.msra.mxu0 %v453
        %471 = vmatprep.subr.mxu0 0.0
        %472 = vmatpush1.msra.mxu0 %v454
        %473 = vmatprep.subr.mxu0 0.0
        %474 = vmatpush1.msra.mxu0 %v455
        %475 = vmatprep.subr.mxu0 0.0
        %476 = vmatpush1.msra.mxu0 %v456
        %477 = vmatprep.subr.mxu0 0.0
        %478 = vmatpush1.msra.mxu0 %v457
        %479 = vmatprep.subr.mxu0 0.0
        %480 = vmatpush1.msra.mxu0 %v458
        %481 = vmatprep.subr.mxu0 0.0
        %482 = vmatpush1.msra.mxu0 %v459
        %483 = vmatprep.subr.mxu0 0.0
        %484 = vmatpush1.msra.mxu0 %v460
        %485 = vmatprep.subr.mxu0 0.0
        %486 = vmatpush1.msra.mxu0 %v461
        %487 = vmatprep.subr.mxu0 0.0
        %488 = vmatpush1.msra.mxu0 %v462
        %489 = vmatprep.subr.mxu0 0.0
        %490 = vmatpush1.msra.mxu0 %v463
        %491 = vmatprep.subr.mxu0 0.0
        %492 = vmatpush1.msra.mxu0 %v464
        %493 = vmatprep.subr.mxu0 0.0
        %494 = vmatpush1.msra.mxu0 %v465
        %495 = vmatprep.subr.mxu0 0.0
        %496 = vmatpush1.msra.mxu0 %v466
        %497 = vmatprep.subr.mxu0 0.0
        %498 = vmatpush1.msra.mxu0 %v467
        %499 = vmatprep.subr.mxu0 0.0
        %500 = vmatpush1.msra.mxu0 %v468
        %501 = vmatprep.subr.mxu0 0.0
        %502 = vmatpush1.msra.mxu0 0.0
        %503 = vmatprep.subr.mxu0 0.0
        %504 = vmatpush1.msra.mxu0 0.0
        %505 = vmatprep.subr.mxu0 0.0
        %506 = vmatpush1.msra.mxu0 0.0
        %507 = vmatprep.subr.mxu0 0.0
        %508 = vmatpush1.msra.mxu0 0.0
        %509 = vmatprep.subr.mxu0 0.0
        %510 = vmatpush1.msra.mxu0 0.0
        %511 = vmatprep.subr.mxu0 0.0
        %512 = vmatpush1.msra.mxu0 0.0
        %513 = vmatprep.subr.mxu0 0.0
        %514 = vmatpush1.msra.mxu0 0.0
        %515 = vmatprep.subr.mxu0 0.0
        %516 = vmatpush1.msra.mxu0 0.0
        %517 = vmatprep.subr.mxu0 0.0
        %518 = vmatpush1.msra.mxu0 0.0
        %519 = vmatprep.subr.mxu0 0.0
        %520 = vmatpush1.msra.mxu0 0.0
        %521 = vmatprep.subr.mxu0 0.0
        %522 = vmatpush1.msra.mxu0 0.0
        %523 = vmatprep.subr.mxu0 0.0
        %524 = vmatpush1.msra.mxu0 0.0
        %525 = vmatprep.subr.mxu0 0.0
        %526 = vmatpush1.msra.mxu0 0.0
        %527 = vmatprep.subr.mxu0 0.0
        %528 = vmatpush1.msra.mxu0 0.0
        %529 = vmatprep.subr.mxu0 0.0
        %530 = vmatpush1.msra.mxu0 0.0
        %531 = vmatprep.subr.mxu0 0.0
        %532 = vmatpush1.msra.mxu0 0.0
        %533 = vmatprep.mubr.f32.mxu0 0.0
        %534 = vmatmul.mubr.f32.gmra.mrb[0].mxu0 %v384
        %v535 = vpop.f32.mrb[0].mxu0
        %v536 = vadd.f32 0.0, %v535
        %v537 = vpop.f32.mrb[0].mxu0
        %538 = vmatprep.mubr.f32.mxu0 0.0
        %539 = vmatmul.mubr.f32.gmra.mrb[0].mxu0 %v386
        %v540 = vpop.f32.mrb[0].mxu0
        %v541 = vadd.f32 0.0, %v540
        %v542 = vpop.f32.mrb[0].mxu0
        %543 = vmatprep.mubr.f32.mxu0 0.0
        %544 = vmatmul.mubr.f32.gmra.mrb[0].mxu0 %v389
        %v545 = vpop.f32.mrb[0].mxu0
        %v546 = vadd.f32 0.0, %v545
        %v547 = vpop.f32.mrb[0].mxu0
        %548 = vmatprep.mubr.f32.mxu0 0.0
        %549 = vmatmul.mubr.f32.gmra.mrb[0].mxu0 %v391
        %v550 = vpop.f32.mrb[0].mxu0
        %v551 = vadd.f32 0.0, %v550
        %v552 = vpop.f32.mrb[0].mxu0
        %553 = vmatprep.mubr.f32.mxu0 0.0
        %554 = vmatmul.mubr.f32.gmra.mrb[0].mxu0 %v394
        %v555 = vpop.f32.mrb[0].mxu0
        %v556 = vadd.f32 0.0, %v555
        %v557 = vpop.f32.mrb[0].mxu0
        %558 = vmatprep.mubr.f32.mxu0 0.0
        %559 = vmatmul.mubr.f32.gmra.mrb[0].mxu0 %v396
        %v560 = vpop.f32.mrb[0].mxu0
        %v561 = vadd.f32 0.0, %v560
        %v562 = vpop.f32.mrb[0].mxu0
        %563 = vmatprep.mubr.f32.mxu0 0.0
        %564 = vmatmul.mubr.f32.gmra.mrb[0].mxu0 %v399
        %v565 = vpop.f32.mrb[0].mxu0
        %v566 = vadd.f32 0.0, %v565
        %v567 = vpop.f32.mrb[0].mxu0
        %568 = vmatprep.mubr.f32.mxu0 0.0
        %569 = vmatmul.mubr.f32.gmra.mrb[0].mxu0 %v401
        %v570 = vpop.f32.mrb[0].mxu0
        %v571 = vadd.f32 0.0, %v570
        %v572 = vpop.f32.mrb[0].mxu0
        %573 = vmatprep.mubr.f32.mxu0 0.0
        %574 = vmatmul.mubr.f32.gmra.mrb[0].mxu0 %v404
        %v575 = vpop.f32.mrb[0].mxu0
        %v576 = vadd.f32 0.0, %v575
        %v577 = vpop.f32.mrb[0].mxu0
        %578 = vmatprep.mubr.f32.mxu0 0.0
        %579 = vmatmul.mubr.f32.gmra.mrb[0].mxu0 %v406
        %v580 = vpop.f32.mrb[0].mxu0
        %v581 = vadd.f32 0.0, %v580
        %v582 = vpop.f32.mrb[0].mxu0
        %583 = vmatprep.mubr.f32.mxu0 0.0
        %584 = vmatmul.mubr.f32.gmra.mrb[0].mxu0 %v409
        %v585 = vpop.f32.mrb[0].mxu0
        %v586 = vadd.f32 0.0, %v585
        %v587 = vpop.f32.mrb[0].mxu0
        %588 = vmatprep.mubr.f32.mxu0 0.0
        %589 = vmatmul.mubr.f32.gmra.mrb[0].mxu0 %v411
        %v590 = vpop.f32.mrb[0].mxu0
        %v591 = vadd.f32 0.0, %v590
        %v592 = vpop.f32.mrb[0].mxu0
        %593 = vmatprep.mubr.f32.mxu0 0.0
        %594 = vmatmul.mubr.f32.gmra.mrb[0].mxu0 %v414
        %v595 = vpop.f32.mrb[0].mxu0
        %v596 = vadd.f32 0.0, %v595
        %v597 = vpop.f32.mrb[0].mxu0
        %598 = vmatprep.mubr.f32.mxu0 0.0
        %599 = vmatmul.mubr.f32.gmra.mrb[0].mxu0 %v416
        %v600 = vpop.f32.mrb[0].mxu0
        %v601 = vadd.f32 0.0, %v600
        %v602 = vpop.f32.mrb[0].mxu0
        %603 = vmatprep.mubr.f32.mxu0 0.0
        %604 = vmatmul.mubr.f32.gmra.mrb[0].mxu0 %v419
        %v605 = vpop.f32.mrb[0].mxu0
        %v606 = vadd.f32 0.0, %v605
        %v607 = vpop.f32.mrb[0].mxu0
        %608 = vmatprep.mubr.f32.mxu0 0.0
        %609 = vmatmul.mubr.f32.gmra.mrb[0].mxu0 %v421
        %v610 = vpop.f32.mrb[0].mxu0
        %v611 = vadd.f32 0.0, %v610
        %v612 = vpop.f32.mrb[0].mxu0
        %613 = vmatprep.mubr.f32.mxu0 0.0
        %614 = vmatmul.mubr.f32.gmra.mrb[0].mxu0 %v424
        %v615 = vpop.f32.mrb[0].mxu0
        %v616 = vadd.f32 0.0, %v615
        %v617 = vpop.f32.mrb[0].mxu0
        %618 = vmatprep.mubr.f32.mxu0 0.0
        %619 = vmatmul.mubr.f32.gmra.mrb[0].mxu0 %v426
        %v620 = vpop.f32.mrb[0].mxu0
        %v621 = vadd.f32 0.0, %v620
        %v622 = vpop.f32.mrb[0].mxu0
        %623 = vmatprep.mubr.f32.mxu0 0.0
        %624 = vmatmul.mubr.f32.gmra.mrb[0].mxu0 %v429
        %v625 = vpop.f32.mrb[0].mxu0
        %v626 = vadd.f32 0.0, %v625
        %v627 = vpop.f32.mrb[0].mxu0
        %628 = vmatprep.mubr.f32.mxu0 0.0
        %629 = vmatmul.mubr.f32.gmra.mrb[0].mxu0 %v431
        %v630 = vpop.f32.mrb[0].mxu0
        %v631 = vadd.f32 0.0, %v630
        %v632 = vpop.f32.mrb[0].mxu0
        %633 = vdwg.mxu0
        %634 = vmatprep.subr.mxu0 0.0
        %635 = vmatpush1.msra.mxu0 %v335
        %636 = vmatprep.subr.mxu0 0.0
        %637 = vmatpush1.msra.mxu0 %v336
        %638 = vmatprep.subr.mxu0 0.0
        %639 = vmatpush1.msra.mxu0 %v337
        %640 = vmatprep.subr.mxu0 0.0
        %641 = vmatpush1.msra.mxu0 %v338
        %642 = vmatprep.subr.mxu0 0.0
        %643 = vmatpush1.msra.mxu0 %v339
        %644 = vmatprep.subr.mxu0 0.0
        %645 = vmatpush1.msra.mxu0 %v340
        %646 = vmatprep.subr.mxu0 0.0
        %647 = vmatpush1.msra.mxu0 %v341
        %648 = vmatprep.subr.mxu0 0.0
        %649 = vmatpush1.msra.mxu0 %v342
        %650 = vmatprep.subr.mxu0 0.0
        %651 = vmatpush1.msra.mxu0 %v343
        %652 = vmatprep.subr.mxu0 0.0
        %653 = vmatpush1.msra.mxu0 %v344
        %654 = vmatprep.subr.mxu0 0.0
        %655 = vmatpush1.msra.mxu0 %v345
        %656 = vmatprep.subr.mxu0 0.0
        %657 = vmatpush1.msra.mxu0 %v346
        %658 = vmatprep.subr.mxu0 0.0
        %659 = vmatpush1.msra.mxu0 %v347
        %660 = vmatprep.subr.mxu0 0.0
        %661 = vmatpush1.msra.mxu0 %v348
        %662 = vmatprep.subr.mxu0 0.0
        %663 = vmatpush1.msra.mxu0 %v349
        %664 = vmatprep.subr.mxu0 0.0
        %665 = vmatpush1.msra.mxu0 %v350
        %666 = vmatprep.subr.mxu0 0.0
        %667 = vmatpush1.msra.mxu0 0.0
        %668 = vmatprep.subr.mxu0 0.0
        %669 = vmatpush1.msra.mxu0 0.0
        %670 = vmatprep.subr.mxu0 0.0
        %671 = vmatpush1.msra.mxu0 0.0
        %672 = vmatprep.subr.mxu0 0.0
        %673 = vmatpush1.msra.mxu0 0.0
        %674 = vmatprep.subr.mxu0 0.0
        %675 = vmatpush1.msra.mxu0 0.0
        %676 = vmatprep.subr.mxu0 0.0
        %677 = vmatpush1.msra.mxu0 0.0
        %678 = vmatprep.subr.mxu0 0.0
        %679 = vmatpush1.msra.mxu0 0.0
        %680 = vmatprep.subr.mxu0 0.0
        %681 = vmatpush1.msra.mxu0 0.0
        %682 = vmatprep.subr.mxu0 0.0
        %683 = vmatpush1.msra.mxu0 0.0
        %684 = vmatprep.subr.mxu0 0.0
        %685 = vmatpush1.msra.mxu0 0.0
        %686 = vmatprep.subr.mxu0 0.0
        %687 = vmatpush1.msra.mxu0 0.0
        %688 = vmatprep.subr.mxu0 0.0
        %689 = vmatpush1.msra.mxu0 0.0
        %690 = vmatprep.subr.mxu0 0.0
        %691 = vmatpush1.msra.mxu0 0.0
        %692 = vmatprep.subr.mxu0 0.0
        %693 = vmatpush1.msra.mxu0 0.0
        %694 = vmatprep.subr.mxu0 0.0
        %695 = vmatpush1.msra.mxu0 0.0
        %696 = vmatprep.subr.mxu0 0.0
        %697 = vmatpush1.msra.mxu0 0.0
        %698 = vmatprep.mubr.f32.mxu0 0.0
        %699 = vmatmul.mubr.f32.gmra.mrb[0].mxu0 %v299
        %v700 = vpop.f32.mrb[0].mxu0
        %v701 = vadd.f32 %v536, %v700
        %v702 = vpop.f32.mrb[0].mxu0
        %703 = vmatprep.mubr.f32.mxu0 0.0
        %704 = vmatmul.mubr.f32.gmra.mrb[0].mxu0 %v300
        %v705 = vpop.f32.mrb[0].mxu0
        %v706 = vadd.f32 %v541, %v705
        %v707 = vpop.f32.mrb[0].mxu0
        %708 = vmatprep.mubr.f32.mxu0 0.0
        %709 = vmatmul.mubr.f32.gmra.mrb[0].mxu0 %v302
        %v710 = vpop.f32.mrb[0].mxu0
        %v711 = vadd.f32 %v546, %v710
        %v712 = vpop.f32.mrb[0].mxu0
        %713 = vmatprep.mubr.f32.mxu0 0.0
        %714 = vmatmul.mubr.f32.gmra.mrb[0].mxu0 %v303
        %v715 = vpop.f32.mrb[0].mxu0
        %v716 = vadd.f32 %v551, %v715
        %v717 = vpop.f32.mrb[0].mxu0
        %718 = vmatprep.mubr.f32.mxu0 0.0
        %719 = vmatmul.mubr.f32.gmra.mrb[0].mxu0 %v305
        %v720 = vpop.f32.mrb[0].mxu0
        %v721 = vadd.f32 %v556, %v720
        %v722 = vpop.f32.mrb[0].mxu0
        %723 = vmatprep.mubr.f32.mxu0 0.0
        %724 = vmatmul.mubr.f32.gmra.mrb[0].mxu0 %v306
        %v725 = vpop.f32.mrb[0].mxu0
        %v726 = vadd.f32 %v561, %v725
        %v727 = vpop.f32.mrb[0].mxu0
        %728 = vmatprep.mubr.f32.mxu0 0.0
        %729 = vmatmul.mubr.f32.gmra.mrb[0].mxu0 %v308
        %v730 = vpop.f32.mrb[0].mxu0
        %v731 = vadd.f32 %v566, %v730
        %v732 = vpop.f32.mrb[0].mxu0
        %733 = vmatprep.mubr.f32.mxu0 0.0
        %734 = vmatmul.mubr.f32.gmra.mrb[0].mxu0 %v309
        %v735 = vpop.f32.mrb[0].mxu0
        %v736 = vadd.f32 %v571, %v735
        %v737 = vpop.f32.mrb[0].mxu0
        %738 = vmatprep.mubr.f32.mxu0 0.0
        %739 = vmatmul.mubr.f32.gmra.mrb[0].mxu0 %v311
        %v740 = vpop.f32.mrb[0].mxu0
        %v741 = vadd.f32 %v576, %v740
        %v742 = vpop.f32.mrb[0].mxu0
        %743 = vmatprep.mubr.f32.mxu0 0.0
        %744 = vmatmul.mubr.f32.gmra.mrb[0].mxu0 %v312
        %v745 = vpop.f32.mrb[0].mxu0
        %v746 = vadd.f32 %v581, %v745
        %v747 = vpop.f32.mrb[0].mxu0
        %748 = vmatprep.mubr.f32.mxu0 0.0
        %749 = vmatmul.mubr.f32.gmra.mrb[0].mxu0 %v314
        %v750 = vpop.f32.mrb[0].mxu0
        %v751 = vadd.f32 %v586, %v750
        %v752 = vpop.f32.mrb[0].mxu0
        %753 = vmatprep.mubr.f32.mxu0 0.0
        %754 = vmatmul.mubr.f32.gmra.mrb[0].mxu0 %v315
        %v755 = vpop.f32.mrb[0].mxu0
        %v756 = vadd.f32 %v591, %v755
        %v757 = vpop.f32.mrb[0].mxu0
        %758 = vmatprep.mubr.f32.mxu0 0.0
        %759 = vmatmul.mubr.f32.gmra.mrb[0].mxu0 %v317
        %v760 = vpop.f32.mrb[0].mxu0
        %v761 = vadd.f32 %v596, %v760
        %v762 = vpop.f32.mrb[0].mxu0
        %763 = vmatprep.mubr.f32.mxu0 0.0
        %764 = vmatmul.mubr.f32.gmra.mrb[0].mxu0 %v318
        %v765 = vpop.f32.mrb[0].mxu0
        %v766 = vadd.f32 %v601, %v765
        %v767 = vpop.f32.mrb[0].mxu0
        %768 = vmatprep.mubr.f32.mxu0 0.0
        %769 = vmatmul.mubr.f32.gmra.mrb[0].mxu0 %v320
        %v770 = vpop.f32.mrb[0].mxu0
        %v771 = vadd.f32 %v606, %v770
        %v772 = vpop.f32.mrb[0].mxu0
        %773 = vmatprep.mubr.f32.mxu0 0.0
        %774 = vmatmul.mubr.f32.gmra.mrb[0].mxu0 %v321
        %v775 = vpop.f32.mrb[0].mxu0
        %v776 = vadd.f32 %v611, %v775
        %v777 = vpop.f32.mrb[0].mxu0
        %778 = vmatprep.mubr.f32.mxu0 0.0
        %779 = vmatmul.mubr.f32.gmra.mrb[0].mxu0 %v323
        %v780 = vpop.f32.mrb[0].mxu0
        %v781 = vadd.f32 %v616, %v780
        %v782 = vpop.f32.mrb[0].mxu0
        %783 = vmatprep.mubr.f32.mxu0 0.0
        %784 = vmatmul.mubr.f32.gmra.mrb[0].mxu0 %v324
        %v785 = vpop.f32.mrb[0].mxu0
        %v786 = vadd.f32 %v621, %v785
        %v787 = vpop.f32.mrb[0].mxu0
        %788 = vmatprep.mubr.f32.mxu0 0.0
        %789 = vmatmul.mubr.f32.gmra.mrb[0].mxu0 %v326
        %v790 = vpop.f32.mrb[0].mxu0
        %v791 = vadd.f32 %v626, %v790
        %v792 = vpop.f32.mrb[0].mxu0
        %793 = vmatprep.mubr.f32.mxu0 0.0
        %794 = vmatmul.mubr.f32.gmra.mrb[0].mxu0 %v327
        %v795 = vpop.f32.mrb[0].mxu0
        %v796 = vadd.f32 %v631, %v795
        %v797 = vpop.f32.mrb[0].mxu0
        %798 = vdwg.mxu0
        %vm799 = vcmask 1045504
        %v800 = vrot.slane %v299, 2
        %v801 = vrot.slane %v300, 2
        %v802 = vsel %vm799, %v800, %v801
        %v803 = vrot.slane %v301, 2
        %v804 = vsel %vm799, %v801, %v803
        %v805 = vrot.slane %v302, 2
        %v806 = vrot.slane %v303, 2
        %v807 = vsel %vm799, %v805, %v806
        %v808 = vrot.slane %v304, 2
        %v809 = vsel %vm799, %v806, %v808
        %v810 = vrot.slane %v305, 2
        %v811 = vrot.slane %v306, 2
        %v812 = vsel %vm799, %v810, %v811
        %v813 = vrot.slane %v307, 2
        %v814 = vsel %vm799, %v811, %v813
        %v815 = vrot.slane %v308, 2
        %v816 = vrot.slane %v309, 2
        %v817 = vsel %vm799, %v815, %v816
        %v818 = vrot.slane %v310, 2
        %v819 = vsel %vm799, %v816, %v818
        %v820 = vrot.slane %v311, 2
        %v821 = vrot.slane %v312, 2
        %v822 = vsel %vm799, %v820, %v821
        %v823 = vrot.slane %v313, 2
        %v824 = vsel %vm799, %v821, %v823
        %v825 = vrot.slane %v314, 2
        %v826 = vrot.slane %v315, 2
        %v827 = vsel %vm799, %v825, %v826
        %v828 = vrot.slane %v316, 2
        %v829 = vsel %vm799, %v826, %v828
        %v830 = vrot.slane %v317, 2
        %v831 = vrot.slane %v318, 2
        %v832 = vsel %vm799, %v830, %v831
        %v833 = vrot.slane %v319, 2
        %v834 = vsel %vm799, %v831, %v833
        %v835 = vrot.slane %v320, 2
        %v836 = vrot.slane %v321, 2
        %v837 = vsel %vm799, %v835, %v836
        %v838 = vrot.slane %v322, 2
        %v839 = vsel %vm799, %v836, %v838
        %v840 = vrot.slane %v323, 2
        %v841 = vrot.slane %v324, 2
        %v842 = vsel %vm799, %v840, %v841
        %v843 = vrot.slane %v325, 2
        %v844 = vsel %vm799, %v841, %v843
        %v845 = vrot.slane %v326, 2
        %v846 = vrot.slane %v327, 2
        %v847 = vsel %vm799, %v845, %v846
        %v848 = vrot.slane %v328, 2
        %v849 = vsel %vm799, %v846, %v848
        %s870 = scalar_lea.vmem [#allocation5], 256
        %v871 = vld [vmem:[%s870] sm:$0xff]
        %v872 = vld [vmem:[%s870 + $0x8] sm:$0xff]
        %v873 = vld [vmem:[%s870 + $0x10] sm:$0xff]
        %v874 = vld [vmem:[%s870 + $0x18] sm:$0xff]
        %v875 = vld [vmem:[%s870 + $0x20] sm:$0xff]
        %v876 = vld [vmem:[%s870 + $0x28] sm:$0xff]
        %v877 = vld [vmem:[%s870 + $0x30] sm:$0xff]
        %v878 = vld [vmem:[%s870 + $0x38] sm:$0xff]
        %v879 = vld [vmem:[%s870 + $0x40] sm:$0xff]
        %v880 = vld [vmem:[%s870 + $0x48] sm:$0xff]
        %v881 = vld [vmem:[%s870 + $0x50] sm:$0xff]
        %v882 = vld [vmem:[%s870 + $0x58] sm:$0xff]
        %v883 = vld [vmem:[%s870 + $0x60] sm:$0xff]
        %v884 = vld [vmem:[%s870 + $0x68] sm:$0xff]
        %v885 = vld [vmem:[%s870 + $0x70] sm:$0xff]
        %v886 = vld [vmem:[%s870 + $0x78] sm:$0xff]
        %887 = vmatprep.subr.mxu0 0.0
        %888 = vmatpush1.msra.mxu0 %v871
        %889 = vmatprep.subr.mxu0 0.0
        %890 = vmatpush1.msra.mxu0 %v872
        %891 = vmatprep.subr.mxu0 0.0
        %892 = vmatpush1.msra.mxu0 %v873
        %893 = vmatprep.subr.mxu0 0.0
        %894 = vmatpush1.msra.mxu0 %v874
        %895 = vmatprep.subr.mxu0 0.0
        %896 = vmatpush1.msra.mxu0 %v875
        %897 = vmatprep.subr.mxu0 0.0
        %898 = vmatpush1.msra.mxu0 %v876
        %899 = vmatprep.subr.mxu0 0.0
        %900 = vmatpush1.msra.mxu0 %v877
        %901 = vmatprep.subr.mxu0 0.0
        %902 = vmatpush1.msra.mxu0 %v878
        %903 = vmatprep.subr.mxu0 0.0
        %904 = vmatpush1.msra.mxu0 %v879
        %905 = vmatprep.subr.mxu0 0.0
        %906 = vmatpush1.msra.mxu0 %v880
        %907 = vmatprep.subr.mxu0 0.0
        %908 = vmatpush1.msra.mxu0 %v881
        %909 = vmatprep.subr.mxu0 0.0
        %910 = vmatpush1.msra.mxu0 %v882
        %911 = vmatprep.subr.mxu0 0.0
        %912 = vmatpush1.msra.mxu0 %v883
        %913 = vmatprep.subr.mxu0 0.0
        %914 = vmatpush1.msra.mxu0 %v884
        %915 = vmatprep.subr.mxu0 0.0
        %916 = vmatpush1.msra.mxu0 %v885
        %917 = vmatprep.subr.mxu0 0.0
        %918 = vmatpush1.msra.mxu0 %v886
        %919 = vmatprep.subr.mxu0 0.0
        %920 = vmatpush1.msra.mxu0 0.0
        %921 = vmatprep.subr.mxu0 0.0
        %922 = vmatpush1.msra.mxu0 0.0
        %923 = vmatprep.subr.mxu0 0.0
        %924 = vmatpush1.msra.mxu0 0.0
        %925 = vmatprep.subr.mxu0 0.0
        %926 = vmatpush1.msra.mxu0 0.0
        %927 = vmatprep.subr.mxu0 0.0
        %928 = vmatpush1.msra.mxu0 0.0
        %929 = vmatprep.subr.mxu0 0.0
        %930 = vmatpush1.msra.mxu0 0.0
        %931 = vmatprep.subr.mxu0 0.0
        %932 = vmatpush1.msra.mxu0 0.0
        %933 = vmatprep.subr.mxu0 0.0
        %934 = vmatpush1.msra.mxu0 0.0
        %935 = vmatprep.subr.mxu0 0.0
        %936 = vmatpush1.msra.mxu0 0.0
        %937 = vmatprep.subr.mxu0 0.0
        %938 = vmatpush1.msra.mxu0 0.0
        %939 = vmatprep.subr.mxu0 0.0
        %940 = vmatpush1.msra.mxu0 0.0
        %941 = vmatprep.subr.mxu0 0.0
        %942 = vmatpush1.msra.mxu0 0.0
        %943 = vmatprep.subr.mxu0 0.0
        %944 = vmatpush1.msra.mxu0 0.0
        %945 = vmatprep.subr.mxu0 0.0
        %946 = vmatpush1.msra.mxu0 0.0
        %947 = vmatprep.subr.mxu0 0.0
        %948 = vmatpush1.msra.mxu0 0.0
        %949 = vmatprep.subr.mxu0 0.0
        %950 = vmatpush1.msra.mxu0 0.0
        %951 = vmatprep.mubr.f32.mxu0 0.0
        %952 = vmatmul.mubr.f32.gmra.mrb[0].mxu0 %v802
        %v953 = vpop.f32.mrb[0].mxu0
        %v954 = vadd.f32 0.0, %v953
        %v955 = vpop.f32.mrb[0].mxu0
        %956 = vmatprep.mubr.f32.mxu0 0.0
        %957 = vmatmul.mubr.f32.gmra.mrb[0].mxu0 %v804
        %v958 = vpop.f32.mrb[0].mxu0
        %v959 = vadd.f32 0.0, %v958
        %v960 = vpop.f32.mrb[0].mxu0
        %961 = vmatprep.mubr.f32.mxu0 0.0
        %962 = vmatmul.mubr.f32.gmra.mrb[0].mxu0 %v807
        %v963 = vpop.f32.mrb[0].mxu0
        %v964 = vadd.f32 0.0, %v963
        %v965 = vpop.f32.mrb[0].mxu0
        %966 = vmatprep.mubr.f32.mxu0 0.0
        %967 = vmatmul.mubr.f32.gmra.mrb[0].mxu0 %v809
        %v968 = vpop.f32.mrb[0].mxu0
        %v969 = vadd.f32 0.0, %v968
        %v970 = vpop.f32.mrb[0].mxu0
        %971 = vmatprep.mubr.f32.mxu0 0.0
        %972 = vmatmul.mubr.f32.gmra.mrb[0].mxu0 %v812
        %v973 = vpop.f32.mrb[0].mxu0
        %v974 = vadd.f32 0.0, %v973
        %v975 = vpop.f32.mrb[0].mxu0
        %976 = vmatprep.mubr.f32.mxu0 0.0
        %977 = vmatmul.mubr.f32.gmra.mrb[0].mxu0 %v814
        %v978 = vpop.f32.mrb[0].mxu0
        %v979 = vadd.f32 0.0, %v978
        %v980 = vpop.f32.mrb[0].mxu0
        %981 = vmatprep.mubr.f32.mxu0 0.0
        %982 = vmatmul.mubr.f32.gmra.mrb[0].mxu0 %v817
        %v983 = vpop.f32.mrb[0].mxu0
        %v984 = vadd.f32 0.0, %v983
        %v985 = vpop.f32.mrb[0].mxu0
        %986 = vmatprep.mubr.f32.mxu0 0.0
        %987 = vmatmul.mubr.f32.gmra.mrb[0].mxu0 %v819
        %v988 = vpop.f32.mrb[0].mxu0
        %v989 = vadd.f32 0.0, %v988
        %v990 = vpop.f32.mrb[0].mxu0
        %991 = vmatprep.mubr.f32.mxu0 0.0
        %992 = vmatmul.mubr.f32.gmra.mrb[0].mxu0 %v822
        %v993 = vpop.f32.mrb[0].mxu0
        %v994 = vadd.f32 0.0, %v993
        %v995 = vpop.f32.mrb[0].mxu0
        %996 = vmatprep.mubr.f32.mxu0 0.0
        %997 = vmatmul.mubr.f32.gmra.mrb[0].mxu0 %v824
        %v998 = vpop.f32.mrb[0].mxu0
        %v999 = vadd.f32 0.0, %v998
        %v1000 = vpop.f32.mrb[0].mxu0
        %1001 = vmatprep.mubr.f32.mxu0 0.0
        %1002 = vmatmul.mubr.f32.gmra.mrb[0].mxu0 %v827
        %v1003 = vpop.f32.mrb[0].mxu0
        %v1004 = vadd.f32 0.0, %v1003
        %v1005 = vpop.f32.mrb[0].mxu0
        %1006 = vmatprep.mubr.f32.mxu0 0.0
        %1007 = vmatmul.mubr.f32.gmra.mrb[0].mxu0 %v829
        %v1008 = vpop.f32.mrb[0].mxu0
        %v1009 = vadd.f32 0.0, %v1008
        %v1010 = vpop.f32.mrb[0].mxu0
        %1011 = vmatprep.mubr.f32.mxu0 0.0
        %1012 = vmatmul.mubr.f32.gmra.mrb[0].mxu0 %v832
        %v1013 = vpop.f32.mrb[0].mxu0
        %v1014 = vadd.f32 0.0, %v1013
        %v1015 = vpop.f32.mrb[0].mxu0
        %1016 = vmatprep.mubr.f32.mxu0 0.0
        %1017 = vmatmul.mubr.f32.gmra.mrb[0].mxu0 %v834
        %v1018 = vpop.f32.mrb[0].mxu0
        %v1019 = vadd.f32 0.0, %v1018
        %v1020 = vpop.f32.mrb[0].mxu0
        %1021 = vmatprep.mubr.f32.mxu0 0.0
        %1022 = vmatmul.mubr.f32.gmra.mrb[0].mxu0 %v837
        %v1023 = vpop.f32.mrb[0].mxu0
        %v1024 = vadd.f32 0.0, %v1023
        %v1025 = vpop.f32.mrb[0].mxu0
        %1026 = vmatprep.mubr.f32.mxu0 0.0
        %1027 = vmatmul.mubr.f32.gmra.mrb[0].mxu0 %v839
        %v1028 = vpop.f32.mrb[0].mxu0
        %v1029 = vadd.f32 0.0, %v1028
        %v1030 = vpop.f32.mrb[0].mxu0
        %1031 = vmatprep.mubr.f32.mxu0 0.0
        %1032 = vmatmul.mubr.f32.gmra.mrb[0].mxu0 %v842
        %v1033 = vpop.f32.mrb[0].mxu0
        %v1034 = vadd.f32 0.0, %v1033
        %v1035 = vpop.f32.mrb[0].mxu0
        %1036 = vmatprep.mubr.f32.mxu0 0.0
        %1037 = vmatmul.mubr.f32.gmra.mrb[0].mxu0 %v844
        %v1038 = vpop.f32.mrb[0].mxu0
        %v1039 = vadd.f32 0.0, %v1038
        %v1040 = vpop.f32.mrb[0].mxu0
        %1041 = vmatprep.mubr.f32.mxu0 0.0
        %1042 = vmatmul.mubr.f32.gmra.mrb[0].mxu0 %v847
        %v1043 = vpop.f32.mrb[0].mxu0
        %v1044 = vadd.f32 0.0, %v1043
        %v1045 = vpop.f32.mrb[0].mxu0
        %1046 = vmatprep.mubr.f32.mxu0 0.0
        %1047 = vmatmul.mubr.f32.gmra.mrb[0].mxu0 %v849
        %v1048 = vpop.f32.mrb[0].mxu0
        %v1049 = vadd.f32 0.0, %v1048
        %v1050 = vpop.f32.mrb[0].mxu0
        %1051 = vdwg.mxu0
        %v1052 = vadd.f32 %v701, %v954
        %v1053 = vadd.f32 %v706, %v959
        %v1054 = vadd.f32 %v711, %v964
        %v1055 = vadd.f32 %v716, %v969
        %v1056 = vadd.f32 %v721, %v974
        %v1057 = vadd.f32 %v726, %v979
        %v1058 = vadd.f32 %v731, %v984
        %v1059 = vadd.f32 %v736, %v989
        %v1060 = vadd.f32 %v741, %v994
        %v1061 = vadd.f32 %v746, %v999
        %v1062 = vadd.f32 %v751, %v1004
        %v1063 = vadd.f32 %v756, %v1009
        %v1064 = vadd.f32 %v761, %v1014
        %v1065 = vadd.f32 %v766, %v1019
        %v1066 = vadd.f32 %v771, %v1024
        %v1067 = vadd.f32 %v776, %v1029
        %v1068 = vadd.f32 %v781, %v1034
        %v1069 = vadd.f32 %v786, %v1039
        %v1070 = vadd.f32 %v791, %v1044
        %v1071 = vadd.f32 %v796, %v1049
        %s1072 = scalar_lea.vmem [#allocation5], 384
        %v1073 = vld [vmem:[%s1072] sm:$0xff]
        %v1074 = vld [vmem:[%s1072 + $0x8] sm:$0xff]
        %v1075 = vld [vmem:[%s1072 + $0x10] sm:$0xff]
        %v1076 = vld [vmem:[%s1072 + $0x18] sm:$0xff]
        %v1077 = vld [vmem:[%s1072 + $0x20] sm:$0xff]
        %v1078 = vld [vmem:[%s1072 + $0x28] sm:$0xff]
        %v1079 = vld [vmem:[%s1072 + $0x30] sm:$0xff]
        %v1080 = vld [vmem:[%s1072 + $0x38] sm:$0xff]
        %v1081 = vld [vmem:[%s1072 + $0x40] sm:$0xff]
        %v1082 = vld [vmem:[%s1072 + $0x48] sm:$0xff]
        %v1083 = vld [vmem:[%s1072 + $0x50] sm:$0xff]
        %v1084 = vld [vmem:[%s1072 + $0x58] sm:$0xff]
        %v1085 = vld [vmem:[%s1072 + $0x60] sm:$0xff]
        %v1086 = vld [vmem:[%s1072 + $0x68] sm:$0xff]
        %v1087 = vld [vmem:[%s1072 + $0x70] sm:$0xff]
        %v1088 = vld [vmem:[%s1072 + $0x78] sm:$0xff]
        %1089 = vmatprep.subr.mxu0 0.0
        %1090 = vmatpush1.msra.mxu0 %v1073
        %1091 = vmatprep.subr.mxu0 0.0
        %1092 = vmatpush1.msra.mxu0 %v1074
        %1093 = vmatprep.subr.mxu0 0.0
        %1094 = vmatpush1.msra.mxu0 %v1075
        %1095 = vmatprep.subr.mxu0 0.0
        %1096 = vmatpush1.msra.mxu0 %v1076
        %1097 = vmatprep.subr.mxu0 0.0
        %1098 = vmatpush1.msra.mxu0 %v1077
        %1099 = vmatprep.subr.mxu0 0.0
        %1100 = vmatpush1.msra.mxu0 %v1078
        %1101 = vmatprep.subr.mxu0 0.0
        %1102 = vmatpush1.msra.mxu0 %v1079
        %1103 = vmatprep.subr.mxu0 0.0
        %1104 = vmatpush1.msra.mxu0 %v1080
        %1105 = vmatprep.subr.mxu0 0.0
        %1106 = vmatpush1.msra.mxu0 %v1081
        %1107 = vmatprep.subr.mxu0 0.0
        %1108 = vmatpush1.msra.mxu0 %v1082
        %1109 = vmatprep.subr.mxu0 0.0
        %1110 = vmatpush1.msra.mxu0 %v1083
        %1111 = vmatprep.subr.mxu0 0.0
        %1112 = vmatpush1.msra.mxu0 %v1084
        %1113 = vmatprep.subr.mxu0 0.0
        %1114 = vmatpush1.msra.mxu0 %v1085
        %1115 = vmatprep.subr.mxu0 0.0
        %1116 = vmatpush1.msra.mxu0 %v1086
        %1117 = vmatprep.subr.mxu0 0.0
        %1118 = vmatpush1.msra.mxu0 %v1087
        %1119 = vmatprep.subr.mxu0 0.0
        %1120 = vmatpush1.msra.mxu0 %v1088
        %1121 = vmatprep.subr.mxu0 0.0
        %1122 = vmatpush1.msra.mxu0 0.0
        %1123 = vmatprep.subr.mxu0 0.0
        %1124 = vmatpush1.msra.mxu0 0.0
        %1125 = vmatprep.subr.mxu0 0.0
        %1126 = vmatpush1.msra.mxu0 0.0
        %1127 = vmatprep.subr.mxu0 0.0
        %1128 = vmatpush1.msra.mxu0 0.0
        %1129 = vmatprep.subr.mxu0 0.0
        %1130 = vmatpush1.msra.mxu0 0.0
        %1131 = vmatprep.subr.mxu0 0.0
        %1132 = vmatpush1.msra.mxu0 0.0
        %1133 = vmatprep.subr.mxu0 0.0
        %1134 = vmatpush1.msra.mxu0 0.0
        %1135 = vmatprep.subr.mxu0 0.0
        %1136 = vmatpush1.msra.mxu0 0.0
        %1137 = vmatprep.subr.mxu0 0.0
        %1138 = vmatpush1.msra.mxu0 0.0
        %1139 = vmatprep.subr.mxu0 0.0
        %1140 = vmatpush1.msra.mxu0 0.0
        %1141 = vmatprep.subr.mxu0 0.0
        %1142 = vmatpush1.msra.mxu0 0.0
        %1143 = vmatprep.subr.mxu0 0.0
        %1144 = vmatpush1.msra.mxu0 0.0
        %1145 = vmatprep.subr.mxu0 0.0
        %1146 = vmatpush1.msra.mxu0 0.0
        %1147 = vmatprep.subr.mxu0 0.0
        %1148 = vmatpush1.msra.mxu0 0.0
        %1149 = vmatprep.subr.mxu0 0.0
        %1150 = vmatpush1.msra.mxu0 0.0
        %1151 = vmatprep.subr.mxu0 0.0
        %1152 = vmatpush1.msra.mxu0 0.0
        %1153 = vmatprep.mubr.f32.mxu0 0.0
        %1154 = vmatmul.mubr.f32.gmra.mrb[0].mxu0 %v302
        %v1155 = vpop.f32.mrb[0].mxu0
        %v1156 = vadd.f32 0.0, %v1155
        %v1157 = vpop.f32.mrb[0].mxu0
        %1158 = vmatprep.mubr.f32.mxu0 0.0
        %1159 = vmatmul.mubr.f32.gmra.mrb[0].mxu0 %v303
        %v1160 = vpop.f32.mrb[0].mxu0
        %v1161 = vadd.f32 0.0, %v1160
        %v1162 = vpop.f32.mrb[0].mxu0
        %1163 = vmatprep.mubr.f32.mxu0 0.0
        %1164 = vmatmul.mubr.f32.gmra.mrb[0].mxu0 %v305
        %v1165 = vpop.f32.mrb[0].mxu0
        %v1166 = vadd.f32 0.0, %v1165
        %v1167 = vpop.f32.mrb[0].mxu0
        %1168 = vmatprep.mubr.f32.mxu0 0.0
        %1169 = vmatmul.mubr.f32.gmra.mrb[0].mxu0 %v306
        %v1170 = vpop.f32.mrb[0].mxu0
        %v1171 = vadd.f32 0.0, %v1170
        %v1172 = vpop.f32.mrb[0].mxu0
        %1173 = vmatprep.mubr.f32.mxu0 0.0
        %1174 = vmatmul.mubr.f32.gmra.mrb[0].mxu0 %v308
        %v1175 = vpop.f32.mrb[0].mxu0
        %v1176 = vadd.f32 0.0, %v1175
        %v1177 = vpop.f32.mrb[0].mxu0
        %1178 = vmatprep.mubr.f32.mxu0 0.0
        %1179 = vmatmul.mubr.f32.gmra.mrb[0].mxu0 %v309
        %v1180 = vpop.f32.mrb[0].mxu0
        %v1181 = vadd.f32 0.0, %v1180
        %v1182 = vpop.f32.mrb[0].mxu0
        %1183 = vmatprep.mubr.f32.mxu0 0.0
        %1184 = vmatmul.mubr.f32.gmra.mrb[0].mxu0 %v311
        %v1185 = vpop.f32.mrb[0].mxu0
        %v1186 = vadd.f32 0.0, %v1185
        %v1187 = vpop.f32.mrb[0].mxu0
        %1188 = vmatprep.mubr.f32.mxu0 0.0
        %1189 = vmatmul.mubr.f32.gmra.mrb[0].mxu0 %v312
        %v1190 = vpop.f32.mrb[0].mxu0
        %v1191 = vadd.f32 0.0, %v1190
        %v1192 = vpop.f32.mrb[0].mxu0
        %1193 = vmatprep.mubr.f32.mxu0 0.0
        %1194 = vmatmul.mubr.f32.gmra.mrb[0].mxu0 %v314
        %v1195 = vpop.f32.mrb[0].mxu0
        %v1196 = vadd.f32 0.0, %v1195
        %v1197 = vpop.f32.mrb[0].mxu0
        %1198 = vmatprep.mubr.f32.mxu0 0.0
        %1199 = vmatmul.mubr.f32.gmra.mrb[0].mxu0 %v315
        %v1200 = vpop.f32.mrb[0].mxu0
        %v1201 = vadd.f32 0.0, %v1200
        %v1202 = vpop.f32.mrb[0].mxu0
        %1203 = vmatprep.mubr.f32.mxu0 0.0
        %1204 = vmatmul.mubr.f32.gmra.mrb[0].mxu0 %v317
        %v1205 = vpop.f32.mrb[0].mxu0
        %v1206 = vadd.f32 0.0, %v1205
        %v1207 = vpop.f32.mrb[0].mxu0
        %1208 = vmatprep.mubr.f32.mxu0 0.0
        %1209 = vmatmul.mubr.f32.gmra.mrb[0].mxu0 %v318
        %v1210 = vpop.f32.mrb[0].mxu0
        %v1211 = vadd.f32 0.0, %v1210
        %v1212 = vpop.f32.mrb[0].mxu0
        %1213 = vmatprep.mubr.f32.mxu0 0.0
        %1214 = vmatmul.mubr.f32.gmra.mrb[0].mxu0 %v320
        %v1215 = vpop.f32.mrb[0].mxu0
        %v1216 = vadd.f32 0.0, %v1215
        %v1217 = vpop.f32.mrb[0].mxu0
        %1218 = vmatprep.mubr.f32.mxu0 0.0
        %1219 = vmatmul.mubr.f32.gmra.mrb[0].mxu0 %v321
        %v1220 = vpop.f32.mrb[0].mxu0
        %v1221 = vadd.f32 0.0, %v1220
        %v1222 = vpop.f32.mrb[0].mxu0
        %1223 = vmatprep.mubr.f32.mxu0 0.0
        %1224 = vmatmul.mubr.f32.gmra.mrb[0].mxu0 %v323
        %v1225 = vpop.f32.mrb[0].mxu0
        %v1226 = vadd.f32 0.0, %v1225
        %v1227 = vpop.f32.mrb[0].mxu0
        %1228 = vmatprep.mubr.f32.mxu0 0.0
        %1229 = vmatmul.mubr.f32.gmra.mrb[0].mxu0 %v324
        %v1230 = vpop.f32.mrb[0].mxu0
        %v1231 = vadd.f32 0.0, %v1230
        %v1232 = vpop.f32.mrb[0].mxu0
        %1233 = vmatprep.mubr.f32.mxu0 0.0
        %1234 = vmatmul.mubr.f32.gmra.mrb[0].mxu0 %v326
        %v1235 = vpop.f32.mrb[0].mxu0
        %v1236 = vadd.f32 0.0, %v1235
        %v1237 = vpop.f32.mrb[0].mxu0
        %1238 = vmatprep.mubr.f32.mxu0 0.0
        %1239 = vmatmul.mubr.f32.gmra.mrb[0].mxu0 %v327
        %v1240 = vpop.f32.mrb[0].mxu0
        %v1241 = vadd.f32 0.0, %v1240
        %v1242 = vpop.f32.mrb[0].mxu0
        %1243 = vmatprep.mubr.f32.mxu0 0.0
        %1244 = vmatmul.mubr.f32.gmra.mrb[0].mxu0 %v329
        %v1245 = vpop.f32.mrb[0].mxu0
        %v1246 = vadd.f32 0.0, %v1245
        %v1247 = vpop.f32.mrb[0].mxu0
        %1248 = vmatprep.mubr.f32.mxu0 0.0
        %1249 = vmatmul.mubr.f32.gmra.mrb[0].mxu0 %v330
        %v1250 = vpop.f32.mrb[0].mxu0
        %v1251 = vadd.f32 0.0, %v1250
        %v1252 = vpop.f32.mrb[0].mxu0
        %1253 = vdwg.mxu0
        %v1254 = vadd.f32 %v1052, %v1156
        %v1255 = vadd.f32 %v1053, %v1161
        %v1256 = vadd.f32 %v1054, %v1166
        %v1257 = vadd.f32 %v1055, %v1171
        %v1258 = vadd.f32 %v1056, %v1176
        %v1259 = vadd.f32 %v1057, %v1181
        %v1260 = vadd.f32 %v1058, %v1186
        %v1261 = vadd.f32 %v1059, %v1191
        %v1262 = vadd.f32 %v1060, %v1196
        %v1263 = vadd.f32 %v1061, %v1201
        %v1264 = vadd.f32 %v1062, %v1206
        %v1265 = vadd.f32 %v1063, %v1211
        %v1266 = vadd.f32 %v1064, %v1216
        %v1267 = vadd.f32 %v1065, %v1221
        %v1268 = vadd.f32 %v1066, %v1226
        %v1269 = vadd.f32 %v1067, %v1231
        %v1270 = vadd.f32 %v1068, %v1236
        %v1271 = vadd.f32 %v1069, %v1241
        %v1272 = vadd.f32 %v1070, %v1246
        %v1273 = vadd.f32 %v1071, %v1251
        %v1277 = vrot.slane %v329, 1
        %v1278 = vrot.slane %v330, 1
        %v1279 = vsel %vm381, %v1277, %v1278
        %v1280 = vrot.slane %v331, 1
        %v1281 = vsel %vm381, %v1278, %v1280
        %s1284 = scalar_lea.vmem [#allocation5], 512
        %v1285 = vld [vmem:[%s1284] sm:$0xff]
        %v1286 = vld [vmem:[%s1284 + $0x8] sm:$0xff]
        %v1287 = vld [vmem:[%s1284 + $0x10] sm:$0xff]
        %v1288 = vld [vmem:[%s1284 + $0x18] sm:$0xff]
        %v1289 = vld [vmem:[%s1284 + $0x20] sm:$0xff]
        %v1290 = vld [vmem:[%s1284 + $0x28] sm:$0xff]
        %v1291 = vld [vmem:[%s1284 + $0x30] sm:$0xff]
        %v1292 = vld [vmem:[%s1284 + $0x38] sm:$0xff]
        %v1293 = vld [vmem:[%s1284 + $0x40] sm:$0xff]
        %v1294 = vld [vmem:[%s1284 + $0x48] sm:$0xff]
        %v1295 = vld [vmem:[%s1284 + $0x50] sm:$0xff]
        %v1296 = vld [vmem:[%s1284 + $0x58] sm:$0xff]
        %v1297 = vld [vmem:[%s1284 + $0x60] sm:$0xff]
        %v1298 = vld [vmem:[%s1284 + $0x68] sm:$0xff]
        %v1299 = vld [vmem:[%s1284 + $0x70] sm:$0xff]
        %v1300 = vld [vmem:[%s1284 + $0x78] sm:$0xff]
        %1301 = vmatprep.subr.mxu0 0.0
        %1302 = vmatpush1.msra.mxu0 %v1285
        %1303 = vmatprep.subr.mxu0 0.0
        %1304 = vmatpush1.msra.mxu0 %v1286
        %1305 = vmatprep.subr.mxu0 0.0
        %1306 = vmatpush1.msra.mxu0 %v1287
        %1307 = vmatprep.subr.mxu0 0.0
        %1308 = vmatpush1.msra.mxu0 %v1288
        %1309 = vmatprep.subr.mxu0 0.0
        %1310 = vmatpush1.msra.mxu0 %v1289
        %1311 = vmatprep.subr.mxu0 0.0
        %1312 = vmatpush1.msra.mxu0 %v1290
        %1313 = vmatprep.subr.mxu0 0.0
        %1314 = vmatpush1.msra.mxu0 %v1291
        %1315 = vmatprep.subr.mxu0 0.0
        %1316 = vmatpush1.msra.mxu0 %v1292
        %1317 = vmatprep.subr.mxu0 0.0
        %1318 = vmatpush1.msra.mxu0 %v1293
        %1319 = vmatprep.subr.mxu0 0.0
        %1320 = vmatpush1.msra.mxu0 %v1294
        %1321 = vmatprep.subr.mxu0 0.0
        %1322 = vmatpush1.msra.mxu0 %v1295
        %1323 = vmatprep.subr.mxu0 0.0
        %1324 = vmatpush1.msra.mxu0 %v1296
        %1325 = vmatprep.subr.mxu0 0.0
        %1326 = vmatpush1.msra.mxu0 %v1297
        %1327 = vmatprep.subr.mxu0 0.0
        %1328 = vmatpush1.msra.mxu0 %v1298
        %1329 = vmatprep.subr.mxu0 0.0
        %1330 = vmatpush1.msra.mxu0 %v1299
        %1331 = vmatprep.subr.mxu0 0.0
        %1332 = vmatpush1.msra.mxu0 %v1300
        %1333 = vmatprep.subr.mxu0 0.0
        %1334 = vmatpush1.msra.mxu0 0.0
        %1335 = vmatprep.subr.mxu0 0.0
        %1336 = vmatpush1.msra.mxu0 0.0
        %1337 = vmatprep.subr.mxu0 0.0
        %1338 = vmatpush1.msra.mxu0 0.0
        %1339 = vmatprep.subr.mxu0 0.0
        %1340 = vmatpush1.msra.mxu0 0.0
        %1341 = vmatprep.subr.mxu0 0.0
        %1342 = vmatpush1.msra.mxu0 0.0
        %1343 = vmatprep.subr.mxu0 0.0
        %1344 = vmatpush1.msra.mxu0 0.0
        %1345 = vmatprep.subr.mxu0 0.0
        %1346 = vmatpush1.msra.mxu0 0.0
        %1347 = vmatprep.subr.mxu0 0.0
        %1348 = vmatpush1.msra.mxu0 0.0
        %1349 = vmatprep.subr.mxu0 0.0
        %1350 = vmatpush1.msra.mxu0 0.0
        %1351 = vmatprep.subr.mxu0 0.0
        %1352 = vmatpush1.msra.mxu0 0.0
        %1353 = vmatprep.subr.mxu0 0.0
        %1354 = vmatpush1.msra.mxu0 0.0
        %1355 = vmatprep.subr.mxu0 0.0
        %1356 = vmatpush1.msra.mxu0 0.0
        %1357 = vmatprep.subr.mxu0 0.0
        %1358 = vmatpush1.msra.mxu0 0.0
        %1359 = vmatprep.subr.mxu0 0.0
        %1360 = vmatpush1.msra.mxu0 0.0
        %1361 = vmatprep.subr.mxu0 0.0
        %1362 = vmatpush1.msra.mxu0 0.0
        %1363 = vmatprep.subr.mxu0 0.0
        %1364 = vmatpush1.msra.mxu0 0.0
        %1365 = vmatprep.mubr.f32.mxu0 0.0
        %1366 = vmatmul.mubr.f32.gmra.mrb[0].mxu0 %v389
        %v1367 = vpop.f32.mrb[0].mxu0
        %v1368 = vadd.f32 0.0, %v1367
        %v1369 = vpop.f32.mrb[0].mxu0
        %1370 = vmatprep.mubr.f32.mxu0 0.0
        %1371 = vmatmul.mubr.f32.gmra.mrb[0].mxu0 %v391
        %v1372 = vpop.f32.mrb[0].mxu0
        %v1373 = vadd.f32 0.0, %v1372
        %v1374 = vpop.f32.mrb[0].mxu0
        %1375 = vmatprep.mubr.f32.mxu0 0.0
        %1376 = vmatmul.mubr.f32.gmra.mrb[0].mxu0 %v394
        %v1377 = vpop.f32.mrb[0].mxu0
        %v1378 = vadd.f32 0.0, %v1377
        %v1379 = vpop.f32.mrb[0].mxu0
        %1380 = vmatprep.mubr.f32.mxu0 0.0
        %1381 = vmatmul.mubr.f32.gmra.mrb[0].mxu0 %v396
        %v1382 = vpop.f32.mrb[0].mxu0
        %v1383 = vadd.f32 0.0, %v1382
        %v1384 = vpop.f32.mrb[0].mxu0
        %1385 = vmatprep.mubr.f32.mxu0 0.0
        %1386 = vmatmul.mubr.f32.gmra.mrb[0].mxu0 %v399
        %v1387 = vpop.f32.mrb[0].mxu0
        %v1388 = vadd.f32 0.0, %v1387
        %v1389 = vpop.f32.mrb[0].mxu0
        %1390 = vmatprep.mubr.f32.mxu0 0.0
        %1391 = vmatmul.mubr.f32.gmra.mrb[0].mxu0 %v401
        %v1392 = vpop.f32.mrb[0].mxu0
        %v1393 = vadd.f32 0.0, %v1392
        %v1394 = vpop.f32.mrb[0].mxu0
        %1395 = vmatprep.mubr.f32.mxu0 0.0
        %1396 = vmatmul.mubr.f32.gmra.mrb[0].mxu0 %v404
        %v1397 = vpop.f32.mrb[0].mxu0
        %v1398 = vadd.f32 0.0, %v1397
        %v1399 = vpop.f32.mrb[0].mxu0
        %1400 = vmatprep.mubr.f32.mxu0 0.0
        %1401 = vmatmul.mubr.f32.gmra.mrb[0].mxu0 %v406
        %v1402 = vpop.f32.mrb[0].mxu0
        %v1403 = vadd.f32 0.0, %v1402
        %v1404 = vpop.f32.mrb[0].mxu0
        %1405 = vmatprep.mubr.f32.mxu0 0.0
        %1406 = vmatmul.mubr.f32.gmra.mrb[0].mxu0 %v409
        %v1407 = vpop.f32.mrb[0].mxu0
        %v1408 = vadd.f32 0.0, %v1407
        %v1409 = vpop.f32.mrb[0].mxu0
        %1410 = vmatprep.mubr.f32.mxu0 0.0
        %1411 = vmatmul.mubr.f32.gmra.mrb[0].mxu0 %v411
        %v1412 = vpop.f32.mrb[0].mxu0
        %v1413 = vadd.f32 0.0, %v1412
        %v1414 = vpop.f32.mrb[0].mxu0
        %1415 = vmatprep.mubr.f32.mxu0 0.0
        %1416 = vmatmul.mubr.f32.gmra.mrb[0].mxu0 %v414
        %v1417 = vpop.f32.mrb[0].mxu0
        %v1418 = vadd.f32 0.0, %v1417
        %v1419 = vpop.f32.mrb[0].mxu0
        %1420 = vmatprep.mubr.f32.mxu0 0.0
        %1421 = vmatmul.mubr.f32.gmra.mrb[0].mxu0 %v416
        %v1422 = vpop.f32.mrb[0].mxu0
        %v1423 = vadd.f32 0.0, %v1422
        %v1424 = vpop.f32.mrb[0].mxu0
        %1425 = vmatprep.mubr.f32.mxu0 0.0
        %1426 = vmatmul.mubr.f32.gmra.mrb[0].mxu0 %v419
        %v1427 = vpop.f32.mrb[0].mxu0
        %v1428 = vadd.f32 0.0, %v1427
        %v1429 = vpop.f32.mrb[0].mxu0
        %1430 = vmatprep.mubr.f32.mxu0 0.0
        %1431 = vmatmul.mubr.f32.gmra.mrb[0].mxu0 %v421
        %v1432 = vpop.f32.mrb[0].mxu0
        %v1433 = vadd.f32 0.0, %v1432
        %v1434 = vpop.f32.mrb[0].mxu0
        %1435 = vmatprep.mubr.f32.mxu0 0.0
        %1436 = vmatmul.mubr.f32.gmra.mrb[0].mxu0 %v424
        %v1437 = vpop.f32.mrb[0].mxu0
        %v1438 = vadd.f32 0.0, %v1437
        %v1439 = vpop.f32.mrb[0].mxu0
        %1440 = vmatprep.mubr.f32.mxu0 0.0
        %1441 = vmatmul.mubr.f32.gmra.mrb[0].mxu0 %v426
        %v1442 = vpop.f32.mrb[0].mxu0
        %v1443 = vadd.f32 0.0, %v1442
        %v1444 = vpop.f32.mrb[0].mxu0
        %1445 = vmatprep.mubr.f32.mxu0 0.0
        %1446 = vmatmul.mubr.f32.gmra.mrb[0].mxu0 %v429
        %v1447 = vpop.f32.mrb[0].mxu0
        %v1448 = vadd.f32 0.0, %v1447
        %v1449 = vpop.f32.mrb[0].mxu0
        %1450 = vmatprep.mubr.f32.mxu0 0.0
        %1451 = vmatmul.mubr.f32.gmra.mrb[0].mxu0 %v431
        %v1452 = vpop.f32.mrb[0].mxu0
        %v1453 = vadd.f32 0.0, %v1452
        %v1454 = vpop.f32.mrb[0].mxu0
        %1455 = vmatprep.mubr.f32.mxu0 0.0
        %1456 = vmatmul.mubr.f32.gmra.mrb[0].mxu0 %v1279
        %v1457 = vpop.f32.mrb[0].mxu0
        %v1458 = vadd.f32 0.0, %v1457
        %v1459 = vpop.f32.mrb[0].mxu0
        %1460 = vmatprep.mubr.f32.mxu0 0.0
        %1461 = vmatmul.mubr.f32.gmra.mrb[0].mxu0 %v1281
        %v1462 = vpop.f32.mrb[0].mxu0
        %v1463 = vadd.f32 0.0, %v1462
        %v1464 = vpop.f32.mrb[0].mxu0
        %1465 = vdwg.mxu0
        %v1466 = vadd.f32 %v1254, %v1368
        %v1467 = vadd.f32 %v1255, %v1373
        %v1468 = vadd.f32 %v1256, %v1378
        %v1469 = vadd.f32 %v1257, %v1383
        %v1470 = vadd.f32 %v1258, %v1388
        %v1471 = vadd.f32 %v1259, %v1393
        %v1472 = vadd.f32 %v1260, %v1398
        %v1473 = vadd.f32 %v1261, %v1403
        %v1474 = vadd.f32 %v1262, %v1408
        %v1475 = vadd.f32 %v1263, %v1413
        %v1476 = vadd.f32 %v1264, %v1418
        %v1477 = vadd.f32 %v1265, %v1423
        %v1478 = vadd.f32 %v1266, %v1428
        %v1479 = vadd.f32 %v1267, %v1433
        %v1480 = vadd.f32 %v1268, %v1438
        %v1481 = vadd.f32 %v1269, %v1443
        %v1482 = vadd.f32 %v1270, %v1448
        %v1483 = vadd.f32 %v1271, %v1453
        %v1484 = vadd.f32 %v1272, %v1458
        %v1485 = vadd.f32 %v1273, %v1463
        %v1486 = vrot.slane %v329, 2
        %v1487 = vrot.slane %v330, 2
        %v1488 = vsel %vm799, %v1486, %v1487
        %v1489 = vrot.slane %v331, 2
        %v1490 = vsel %vm799, %v1487, %v1489
        %s1493 = scalar_lea.vmem [#allocation5], 640
        %v1494 = vld [vmem:[%s1493] sm:$0xff]
        %v1495 = vld [vmem:[%s1493 + $0x8] sm:$0xff]
        %v1496 = vld [vmem:[%s1493 + $0x10] sm:$0xff]
        %v1497 = vld [vmem:[%s1493 + $0x18] sm:$0xff]
        %v1498 = vld [vmem:[%s1493 + $0x20] sm:$0xff]
        %v1499 = vld [vmem:[%s1493 + $0x28] sm:$0xff]
        %v1500 = vld [vmem:[%s1493 + $0x30] sm:$0xff]
        %v1501 = vld [vmem:[%s1493 + $0x38] sm:$0xff]
        %v1502 = vld [vmem:[%s1493 + $0x40] sm:$0xff]
        %v1503 = vld [vmem:[%s1493 + $0x48] sm:$0xff]
        %v1504 = vld [vmem:[%s1493 + $0x50] sm:$0xff]
        %v1505 = vld [vmem:[%s1493 + $0x58] sm:$0xff]
        %v1506 = vld [vmem:[%s1493 + $0x60] sm:$0xff]
        %v1507 = vld [vmem:[%s1493 + $0x68] sm:$0xff]
        %v1508 = vld [vmem:[%s1493 + $0x70] sm:$0xff]
        %v1509 = vld [vmem:[%s1493 + $0x78] sm:$0xff]
        %1510 = vmatprep.subr.mxu0 0.0
        %1511 = vmatpush1.msra.mxu0 %v1494
        %1512 = vmatprep.subr.mxu0 0.0
        %1513 = vmatpush1.msra.mxu0 %v1495
        %1514 = vmatprep.subr.mxu0 0.0
        %1515 = vmatpush1.msra.mxu0 %v1496
        %1516 = vmatprep.subr.mxu0 0.0
        %1517 = vmatpush1.msra.mxu0 %v1497
        %1518 = vmatprep.subr.mxu0 0.0
        %1519 = vmatpush1.msra.mxu0 %v1498
        %1520 = vmatprep.subr.mxu0 0.0
        %1521 = vmatpush1.msra.mxu0 %v1499
        %1522 = vmatprep.subr.mxu0 0.0
        %1523 = vmatpush1.msra.mxu0 %v1500
        %1524 = vmatprep.subr.mxu0 0.0
        %1525 = vmatpush1.msra.mxu0 %v1501
        %1526 = vmatprep.subr.mxu0 0.0
        %1527 = vmatpush1.msra.mxu0 %v1502
        %1528 = vmatprep.subr.mxu0 0.0
        %1529 = vmatpush1.msra.mxu0 %v1503
        %1530 = vmatprep.subr.mxu0 0.0
        %1531 = vmatpush1.msra.mxu0 %v1504
        %1532 = vmatprep.subr.mxu0 0.0
        %1533 = vmatpush1.msra.mxu0 %v1505
        %1534 = vmatprep.subr.mxu0 0.0
        %1535 = vmatpush1.msra.mxu0 %v1506
        %1536 = vmatprep.subr.mxu0 0.0
        %1537 = vmatpush1.msra.mxu0 %v1507
        %1538 = vmatprep.subr.mxu0 0.0
        %1539 = vmatpush1.msra.mxu0 %v1508
        %1540 = vmatprep.subr.mxu0 0.0
        %1541 = vmatpush1.msra.mxu0 %v1509
        %1542 = vmatprep.subr.mxu0 0.0
        %1543 = vmatpush1.msra.mxu0 0.0
        %1544 = vmatprep.subr.mxu0 0.0
        %1545 = vmatpush1.msra.mxu0 0.0
        %1546 = vmatprep.subr.mxu0 0.0
        %1547 = vmatpush1.msra.mxu0 0.0
        %1548 = vmatprep.subr.mxu0 0.0
        %1549 = vmatpush1.msra.mxu0 0.0
        %1550 = vmatprep.subr.mxu0 0.0
        %1551 = vmatpush1.msra.mxu0 0.0
        %1552 = vmatprep.subr.mxu0 0.0
        %1553 = vmatpush1.msra.mxu0 0.0
        %1554 = vmatprep.subr.mxu0 0.0
        %1555 = vmatpush1.msra.mxu0 0.0
        %1556 = vmatprep.subr.mxu0 0.0
        %1557 = vmatpush1.msra.mxu0 0.0
        %1558 = vmatprep.subr.mxu0 0.0
        %1559 = vmatpush1.msra.mxu0 0.0
        %1560 = vmatprep.subr.mxu0 0.0
        %1561 = vmatpush1.msra.mxu0 0.0
        %1562 = vmatprep.subr.mxu0 0.0
        %1563 = vmatpush1.msra.mxu0 0.0
        %1564 = vmatprep.subr.mxu0 0.0
        %1565 = vmatpush1.msra.mxu0 0.0
        %1566 = vmatprep.subr.mxu0 0.0
        %1567 = vmatpush1.msra.mxu0 0.0
        %1568 = vmatprep.subr.mxu0 0.0
        %1569 = vmatpush1.msra.mxu0 0.0
        %1570 = vmatprep.subr.mxu0 0.0
        %1571 = vmatpush1.msra.mxu0 0.0
        %1572 = vmatprep.subr.mxu0 0.0
        %1573 = vmatpush1.msra.mxu0 0.0
        %1574 = vmatprep.mubr.f32.mxu0 0.0
        %1575 = vmatmul.mubr.f32.gmra.mrb[0].mxu0 %v807
        %v1576 = vpop.f32.mrb[0].mxu0
        %v1577 = vadd.f32 0.0, %v1576
        %v1578 = vpop.f32.mrb[0].mxu0
        %1579 = vmatprep.mubr.f32.mxu0 0.0
        %1580 = vmatmul.mubr.f32.gmra.mrb[0].mxu0 %v809
        %v1581 = vpop.f32.mrb[0].mxu0
        %v1582 = vadd.f32 0.0, %v1581
        %v1583 = vpop.f32.mrb[0].mxu0
        %1584 = vmatprep.mubr.f32.mxu0 0.0
        %1585 = vmatmul.mubr.f32.gmra.mrb[0].mxu0 %v812
        %v1586 = vpop.f32.mrb[0].mxu0
        %v1587 = vadd.f32 0.0, %v1586
        %v1588 = vpop.f32.mrb[0].mxu0
        %1589 = vmatprep.mubr.f32.mxu0 0.0
        %1590 = vmatmul.mubr.f32.gmra.mrb[0].mxu0 %v814
        %v1591 = vpop.f32.mrb[0].mxu0
        %v1592 = vadd.f32 0.0, %v1591
        %v1593 = vpop.f32.mrb[0].mxu0
        %1594 = vmatprep.mubr.f32.mxu0 0.0
        %1595 = vmatmul.mubr.f32.gmra.mrb[0].mxu0 %v817
        %v1596 = vpop.f32.mrb[0].mxu0
        %v1597 = vadd.f32 0.0, %v1596
        %v1598 = vpop.f32.mrb[0].mxu0
        %1599 = vmatprep.mubr.f32.mxu0 0.0
        %1600 = vmatmul.mubr.f32.gmra.mrb[0].mxu0 %v819
        %v1601 = vpop.f32.mrb[0].mxu0
        %v1602 = vadd.f32 0.0, %v1601
        %v1603 = vpop.f32.mrb[0].mxu0
        %1604 = vmatprep.mubr.f32.mxu0 0.0
        %1605 = vmatmul.mubr.f32.gmra.mrb[0].mxu0 %v822
        %v1606 = vpop.f32.mrb[0].mxu0
        %v1607 = vadd.f32 0.0, %v1606
        %v1608 = vpop.f32.mrb[0].mxu0
        %1609 = vmatprep.mubr.f32.mxu0 0.0
        %1610 = vmatmul.mubr.f32.gmra.mrb[0].mxu0 %v824
        %v1611 = vpop.f32.mrb[0].mxu0
        %v1612 = vadd.f32 0.0, %v1611
        %v1613 = vpop.f32.mrb[0].mxu0
        %1614 = vmatprep.mubr.f32.mxu0 0.0
        %1615 = vmatmul.mubr.f32.gmra.mrb[0].mxu0 %v827
        %v1616 = vpop.f32.mrb[0].mxu0
        %v1617 = vadd.f32 0.0, %v1616
        %v1618 = vpop.f32.mrb[0].mxu0
        %1619 = vmatprep.mubr.f32.mxu0 0.0
        %1620 = vmatmul.mubr.f32.gmra.mrb[0].mxu0 %v829
        %v1621 = vpop.f32.mrb[0].mxu0
        %v1622 = vadd.f32 0.0, %v1621
        %v1623 = vpop.f32.mrb[0].mxu0
        %1624 = vmatprep.mubr.f32.mxu0 0.0
        %1625 = vmatmul.mubr.f32.gmra.mrb[0].mxu0 %v832
        %v1626 = vpop.f32.mrb[0].mxu0
        %v1627 = vadd.f32 0.0, %v1626
        %v1628 = vpop.f32.mrb[0].mxu0
        %1629 = vmatprep.mubr.f32.mxu0 0.0
        %1630 = vmatmul.mubr.f32.gmra.mrb[0].mxu0 %v834
        %v1631 = vpop.f32.mrb[0].mxu0
        %v1632 = vadd.f32 0.0, %v1631
        %v1633 = vpop.f32.mrb[0].mxu0
        %1634 = vmatprep.mubr.f32.mxu0 0.0
        %1635 = vmatmul.mubr.f32.gmra.mrb[0].mxu0 %v837
        %v1636 = vpop.f32.mrb[0].mxu0
        %v1637 = vadd.f32 0.0, %v1636
        %v1638 = vpop.f32.mrb[0].mxu0
        %1639 = vmatprep.mubr.f32.mxu0 0.0
        %1640 = vmatmul.mubr.f32.gmra.mrb[0].mxu0 %v839
        %v1641 = vpop.f32.mrb[0].mxu0
        %v1642 = vadd.f32 0.0, %v1641
        %v1643 = vpop.f32.mrb[0].mxu0
        %1644 = vmatprep.mubr.f32.mxu0 0.0
        %1645 = vmatmul.mubr.f32.gmra.mrb[0].mxu0 %v842
        %v1646 = vpop.f32.mrb[0].mxu0
        %v1647 = vadd.f32 0.0, %v1646
        %v1648 = vpop.f32.mrb[0].mxu0
        %1649 = vmatprep.mubr.f32.mxu0 0.0
        %1650 = vmatmul.mubr.f32.gmra.mrb[0].mxu0 %v844
        %v1651 = vpop.f32.mrb[0].mxu0
        %v1652 = vadd.f32 0.0, %v1651
        %v1653 = vpop.f32.mrb[0].mxu0
        %1654 = vmatprep.mubr.f32.mxu0 0.0
        %1655 = vmatmul.mubr.f32.gmra.mrb[0].mxu0 %v847
        %v1656 = vpop.f32.mrb[0].mxu0
        %v1657 = vadd.f32 0.0, %v1656
        %v1658 = vpop.f32.mrb[0].mxu0
        %1659 = vmatprep.mubr.f32.mxu0 0.0
        %1660 = vmatmul.mubr.f32.gmra.mrb[0].mxu0 %v849
        %v1661 = vpop.f32.mrb[0].mxu0
        %v1662 = vadd.f32 0.0, %v1661
        %v1663 = vpop.f32.mrb[0].mxu0
        %1664 = vmatprep.mubr.f32.mxu0 0.0
        %1665 = vmatmul.mubr.f32.gmra.mrb[0].mxu0 %v1488
        %v1666 = vpop.f32.mrb[0].mxu0
        %v1667 = vadd.f32 0.0, %v1666
        %v1668 = vpop.f32.mrb[0].mxu0
        %1669 = vmatprep.mubr.f32.mxu0 0.0
        %1670 = vmatmul.mubr.f32.gmra.mrb[0].mxu0 %v1490
        %v1671 = vpop.f32.mrb[0].mxu0
        %v1672 = vadd.f32 0.0, %v1671
        %v1673 = vpop.f32.mrb[0].mxu0
        %1674 = vdwg.mxu0
        %v1675 = vadd.f32 %v1466, %v1577
        %v1676 = vadd.f32 %v1467, %v1582
        %v1677 = vadd.f32 %v1468, %v1587
        %v1678 = vadd.f32 %v1469, %v1592
        %v1679 = vadd.f32 %v1470, %v1597
        %v1680 = vadd.f32 %v1471, %v1602
        %v1681 = vadd.f32 %v1472, %v1607
        %v1682 = vadd.f32 %v1473, %v1612
        %v1683 = vadd.f32 %v1474, %v1617
        %v1684 = vadd.f32 %v1475, %v1622
        %v1685 = vadd.f32 %v1476, %v1627
        %v1686 = vadd.f32 %v1477, %v1632
        %v1687 = vadd.f32 %v1478, %v1637
        %v1688 = vadd.f32 %v1479, %v1642
        %v1689 = vadd.f32 %v1480, %v1647
        %v1690 = vadd.f32 %v1481, %v1652
        %v1691 = vadd.f32 %v1482, %v1657
        %v1692 = vadd.f32 %v1483, %v1662
        %v1693 = vadd.f32 %v1484, %v1667
        %v1694 = vadd.f32 %v1485, %v1672
        %s1695 = scalar_lea.vmem [#allocation5], 768
        %v1696 = vld [vmem:[%s1695] sm:$0xff]
        %v1697 = vld [vmem:[%s1695 + $0x8] sm:$0xff]
        %v1698 = vld [vmem:[%s1695 + $0x10] sm:$0xff]
        %v1699 = vld [vmem:[%s1695 + $0x18] sm:$0xff]
        %v1700 = vld [vmem:[%s1695 + $0x20] sm:$0xff]
        %v1701 = vld [vmem:[%s1695 + $0x28] sm:$0xff]
        %v1702 = vld [vmem:[%s1695 + $0x30] sm:$0xff]
        %v1703 = vld [vmem:[%s1695 + $0x38] sm:$0xff]
        %v1704 = vld [vmem:[%s1695 + $0x40] sm:$0xff]
        %v1705 = vld [vmem:[%s1695 + $0x48] sm:$0xff]
        %v1706 = vld [vmem:[%s1695 + $0x50] sm:$0xff]
        %v1707 = vld [vmem:[%s1695 + $0x58] sm:$0xff]
        %v1708 = vld [vmem:[%s1695 + $0x60] sm:$0xff]
        %v1709 = vld [vmem:[%s1695 + $0x68] sm:$0xff]
        %v1710 = vld [vmem:[%s1695 + $0x70] sm:$0xff]
        %v1711 = vld [vmem:[%s1695 + $0x78] sm:$0xff]
        %1712 = vmatprep.subr.mxu0 0.0
        %1713 = vmatpush1.msra.mxu0 %v1696
        %1714 = vmatprep.subr.mxu0 0.0
        %1715 = vmatpush1.msra.mxu0 %v1697
        %1716 = vmatprep.subr.mxu0 0.0
        %1717 = vmatpush1.msra.mxu0 %v1698
        %1718 = vmatprep.subr.mxu0 0.0
        %1719 = vmatpush1.msra.mxu0 %v1699
        %1720 = vmatprep.subr.mxu0 0.0
        %1721 = vmatpush1.msra.mxu0 %v1700
        %1722 = vmatprep.subr.mxu0 0.0
        %1723 = vmatpush1.msra.mxu0 %v1701
        %1724 = vmatprep.subr.mxu0 0.0
        %1725 = vmatpush1.msra.mxu0 %v1702
        %1726 = vmatprep.subr.mxu0 0.0
        %1727 = vmatpush1.msra.mxu0 %v1703
        %1728 = vmatprep.subr.mxu0 0.0
        %1729 = vmatpush1.msra.mxu0 %v1704
        %1730 = vmatprep.subr.mxu0 0.0
        %1731 = vmatpush1.msra.mxu0 %v1705
        %1732 = vmatprep.subr.mxu0 0.0
        %1733 = vmatpush1.msra.mxu0 %v1706
        %1734 = vmatprep.subr.mxu0 0.0
        %1735 = vmatpush1.msra.mxu0 %v1707
        %1736 = vmatprep.subr.mxu0 0.0
        %1737 = vmatpush1.msra.mxu0 %v1708
        %1738 = vmatprep.subr.mxu0 0.0
        %1739 = vmatpush1.msra.mxu0 %v1709
        %1740 = vmatprep.subr.mxu0 0.0
        %1741 = vmatpush1.msra.mxu0 %v1710
        %1742 = vmatprep.subr.mxu0 0.0
        %1743 = vmatpush1.msra.mxu0 %v1711
        %1744 = vmatprep.subr.mxu0 0.0
        %1745 = vmatpush1.msra.mxu0 0.0
        %1746 = vmatprep.subr.mxu0 0.0
        %1747 = vmatpush1.msra.mxu0 0.0
        %1748 = vmatprep.subr.mxu0 0.0
        %1749 = vmatpush1.msra.mxu0 0.0
        %1750 = vmatprep.subr.mxu0 0.0
        %1751 = vmatpush1.msra.mxu0 0.0
        %1752 = vmatprep.subr.mxu0 0.0
        %1753 = vmatpush1.msra.mxu0 0.0
        %1754 = vmatprep.subr.mxu0 0.0
        %1755 = vmatpush1.msra.mxu0 0.0
        %1756 = vmatprep.subr.mxu0 0.0
        %1757 = vmatpush1.msra.mxu0 0.0
        %1758 = vmatprep.subr.mxu0 0.0
        %1759 = vmatpush1.msra.mxu0 0.0
        %1760 = vmatprep.subr.mxu0 0.0
        %1761 = vmatpush1.msra.mxu0 0.0
        %1762 = vmatprep.subr.mxu0 0.0
        %1763 = vmatpush1.msra.mxu0 0.0
        %1764 = vmatprep.subr.mxu0 0.0
        %1765 = vmatpush1.msra.mxu0 0.0
        %1766 = vmatprep.subr.mxu0 0.0
        %1767 = vmatpush1.msra.mxu0 0.0
        %1768 = vmatprep.subr.mxu0 0.0
        %1769 = vmatpush1.msra.mxu0 0.0
        %1770 = vmatprep.subr.mxu0 0.0
        %1771 = vmatpush1.msra.mxu0 0.0
        %1772 = vmatprep.subr.mxu0 0.0
        %1773 = vmatpush1.msra.mxu0 0.0
        %1774 = vmatprep.subr.mxu0 0.0
        %1775 = vmatpush1.msra.mxu0 0.0
        %1776 = vmatprep.mubr.f32.mxu0 0.0
        %1777 = vmatmul.mubr.f32.gmra.mrb[0].mxu0 %v305
        %v1778 = vpop.f32.mrb[0].mxu0
        %v1779 = vadd.f32 0.0, %v1778
        %v1780 = vpop.f32.mrb[0].mxu0
        %1781 = vmatprep.mubr.f32.mxu0 0.0
        %1782 = vmatmul.mubr.f32.gmra.mrb[0].mxu0 %v306
        %v1783 = vpop.f32.mrb[0].mxu0
        %v1784 = vadd.f32 0.0, %v1783
        %v1785 = vpop.f32.mrb[0].mxu0
        %1786 = vmatprep.mubr.f32.mxu0 0.0
        %1787 = vmatmul.mubr.f32.gmra.mrb[0].mxu0 %v308
        %v1788 = vpop.f32.mrb[0].mxu0
        %v1789 = vadd.f32 0.0, %v1788
        %v1790 = vpop.f32.mrb[0].mxu0
        %1791 = vmatprep.mubr.f32.mxu0 0.0
        %1792 = vmatmul.mubr.f32.gmra.mrb[0].mxu0 %v309
        %v1793 = vpop.f32.mrb[0].mxu0
        %v1794 = vadd.f32 0.0, %v1793
        %v1795 = vpop.f32.mrb[0].mxu0
        %1796 = vmatprep.mubr.f32.mxu0 0.0
        %1797 = vmatmul.mubr.f32.gmra.mrb[0].mxu0 %v311
        %v1798 = vpop.f32.mrb[0].mxu0
        %v1799 = vadd.f32 0.0, %v1798
        %v1800 = vpop.f32.mrb[0].mxu0
        %1801 = vmatprep.mubr.f32.mxu0 0.0
        %1802 = vmatmul.mubr.f32.gmra.mrb[0].mxu0 %v312
        %v1803 = vpop.f32.mrb[0].mxu0
        %v1804 = vadd.f32 0.0, %v1803
        %v1805 = vpop.f32.mrb[0].mxu0
        %1806 = vmatprep.mubr.f32.mxu0 0.0
        %1807 = vmatmul.mubr.f32.gmra.mrb[0].mxu0 %v314
        %v1808 = vpop.f32.mrb[0].mxu0
        %v1809 = vadd.f32 0.0, %v1808
        %v1810 = vpop.f32.mrb[0].mxu0
        %1811 = vmatprep.mubr.f32.mxu0 0.0
        %1812 = vmatmul.mubr.f32.gmra.mrb[0].mxu0 %v315
        %v1813 = vpop.f32.mrb[0].mxu0
        %v1814 = vadd.f32 0.0, %v1813
        %v1815 = vpop.f32.mrb[0].mxu0
        %1816 = vmatprep.mubr.f32.mxu0 0.0
        %1817 = vmatmul.mubr.f32.gmra.mrb[0].mxu0 %v317
        %v1818 = vpop.f32.mrb[0].mxu0
        %v1819 = vadd.f32 0.0, %v1818
        %v1820 = vpop.f32.mrb[0].mxu0
        %1821 = vmatprep.mubr.f32.mxu0 0.0
        %1822 = vmatmul.mubr.f32.gmra.mrb[0].mxu0 %v318
        %v1823 = vpop.f32.mrb[0].mxu0
        %v1824 = vadd.f32 0.0, %v1823
        %v1825 = vpop.f32.mrb[0].mxu0
        %1826 = vmatprep.mubr.f32.mxu0 0.0
        %1827 = vmatmul.mubr.f32.gmra.mrb[0].mxu0 %v320
        %v1828 = vpop.f32.mrb[0].mxu0
        %v1829 = vadd.f32 0.0, %v1828
        %v1830 = vpop.f32.mrb[0].mxu0
        %1831 = vmatprep.mubr.f32.mxu0 0.0
        %1832 = vmatmul.mubr.f32.gmra.mrb[0].mxu0 %v321
        %v1833 = vpop.f32.mrb[0].mxu0
        %v1834 = vadd.f32 0.0, %v1833
        %v1835 = vpop.f32.mrb[0].mxu0
        %1836 = vmatprep.mubr.f32.mxu0 0.0
        %1837 = vmatmul.mubr.f32.gmra.mrb[0].mxu0 %v323
        %v1838 = vpop.f32.mrb[0].mxu0
        %v1839 = vadd.f32 0.0, %v1838
        %v1840 = vpop.f32.mrb[0].mxu0
        %1841 = vmatprep.mubr.f32.mxu0 0.0
        %1842 = vmatmul.mubr.f32.gmra.mrb[0].mxu0 %v324
        %v1843 = vpop.f32.mrb[0].mxu0
        %v1844 = vadd.f32 0.0, %v1843
        %v1845 = vpop.f32.mrb[0].mxu0
        %1846 = vmatprep.mubr.f32.mxu0 0.0
        %1847 = vmatmul.mubr.f32.gmra.mrb[0].mxu0 %v326
        %v1848 = vpop.f32.mrb[0].mxu0
        %v1849 = vadd.f32 0.0, %v1848
        %v1850 = vpop.f32.mrb[0].mxu0
        %1851 = vmatprep.mubr.f32.mxu0 0.0
        %1852 = vmatmul.mubr.f32.gmra.mrb[0].mxu0 %v327
        %v1853 = vpop.f32.mrb[0].mxu0
        %v1854 = vadd.f32 0.0, %v1853
        %v1855 = vpop.f32.mrb[0].mxu0
        %1856 = vmatprep.mubr.f32.mxu0 0.0
        %1857 = vmatmul.mubr.f32.gmra.mrb[0].mxu0 %v329
        %v1858 = vpop.f32.mrb[0].mxu0
        %v1859 = vadd.f32 0.0, %v1858
        %v1860 = vpop.f32.mrb[0].mxu0
        %1861 = vmatprep.mubr.f32.mxu0 0.0
        %1862 = vmatmul.mubr.f32.gmra.mrb[0].mxu0 %v330
        %v1863 = vpop.f32.mrb[0].mxu0
        %v1864 = vadd.f32 0.0, %v1863
        %v1865 = vpop.f32.mrb[0].mxu0
        %1866 = vmatprep.mubr.f32.mxu0 0.0
        %1867 = vmatmul.mubr.f32.gmra.mrb[0].mxu0 %v332
        %v1868 = vpop.f32.mrb[0].mxu0
        %v1869 = vadd.f32 0.0, %v1868
        %v1870 = vpop.f32.mrb[0].mxu0
        %1871 = vmatprep.mubr.f32.mxu0 0.0
        %1872 = vmatmul.mubr.f32.gmra.mrb[0].mxu0 %v333
        %v1873 = vpop.f32.mrb[0].mxu0
        %v1874 = vadd.f32 0.0, %v1873
        %v1875 = vpop.f32.mrb[0].mxu0
        %1876 = vdwg.mxu0
        %v1877 = vadd.f32 %v1675, %v1779
        %v1878 = vadd.f32 %v1676, %v1784
        %v1879 = vadd.f32 %v1677, %v1789
        %v1880 = vadd.f32 %v1678, %v1794
        %v1881 = vadd.f32 %v1679, %v1799
        %v1882 = vadd.f32 %v1680, %v1804
        %v1883 = vadd.f32 %v1681, %v1809
        %v1884 = vadd.f32 %v1682, %v1814
        %v1885 = vadd.f32 %v1683, %v1819
        %v1886 = vadd.f32 %v1684, %v1824
        %v1887 = vadd.f32 %v1685, %v1829
        %v1888 = vadd.f32 %v1686, %v1834
        %v1889 = vadd.f32 %v1687, %v1839
        %v1890 = vadd.f32 %v1688, %v1844
        %v1891 = vadd.f32 %v1689, %v1849
        %v1892 = vadd.f32 %v1690, %v1854
        %v1893 = vadd.f32 %v1691, %v1859
        %v1894 = vadd.f32 %v1692, %v1864
        %v1895 = vadd.f32 %v1693, %v1869
        %v1896 = vadd.f32 %v1694, %v1874
        %v1900 = vrot.slane %v332, 1
        %v1901 = vrot.slane %v333, 1
        %v1902 = vsel %vm381, %v1900, %v1901
        %v1903 = vrot.slane %v334, 1
        %v1904 = vsel %vm381, %v1901, %v1903
        %s1907 = scalar_lea.vmem [#allocation5], 896
        %v1908 = vld [vmem:[%s1907] sm:$0xff]
        %v1909 = vld [vmem:[%s1907 + $0x8] sm:$0xff]
        %v1910 = vld [vmem:[%s1907 + $0x10] sm:$0xff]
        %v1911 = vld [vmem:[%s1907 + $0x18] sm:$0xff]
        %v1912 = vld [vmem:[%s1907 + $0x20] sm:$0xff]
        %v1913 = vld [vmem:[%s1907 + $0x28] sm:$0xff]
        %v1914 = vld [vmem:[%s1907 + $0x30] sm:$0xff]
        %v1915 = vld [vmem:[%s1907 + $0x38] sm:$0xff]
        %v1916 = vld [vmem:[%s1907 + $0x40] sm:$0xff]
        %v1917 = vld [vmem:[%s1907 + $0x48] sm:$0xff]
        %v1918 = vld [vmem:[%s1907 + $0x50] sm:$0xff]
        %v1919 = vld [vmem:[%s1907 + $0x58] sm:$0xff]
        %v1920 = vld [vmem:[%s1907 + $0x60] sm:$0xff]
        %v1921 = vld [vmem:[%s1907 + $0x68] sm:$0xff]
        %v1922 = vld [vmem:[%s1907 + $0x70] sm:$0xff]
        %v1923 = vld [vmem:[%s1907 + $0x78] sm:$0xff]
        %1924 = vmatprep.subr.mxu0 0.0
        %1925 = vmatpush1.msra.mxu0 %v1908
        %1926 = vmatprep.subr.mxu0 0.0
        %1927 = vmatpush1.msra.mxu0 %v1909
        %1928 = vmatprep.subr.mxu0 0.0
        %1929 = vmatpush1.msra.mxu0 %v1910
        %1930 = vmatprep.subr.mxu0 0.0
        %1931 = vmatpush1.msra.mxu0 %v1911
        %1932 = vmatprep.subr.mxu0 0.0
        %1933 = vmatpush1.msra.mxu0 %v1912
        %1934 = vmatprep.subr.mxu0 0.0
        %1935 = vmatpush1.msra.mxu0 %v1913
        %1936 = vmatprep.subr.mxu0 0.0
        %1937 = vmatpush1.msra.mxu0 %v1914
        %1938 = vmatprep.subr.mxu0 0.0
        %1939 = vmatpush1.msra.mxu0 %v1915
        %1940 = vmatprep.subr.mxu0 0.0
        %1941 = vmatpush1.msra.mxu0 %v1916
        %1942 = vmatprep.subr.mxu0 0.0
        %1943 = vmatpush1.msra.mxu0 %v1917
        %1944 = vmatprep.subr.mxu0 0.0
        %1945 = vmatpush1.msra.mxu0 %v1918
        %1946 = vmatprep.subr.mxu0 0.0
        %1947 = vmatpush1.msra.mxu0 %v1919
        %1948 = vmatprep.subr.mxu0 0.0
        %1949 = vmatpush1.msra.mxu0 %v1920
        %1950 = vmatprep.subr.mxu0 0.0
        %1951 = vmatpush1.msra.mxu0 %v1921
        %1952 = vmatprep.subr.mxu0 0.0
        %1953 = vmatpush1.msra.mxu0 %v1922
        %1954 = vmatprep.subr.mxu0 0.0
        %1955 = vmatpush1.msra.mxu0 %v1923
        %1956 = vmatprep.subr.mxu0 0.0
        %1957 = vmatpush1.msra.mxu0 0.0
        %1958 = vmatprep.subr.mxu0 0.0
        %1959 = vmatpush1.msra.mxu0 0.0
        %1960 = vmatprep.subr.mxu0 0.0
        %1961 = vmatpush1.msra.mxu0 0.0
        %1962 = vmatprep.subr.mxu0 0.0
        %1963 = vmatpush1.msra.mxu0 0.0
        %1964 = vmatprep.subr.mxu0 0.0
        %1965 = vmatpush1.msra.mxu0 0.0
        %1966 = vmatprep.subr.mxu0 0.0
        %1967 = vmatpush1.msra.mxu0 0.0
        %1968 = vmatprep.subr.mxu0 0.0
        %1969 = vmatpush1.msra.mxu0 0.0
        %1970 = vmatprep.subr.mxu0 0.0
        %1971 = vmatpush1.msra.mxu0 0.0
        %1972 = vmatprep.subr.mxu0 0.0
        %1973 = vmatpush1.msra.mxu0 0.0
        %1974 = vmatprep.subr.mxu0 0.0
        %1975 = vmatpush1.msra.mxu0 0.0
        %1976 = vmatprep.subr.mxu0 0.0
        %1977 = vmatpush1.msra.mxu0 0.0
        %1978 = vmatprep.subr.mxu0 0.0
        %1979 = vmatpush1.msra.mxu0 0.0
        %1980 = vmatprep.subr.mxu0 0.0
        %1981 = vmatpush1.msra.mxu0 0.0
        %1982 = vmatprep.subr.mxu0 0.0
        %1983 = vmatpush1.msra.mxu0 0.0
        %1984 = vmatprep.subr.mxu0 0.0
        %1985 = vmatpush1.msra.mxu0 0.0
        %1986 = vmatprep.subr.mxu0 0.0
        %1987 = vmatpush1.msra.mxu0 0.0
        %1988 = vmatprep.mubr.f32.mxu0 0.0
        %1989 = vmatmul.mubr.f32.gmra.mrb[0].mxu0 %v394
        %v1990 = vpop.f32.mrb[0].mxu0
        %v1991 = vadd.f32 0.0, %v1990
        %v1992 = vpop.f32.mrb[0].mxu0
        %1993 = vmatprep.mubr.f32.mxu0 0.0
        %1994 = vmatmul.mubr.f32.gmra.mrb[0].mxu0 %v396
        %v1995 = vpop.f32.mrb[0].mxu0
        %v1996 = vadd.f32 0.0, %v1995
        %v1997 = vpop.f32.mrb[0].mxu0
        %1998 = vmatprep.mubr.f32.mxu0 0.0
        %1999 = vmatmul.mubr.f32.gmra.mrb[0].mxu0 %v399
        %v2000 = vpop.f32.mrb[0].mxu0
        %v2001 = vadd.f32 0.0, %v2000
        %v2002 = vpop.f32.mrb[0].mxu0
        %2003 = vmatprep.mubr.f32.mxu0 0.0
        %2004 = vmatmul.mubr.f32.gmra.mrb[0].mxu0 %v401
        %v2005 = vpop.f32.mrb[0].mxu0
        %v2006 = vadd.f32 0.0, %v2005
        %v2007 = vpop.f32.mrb[0].mxu0
        %2008 = vmatprep.mubr.f32.mxu0 0.0
        %2009 = vmatmul.mubr.f32.gmra.mrb[0].mxu0 %v404
        %v2010 = vpop.f32.mrb[0].mxu0
        %v2011 = vadd.f32 0.0, %v2010
        %v2012 = vpop.f32.mrb[0].mxu0
        %2013 = vmatprep.mubr.f32.mxu0 0.0
        %2014 = vmatmul.mubr.f32.gmra.mrb[0].mxu0 %v406
        %v2015 = vpop.f32.mrb[0].mxu0
        %v2016 = vadd.f32 0.0, %v2015
        %v2017 = vpop.f32.mrb[0].mxu0
        %2018 = vmatprep.mubr.f32.mxu0 0.0
        %2019 = vmatmul.mubr.f32.gmra.mrb[0].mxu0 %v409
        %v2020 = vpop.f32.mrb[0].mxu0
        %v2021 = vadd.f32 0.0, %v2020
        %v2022 = vpop.f32.mrb[0].mxu0
        %2023 = vmatprep.mubr.f32.mxu0 0.0
        %2024 = vmatmul.mubr.f32.gmra.mrb[0].mxu0 %v411
        %v2025 = vpop.f32.mrb[0].mxu0
        %v2026 = vadd.f32 0.0, %v2025
        %v2027 = vpop.f32.mrb[0].mxu0
        %2028 = vmatprep.mubr.f32.mxu0 0.0
        %2029 = vmatmul.mubr.f32.gmra.mrb[0].mxu0 %v414
        %v2030 = vpop.f32.mrb[0].mxu0
        %v2031 = vadd.f32 0.0, %v2030
        %v2032 = vpop.f32.mrb[0].mxu0
        %2033 = vmatprep.mubr.f32.mxu0 0.0
        %2034 = vmatmul.mubr.f32.gmra.mrb[0].mxu0 %v416
        %v2035 = vpop.f32.mrb[0].mxu0
        %v2036 = vadd.f32 0.0, %v2035
        %v2037 = vpop.f32.mrb[0].mxu0
        %2038 = vmatprep.mubr.f32.mxu0 0.0
        %2039 = vmatmul.mubr.f32.gmra.mrb[0].mxu0 %v419
        %v2040 = vpop.f32.mrb[0].mxu0
        %v2041 = vadd.f32 0.0, %v2040
        %v2042 = vpop.f32.mrb[0].mxu0
        %2043 = vmatprep.mubr.f32.mxu0 0.0
        %2044 = vmatmul.mubr.f32.gmra.mrb[0].mxu0 %v421
        %v2045 = vpop.f32.mrb[0].mxu0
        %v2046 = vadd.f32 0.0, %v2045
        %v2047 = vpop.f32.mrb[0].mxu0
        %2048 = vmatprep.mubr.f32.mxu0 0.0
        %2049 = vmatmul.mubr.f32.gmra.mrb[0].mxu0 %v424
        %v2050 = vpop.f32.mrb[0].mxu0
        %v2051 = vadd.f32 0.0, %v2050
        %v2052 = vpop.f32.mrb[0].mxu0
        %2053 = vmatprep.mubr.f32.mxu0 0.0
        %2054 = vmatmul.mubr.f32.gmra.mrb[0].mxu0 %v426
        %v2055 = vpop.f32.mrb[0].mxu0
        %v2056 = vadd.f32 0.0, %v2055
        %v2057 = vpop.f32.mrb[0].mxu0
        %2058 = vmatprep.mubr.f32.mxu0 0.0
        %2059 = vmatmul.mubr.f32.gmra.mrb[0].mxu0 %v429
        %v2060 = vpop.f32.mrb[0].mxu0
        %v2061 = vadd.f32 0.0, %v2060
        %v2062 = vpop.f32.mrb[0].mxu0
        %2063 = vmatprep.mubr.f32.mxu0 0.0
        %2064 = vmatmul.mubr.f32.gmra.mrb[0].mxu0 %v431
        %v2065 = vpop.f32.mrb[0].mxu0
        %v2066 = vadd.f32 0.0, %v2065
        %v2067 = vpop.f32.mrb[0].mxu0
        %2068 = vmatprep.mubr.f32.mxu0 0.0
        %2069 = vmatmul.mubr.f32.gmra.mrb[0].mxu0 %v1279
        %v2070 = vpop.f32.mrb[0].mxu0
        %v2071 = vadd.f32 0.0, %v2070
        %v2072 = vpop.f32.mrb[0].mxu0
        %2073 = vmatprep.mubr.f32.mxu0 0.0
        %2074 = vmatmul.mubr.f32.gmra.mrb[0].mxu0 %v1281
        %v2075 = vpop.f32.mrb[0].mxu0
        %v2076 = vadd.f32 0.0, %v2075
        %v2077 = vpop.f32.mrb[0].mxu0
        %2078 = vmatprep.mubr.f32.mxu0 0.0
        %2079 = vmatmul.mubr.f32.gmra.mrb[0].mxu0 %v1902
        %v2080 = vpop.f32.mrb[0].mxu0
        %v2081 = vadd.f32 0.0, %v2080
        %v2082 = vpop.f32.mrb[0].mxu0
        %2083 = vmatprep.mubr.f32.mxu0 0.0
        %2084 = vmatmul.mubr.f32.gmra.mrb[0].mxu0 %v1904
        %v2085 = vpop.f32.mrb[0].mxu0
        %v2086 = vadd.f32 0.0, %v2085
        %v2087 = vpop.f32.mrb[0].mxu0
        %2088 = vdwg.mxu0
        %v2089 = vadd.f32 %v1877, %v1991
        %v2090 = vadd.f32 %v1878, %v1996
        %v2091 = vadd.f32 %v1879, %v2001
        %v2092 = vadd.f32 %v1880, %v2006
        %v2093 = vadd.f32 %v1881, %v2011
        %v2094 = vadd.f32 %v1882, %v2016
        %v2095 = vadd.f32 %v1883, %v2021
        %v2096 = vadd.f32 %v1884, %v2026
        %v2097 = vadd.f32 %v1885, %v2031
        %v2098 = vadd.f32 %v1886, %v2036
        %v2099 = vadd.f32 %v1887, %v2041
        %v2100 = vadd.f32 %v1888, %v2046
        %v2101 = vadd.f32 %v1889, %v2051
        %v2102 = vadd.f32 %v1890, %v2056
        %v2103 = vadd.f32 %v1891, %v2061
        %v2104 = vadd.f32 %v1892, %v2066
        %v2105 = vadd.f32 %v1893, %v2071
        %v2106 = vadd.f32 %v1894, %v2076
        %v2107 = vadd.f32 %v1895, %v2081
        %v2108 = vadd.f32 %v1896, %v2086
        %v2109 = vrot.slane %v332, 2
        %v2110 = vrot.slane %v333, 2
        %v2111 = vsel %vm799, %v2109, %v2110
        %v2112 = vrot.slane %v334, 2
        %v2113 = vsel %vm799, %v2110, %v2112
        %s2116 = scalar_lea.vmem [#allocation5], 1024
        %v2117 = vld [vmem:[%s2116] sm:$0xff]
        %v2118 = vld [vmem:[%s2116 + $0x8] sm:$0xff]
        %v2119 = vld [vmem:[%s2116 + $0x10] sm:$0xff]
        %v2120 = vld [vmem:[%s2116 + $0x18] sm:$0xff]
        %v2121 = vld [vmem:[%s2116 + $0x20] sm:$0xff]
        %v2122 = vld [vmem:[%s2116 + $0x28] sm:$0xff]
        %v2123 = vld [vmem:[%s2116 + $0x30] sm:$0xff]
        %v2124 = vld [vmem:[%s2116 + $0x38] sm:$0xff]
        %v2125 = vld [vmem:[%s2116 + $0x40] sm:$0xff]
        %v2126 = vld [vmem:[%s2116 + $0x48] sm:$0xff]
        %v2127 = vld [vmem:[%s2116 + $0x50] sm:$0xff]
        %v2128 = vld [vmem:[%s2116 + $0x58] sm:$0xff]
        %v2129 = vld [vmem:[%s2116 + $0x60] sm:$0xff]
        %v2130 = vld [vmem:[%s2116 + $0x68] sm:$0xff]
        %v2131 = vld [vmem:[%s2116 + $0x70] sm:$0xff]
        %v2132 = vld [vmem:[%s2116 + $0x78] sm:$0xff]
        %2133 = vmatprep.subr.mxu0 0.0
        %2134 = vmatpush1.msra.mxu0 %v2117
        %2135 = vmatprep.subr.mxu0 0.0
        %2136 = vmatpush1.msra.mxu0 %v2118
        %2137 = vmatprep.subr.mxu0 0.0
        %2138 = vmatpush1.msra.mxu0 %v2119
        %2139 = vmatprep.subr.mxu0 0.0
        %2140 = vmatpush1.msra.mxu0 %v2120
        %2141 = vmatprep.subr.mxu0 0.0
        %2142 = vmatpush1.msra.mxu0 %v2121
        %2143 = vmatprep.subr.mxu0 0.0
        %2144 = vmatpush1.msra.mxu0 %v2122
        %2145 = vmatprep.subr.mxu0 0.0
        %2146 = vmatpush1.msra.mxu0 %v2123
        %2147 = vmatprep.subr.mxu0 0.0
        %2148 = vmatpush1.msra.mxu0 %v2124
        %2149 = vmatprep.subr.mxu0 0.0
        %2150 = vmatpush1.msra.mxu0 %v2125
        %2151 = vmatprep.subr.mxu0 0.0
        %2152 = vmatpush1.msra.mxu0 %v2126
        %2153 = vmatprep.subr.mxu0 0.0
        %2154 = vmatpush1.msra.mxu0 %v2127
        %2155 = vmatprep.subr.mxu0 0.0
        %2156 = vmatpush1.msra.mxu0 %v2128
        %2157 = vmatprep.subr.mxu0 0.0
        %2158 = vmatpush1.msra.mxu0 %v2129
        %2159 = vmatprep.subr.mxu0 0.0
        %2160 = vmatpush1.msra.mxu0 %v2130
        %2161 = vmatprep.subr.mxu0 0.0
        %2162 = vmatpush1.msra.mxu0 %v2131
        %2163 = vmatprep.subr.mxu0 0.0
        %2164 = vmatpush1.msra.mxu0 %v2132
        %2165 = vmatprep.subr.mxu0 0.0
        %2166 = vmatpush1.msra.mxu0 0.0
        %2167 = vmatprep.subr.mxu0 0.0
        %2168 = vmatpush1.msra.mxu0 0.0
        %2169 = vmatprep.subr.mxu0 0.0
        %2170 = vmatpush1.msra.mxu0 0.0
        %2171 = vmatprep.subr.mxu0 0.0
        %2172 = vmatpush1.msra.mxu0 0.0
        %2173 = vmatprep.subr.mxu0 0.0
        %2174 = vmatpush1.msra.mxu0 0.0
        %2175 = vmatprep.subr.mxu0 0.0
        %2176 = vmatpush1.msra.mxu0 0.0
        %2177 = vmatprep.subr.mxu0 0.0
        %2178 = vmatpush1.msra.mxu0 0.0
        %2179 = vmatprep.subr.mxu0 0.0
        %2180 = vmatpush1.msra.mxu0 0.0
        %2181 = vmatprep.subr.mxu0 0.0
        %2182 = vmatpush1.msra.mxu0 0.0
        %2183 = vmatprep.subr.mxu0 0.0
        %2184 = vmatpush1.msra.mxu0 0.0
        %2185 = vmatprep.subr.mxu0 0.0
        %2186 = vmatpush1.msra.mxu0 0.0
        %2187 = vmatprep.subr.mxu0 0.0
        %2188 = vmatpush1.msra.mxu0 0.0
        %2189 = vmatprep.subr.mxu0 0.0
        %2190 = vmatpush1.msra.mxu0 0.0
        %2191 = vmatprep.subr.mxu0 0.0
        %2192 = vmatpush1.msra.mxu0 0.0
        %2193 = vmatprep.subr.mxu0 0.0
        %2194 = vmatpush1.msra.mxu0 0.0
        %2195 = vmatprep.subr.mxu0 0.0
        %2196 = vmatpush1.msra.mxu0 0.0
        %2197 = vmatprep.mubr.f32.mxu0 0.0
        %2198 = vmatmul.mubr.f32.gmra.mrb[0].mxu0 %v812
        %v2199 = vpop.f32.mrb[0].mxu0
        %v2200 = vadd.f32 0.0, %v2199
        %v2201 = vpop.f32.mrb[0].mxu0
        %2202 = vmatprep.mubr.f32.mxu0 0.0
        %2203 = vmatmul.mubr.f32.gmra.mrb[0].mxu0 %v814
        %v2204 = vpop.f32.mrb[0].mxu0
        %v2205 = vadd.f32 0.0, %v2204
        %v2206 = vpop.f32.mrb[0].mxu0
        %2207 = vmatprep.mubr.f32.mxu0 0.0
        %2208 = vmatmul.mubr.f32.gmra.mrb[0].mxu0 %v817
        %v2209 = vpop.f32.mrb[0].mxu0
        %v2210 = vadd.f32 0.0, %v2209
        %v2211 = vpop.f32.mrb[0].mxu0
        %2212 = vmatprep.mubr.f32.mxu0 0.0
        %2213 = vmatmul.mubr.f32.gmra.mrb[0].mxu0 %v819
        %v2214 = vpop.f32.mrb[0].mxu0
        %v2215 = vadd.f32 0.0, %v2214
        %v2216 = vpop.f32.mrb[0].mxu0
        %2217 = vmatprep.mubr.f32.mxu0 0.0
        %2218 = vmatmul.mubr.f32.gmra.mrb[0].mxu0 %v822
        %v2219 = vpop.f32.mrb[0].mxu0
        %v2220 = vadd.f32 0.0, %v2219
        %v2221 = vpop.f32.mrb[0].mxu0
        %2222 = vmatprep.mubr.f32.mxu0 0.0
        %2223 = vmatmul.mubr.f32.gmra.mrb[0].mxu0 %v824
        %v2224 = vpop.f32.mrb[0].mxu0
        %v2225 = vadd.f32 0.0, %v2224
        %v2226 = vpop.f32.mrb[0].mxu0
        %2227 = vmatprep.mubr.f32.mxu0 0.0
        %2228 = vmatmul.mubr.f32.gmra.mrb[0].mxu0 %v827
        %v2229 = vpop.f32.mrb[0].mxu0
        %v2230 = vadd.f32 0.0, %v2229
        %v2231 = vpop.f32.mrb[0].mxu0
        %2232 = vmatprep.mubr.f32.mxu0 0.0
        %2233 = vmatmul.mubr.f32.gmra.mrb[0].mxu0 %v829
        %v2234 = vpop.f32.mrb[0].mxu0
        %v2235 = vadd.f32 0.0, %v2234
        %v2236 = vpop.f32.mrb[0].mxu0
        %2237 = vmatprep.mubr.f32.mxu0 0.0
        %2238 = vmatmul.mubr.f32.gmra.mrb[0].mxu0 %v832
        %v2239 = vpop.f32.mrb[0].mxu0
        %v2240 = vadd.f32 0.0, %v2239
        %v2241 = vpop.f32.mrb[0].mxu0
        %2242 = vmatprep.mubr.f32.mxu0 0.0
        %2243 = vmatmul.mubr.f32.gmra.mrb[0].mxu0 %v834
        %v2244 = vpop.f32.mrb[0].mxu0
        %v2245 = vadd.f32 0.0, %v2244
        %v2246 = vpop.f32.mrb[0].mxu0
        %2247 = vmatprep.mubr.f32.mxu0 0.0
        %2248 = vmatmul.mubr.f32.gmra.mrb[0].mxu0 %v837
        %v2249 = vpop.f32.mrb[0].mxu0
        %v2250 = vadd.f32 0.0, %v2249
        %v2251 = vpop.f32.mrb[0].mxu0
        %2252 = vmatprep.mubr.f32.mxu0 0.0
        %2253 = vmatmul.mubr.f32.gmra.mrb[0].mxu0 %v839
        %v2254 = vpop.f32.mrb[0].mxu0
        %v2255 = vadd.f32 0.0, %v2254
        %v2256 = vpop.f32.mrb[0].mxu0
        %2257 = vmatprep.mubr.f32.mxu0 0.0
        %2258 = vmatmul.mubr.f32.gmra.mrb[0].mxu0 %v842
        %v2259 = vpop.f32.mrb[0].mxu0
        %v2260 = vadd.f32 0.0, %v2259
        %v2261 = vpop.f32.mrb[0].mxu0
        %2262 = vmatprep.mubr.f32.mxu0 0.0
        %2263 = vmatmul.mubr.f32.gmra.mrb[0].mxu0 %v844
        %v2264 = vpop.f32.mrb[0].mxu0
        %v2265 = vadd.f32 0.0, %v2264
        %v2266 = vpop.f32.mrb[0].mxu0
        %2267 = vmatprep.mubr.f32.mxu0 0.0
        %2268 = vmatmul.mubr.f32.gmra.mrb[0].mxu0 %v847
        %v2269 = vpop.f32.mrb[0].mxu0
        %v2270 = vadd.f32 0.0, %v2269
        %v2271 = vpop.f32.mrb[0].mxu0
        %2272 = vmatprep.mubr.f32.mxu0 0.0
        %2273 = vmatmul.mubr.f32.gmra.mrb[0].mxu0 %v849
        %v2274 = vpop.f32.mrb[0].mxu0
        %v2275 = vadd.f32 0.0, %v2274
        %v2276 = vpop.f32.mrb[0].mxu0
        %2277 = vmatprep.mubr.f32.mxu0 0.0
        %2278 = vmatmul.mubr.f32.gmra.mrb[0].mxu0 %v1488
        %v2279 = vpop.f32.mrb[0].mxu0
        %v2280 = vadd.f32 0.0, %v2279
        %v2281 = vpop.f32.mrb[0].mxu0
        %2282 = vmatprep.mubr.f32.mxu0 0.0
        %2283 = vmatmul.mubr.f32.gmra.mrb[0].mxu0 %v1490
        %v2284 = vpop.f32.mrb[0].mxu0
        %v2285 = vadd.f32 0.0, %v2284
        %v2286 = vpop.f32.mrb[0].mxu0
        %2287 = vmatprep.mubr.f32.mxu0 0.0
        %2288 = vmatmul.mubr.f32.gmra.mrb[0].mxu0 %v2111
        %v2289 = vpop.f32.mrb[0].mxu0
        %v2290 = vadd.f32 0.0, %v2289
        %v2291 = vpop.f32.mrb[0].mxu0
        %2292 = vmatprep.mubr.f32.mxu0 0.0
        %2293 = vmatmul.mubr.f32.gmra.mrb[0].mxu0 %v2113
        %v2294 = vpop.f32.mrb[0].mxu0
        %v2295 = vadd.f32 0.0, %v2294
        %v2296 = vpop.f32.mrb[0].mxu0
        %2297 = vdwg.mxu0
        %v2298 = vadd.f32 %v2089, %v2200
        %v2299 = vadd.f32 %v2090, %v2205
        %v2300 = vadd.f32 %v2091, %v2210
        %v2301 = vadd.f32 %v2092, %v2215
        %v2302 = vadd.f32 %v2093, %v2220
        %v2303 = vadd.f32 %v2094, %v2225
        %v2304 = vadd.f32 %v2095, %v2230
        %v2305 = vadd.f32 %v2096, %v2235
        %v2306 = vadd.f32 %v2097, %v2240
        %v2307 = vadd.f32 %v2098, %v2245
        %v2308 = vadd.f32 %v2099, %v2250
        %v2309 = vadd.f32 %v2100, %v2255
        %v2310 = vadd.f32 %v2101, %v2260
        %v2311 = vadd.f32 %v2102, %v2265
        %v2312 = vadd.f32 %v2103, %v2270
        %v2313 = vadd.f32 %v2104, %v2275
        %v2314 = vadd.f32 %v2105, %v2280
        %v2315 = vadd.f32 %v2106, %v2285
        %v2316 = vadd.f32 %v2107, %v2290
        %v2317 = vadd.f32 %v2108, %v2295
        %v2318 = vld [vmem:[#allocation8] sm:$0x1]
        %v2320 = vlaneseq
        %v2321 = vshrl.u32 %v2320, 7
        %v2322 = vsub.s32 0, %v2321
        %v2323 = vrot.slane %v2318, %v2322
        %v2325 = vadd.f32 %v2298, %v2323
        %v2326 = vadd.f32 %v2299, %v2323
        %v2327 = vadd.f32 %v2300, %v2323
        %v2328 = vadd.f32 %v2301, %v2323
        %v2329 = vadd.f32 %v2302, %v2323
        %v2330 = vadd.f32 %v2303, %v2323
        %v2331 = vadd.f32 %v2304, %v2323
        %v2332 = vadd.f32 %v2305, %v2323
        %v2333 = vadd.f32 %v2306, %v2323
        %v2334 = vadd.f32 %v2307, %v2323
        %v2335 = vadd.f32 %v2308, %v2323
        %v2336 = vadd.f32 %v2309, %v2323
        %v2337 = vadd.f32 %v2310, %v2323
        %v2338 = vadd.f32 %v2311, %v2323
        %v2339 = vadd.f32 %v2312, %v2323
        %v2340 = vadd.f32 %v2313, %v2323
        %v2341 = vadd.f32 %v2314, %v2323
        %v2342 = vadd.f32 %v2315, %v2323
        %v2343 = vadd.f32 %v2316, %v2323
        %v2344 = vadd.f32 %v2317, %v2323
        %v2345 = vmax.f32 %v2325, 0.0
        %v2346 = vmax.f32 %v2326, 0.0
        %v2347 = vmax.f32 %v2327, 0.0
        %v2348 = vmax.f32 %v2328, 0.0
        %v2349 = vmax.f32 %v2329, 0.0
        %v2350 = vmax.f32 %v2330, 0.0
        %v2351 = vmax.f32 %v2331, 0.0
        %v2352 = vmax.f32 %v2332, 0.0
        %v2353 = vmax.f32 %v2333, 0.0
        %v2354 = vmax.f32 %v2334, 0.0
        %v2355 = vmax.f32 %v2335, 0.0
        %v2356 = vmax.f32 %v2336, 0.0
        %v2357 = vmax.f32 %v2337, 0.0
        %v2358 = vmax.f32 %v2338, 0.0
        %v2359 = vmax.f32 %v2339, 0.0
        %v2360 = vmax.f32 %v2340, 0.0
        %v2361 = vmax.f32 %v2341, 0.0
        %v2362 = vmax.f32 %v2342, 0.0
        %v2363 = vmax.f32 %v2343, 0.0
        %v2364 = vmax.f32 %v2344, 0.0
        %s2365 = ssub.s32 %s271, 1
        %v2366 = vstv %s2365
        %v2367 = vadd.s32 %v2366, 1
        %v2368 = vadd.s32 %v2366, 2
        %v2369 = vadd.s32 %v2366, 3
        %v2370 = vadd.s32 %v2366, 4
        %v2371 = vadd.s32 %v2366, 5
        %v2372 = vadd.s32 %v2366, 6
        %v2373 = vadd.s32 %v2366, 7
        %v2374 = vadd.s32 %v2366, 8
        %v2375 = vadd.s32 %v2366, 9
        %vm2376 = vcmp.ge.s32.totalorder %v2366, 0
        %vm2377 = vcmp.ge.s32.totalorder %v2367, 0
        %vm2378 = vcmp.ge.s32.totalorder %v2368, 0
        %vm2379 = vcmp.ge.s32.totalorder %v2369, 0
        %vm2380 = vcmp.ge.s32.totalorder %v2370, 0
        %vm2381 = vcmp.ge.s32.totalorder %v2371, 0
        %vm2382 = vcmp.ge.s32.totalorder %v2372, 0
        %vm2383 = vcmp.ge.s32.totalorder %v2373, 0
        %vm2384 = vcmp.ge.s32.totalorder %v2374, 0
        %vm2385 = vcmp.ge.s32.totalorder %v2375, 0
        %vm2386 = vcmp.lt.s32.totalorder %v2366, 16
        %vm2387 = vcmp.lt.s32.totalorder %v2367, 16
        %vm2388 = vcmp.lt.s32.totalorder %v2368, 16
        %vm2389 = vcmp.lt.s32.totalorder %v2369, 16
        %vm2390 = vcmp.lt.s32.totalorder %v2370, 16
        %vm2391 = vcmp.lt.s32.totalorder %v2371, 16
        %vm2392 = vcmp.lt.s32.totalorder %v2372, 16
        %vm2393 = vcmp.lt.s32.totalorder %v2373, 16
        %vm2394 = vcmp.lt.s32.totalorder %v2374, 16
        %vm2395 = vcmp.lt.s32.totalorder %v2375, 16
        %vm2396 = vmand %vm2376, %vm2386
        %vm2397 = vmand %vm2377, %vm2387
        %vm2398 = vmand %vm2378, %vm2388
        %vm2399 = vmand %vm2379, %vm2389
        %vm2400 = vmand %vm2380, %vm2390
        %vm2401 = vmand %vm2381, %vm2391
        %vm2402 = vmand %vm2382, %vm2392
        %vm2403 = vmand %vm2383, %vm2393
        %vm2404 = vmand %vm2384, %vm2394
        %vm2405 = vmand %vm2385, %vm2395
        %v2406 = vsel %vm2396, 1, 0
        %v2407 = vsel %vm2397, 1, 0
        %v2408 = vsel %vm2398, 1, 0
        %v2409 = vsel %vm2399, 1, 0
        %v2410 = vsel %vm2400, 1, 0
        %v2411 = vsel %vm2401, 1, 0
        %v2412 = vsel %vm2402, 1, 0
        %v2413 = vsel %vm2403, 1, 0
        %v2414 = vsel %vm2404, 1, 0
        %v2415 = vsel %vm2405, 1, 0
        %vm2416 = vcmp.eq.s32.totalorder %v2406, 1
        %vm2417 = vcmp.eq.s32.totalorder %v2407, 1
        %vm2418 = vcmp.eq.s32.totalorder %v2408, 1
        %vm2419 = vcmp.eq.s32.totalorder %v2409, 1
        %vm2420 = vcmp.eq.s32.totalorder %v2410, 1
        %vm2421 = vcmp.eq.s32.totalorder %v2411, 1
        %vm2422 = vcmp.eq.s32.totalorder %v2412, 1
        %vm2423 = vcmp.eq.s32.totalorder %v2413, 1
        %vm2424 = vcmp.eq.s32.totalorder %v2414, 1
        %vm2425 = vcmp.eq.s32.totalorder %v2415, 1
        %v2426 = vsel %vm2416, %v2345, 0.0
        %v2427 = vsel %vm2416, %v2346, 0.0
        %v2428 = vsel %vm2417, %v2347, 0.0
        %v2429 = vsel %vm2417, %v2348, 0.0
        %v2430 = vsel %vm2418, %v2349, 0.0
        %v2431 = vsel %vm2418, %v2350, 0.0
        %v2432 = vsel %vm2419, %v2351, 0.0
        %v2433 = vsel %vm2419, %v2352, 0.0
        %v2434 = vsel %vm2420, %v2353, 0.0
        %v2435 = vsel %vm2420, %v2354, 0.0
        %v2436 = vsel %vm2421, %v2355, 0.0
        %v2437 = vsel %vm2421, %v2356, 0.0
        %v2438 = vsel %vm2422, %v2357, 0.0
        %v2439 = vsel %vm2422, %v2358, 0.0
        %v2440 = vsel %vm2423, %v2359, 0.0
        %v2441 = vsel %vm2423, %v2360, 0.0
        %v2442 = vsel %vm2424, %v2361, 0.0
        %v2443 = vsel %vm2424, %v2362, 0.0
        %v2444 = vsel %vm2425, %v2363, 0.0
        %v2445 = vsel %vm2425, %v2364, 0.0
        %2446 = vst [vmem:[#allocation4] sm:$0x1] 0.0
        %2447 = vst [vmem:[#allocation4 + $0x18] sm:$0x1] 0.0
        %2448 = vst [vmem:[#allocation4 + $0x30] sm:$0x1] 0.0
        %2449 = vst [vmem:[#allocation4 + $0x48] sm:$0x1] 0.0
        %2450 = vst [vmem:[#allocation4 + $0x60] sm:$0x1] 0.0
        %2451 = vst [vmem:[#allocation4 + $0x78] sm:$0x1] 0.0
        %2452 = vst [vmem:[#allocation4 + $0x90] sm:$0x1] 0.0
        %2453 = vst [vmem:[#allocation4 + $0xa8] sm:$0x1] 0.0
        %2454 = vst [vmem:[#allocation4 + $0xc0] sm:$0x1] 0.0
        %2455 = vst [vmem:[#allocation4 + $0xd8] sm:$0x1] 0.0
        %2456 = vst [vmem:[#allocation4 + $0x11] sm:$0x1] 0.0
        %2457 = vst [vmem:[#allocation4 + $0x29] sm:$0x1] 0.0
        %2458 = vst [vmem:[#allocation4 + $0x41] sm:$0x1] 0.0
        %2459 = vst [vmem:[#allocation4 + $0x59] sm:$0x1] 0.0
        %2460 = vst [vmem:[#allocation4 + $0x71] sm:$0x1] 0.0
        %2461 = vst [vmem:[#allocation4 + $0x89] sm:$0x1] 0.0
        %2462 = vst [vmem:[#allocation4 + $0xa1] sm:$0x1] 0.0
        %2463 = vst [vmem:[#allocation4 + $0xb9] sm:$0x1] 0.0
        %2464 = vst [vmem:[#allocation4 + $0xd1] sm:$0x1] 0.0
        %2465 = vst [vmem:[#allocation4 + $0xe9] sm:$0x1] 0.0
        %2466 = vst [vmem:[#allocation4 + $0x1] sm:$0xff] %v2426
        %2467 = vst [vmem:[#allocation4 + $0x9] sm:$0xff] %v2427
        %2468 = vst [vmem:[#allocation4 + $0x19] sm:$0xff] %v2428
        %2469 = vst [vmem:[#allocation4 + $0x21] sm:$0xff] %v2429
        %2470 = vst [vmem:[#allocation4 + $0x31] sm:$0xff] %v2430
        %2471 = vst [vmem:[#allocation4 + $0x39] sm:$0xff] %v2431
        %2472 = vst [vmem:[#allocation4 + $0x49] sm:$0xff] %v2432
        %2473 = vst [vmem:[#allocation4 + $0x51] sm:$0xff] %v2433
        %2474 = vst [vmem:[#allocation4 + $0x61] sm:$0xff] %v2434
        %2475 = vst [vmem:[#allocation4 + $0x69] sm:$0xff] %v2435
        %2476 = vst [vmem:[#allocation4 + $0x79] sm:$0xff] %v2436
        %2477 = vst [vmem:[#allocation4 + $0x81] sm:$0xff] %v2437
        %2478 = vst [vmem:[#allocation4 + $0x91] sm:$0xff] %v2438
        %2479 = vst [vmem:[#allocation4 + $0x99] sm:$0xff] %v2439
        %2480 = vst [vmem:[#allocation4 + $0xa9] sm:$0xff] %v2440
        %2481 = vst [vmem:[#allocation4 + $0xb1] sm:$0xff] %v2441
        %2482 = vst [vmem:[#allocation4 + $0xc1] sm:$0xff] %v2442
        %2483 = vst [vmem:[#allocation4 + $0xc9] sm:$0xff] %v2443
        %2484 = vst [vmem:[#allocation4 + $0xd9] sm:$0xff] %v2444
        %2485 = vst [vmem:[#allocation4 + $0xe1] sm:$0xff] %v2445
        %v2486 = vld [vmem:[#allocation4] sm:$0xff]
        %v2487 = vld [vmem:[#allocation4 + $0x8] sm:$0xff]
        %v2488 = vld [vmem:[#allocation4 + $0x18] sm:$0xff]
        %v2489 = vld [vmem:[#allocation4 + $0x20] sm:$0xff]
        %v2490 = vld [vmem:[#allocation4 + $0x30] sm:$0xff]
        %v2491 = vld [vmem:[#allocation4 + $0x38] sm:$0xff]
        %v2492 = vld [vmem:[#allocation4 + $0x48] sm:$0xff]
        %v2493 = vld [vmem:[#allocation4 + $0x50] sm:$0xff]
        %v2494 = vld [vmem:[#allocation4 + $0x60] sm:$0xff]
        %v2495 = vld [vmem:[#allocation4 + $0x68] sm:$0xff]
        %v2496 = vld [vmem:[#allocation4 + $0x78] sm:$0xff]
        %v2497 = vld [vmem:[#allocation4 + $0x80] sm:$0xff]
        %v2498 = vld [vmem:[#allocation4 + $0x90] sm:$0xff]
        %v2499 = vld [vmem:[#allocation4 + $0x98] sm:$0xff]
        %v2500 = vld [vmem:[#allocation4 + $0xa8] sm:$0xff]
        %v2501 = vld [vmem:[#allocation4 + $0xb0] sm:$0xff]
        %v2502 = vld [vmem:[#allocation10] sm:$0xff]
        %v2503 = vld [vmem:[#allocation10 + $0x8] sm:$0xff]
        %v2504 = vld [vmem:[#allocation10 + $0x10] sm:$0xff]
        %v2505 = vld [vmem:[#allocation10 + $0x18] sm:$0xff]
        %v2506 = vld [vmem:[#allocation10 + $0x20] sm:$0xff]
        %v2507 = vld [vmem:[#allocation10 + $0x28] sm:$0xff]
        %v2508 = vld [vmem:[#allocation10 + $0x30] sm:$0xff]
        %v2509 = vld [vmem:[#allocation10 + $0x38] sm:$0xff]
        %v2510 = vld [vmem:[#allocation10 + $0x40] sm:$0xff]
        %v2511 = vld [vmem:[#allocation10 + $0x48] sm:$0xff]
        %v2512 = vld [vmem:[#allocation10 + $0x50] sm:$0xff]
        %v2513 = vld [vmem:[#allocation10 + $0x58] sm:$0xff]
        %v2514 = vld [vmem:[#allocation10 + $0x60] sm:$0xff]
        %v2515 = vld [vmem:[#allocation10 + $0x68] sm:$0xff]
        %v2516 = vld [vmem:[#allocation10 + $0x70] sm:$0xff]
        %v2517 = vld [vmem:[#allocation10 + $0x78] sm:$0xff]
        %v2518 = vld [vmem:[#allocation4 + $0x1] sm:$0xff]
        %v2519 = vld [vmem:[#allocation4 + $0x9] sm:$0xff]
        %v2520 = vld [vmem:[#allocation4 + $0x19] sm:$0xff]
        %v2521 = vld [vmem:[#allocation4 + $0x21] sm:$0xff]
        %v2522 = vld [vmem:[#allocation4 + $0x31] sm:$0xff]
        %v2523 = vld [vmem:[#allocation4 + $0x39] sm:$0xff]
        %v2524 = vld [vmem:[#allocation4 + $0x49] sm:$0xff]
        %v2525 = vld [vmem:[#allocation4 + $0x51] sm:$0xff]
        %v2526 = vld [vmem:[#allocation4 + $0x61] sm:$0xff]
        %v2527 = vld [vmem:[#allocation4 + $0x69] sm:$0xff]
        %v2528 = vld [vmem:[#allocation4 + $0x79] sm:$0xff]
        %v2529 = vld [vmem:[#allocation4 + $0x81] sm:$0xff]
        %v2530 = vld [vmem:[#allocation4 + $0x91] sm:$0xff]
        %v2531 = vld [vmem:[#allocation4 + $0x99] sm:$0xff]
        %v2532 = vld [vmem:[#allocation4 + $0xa9] sm:$0xff]
        %v2533 = vld [vmem:[#allocation4 + $0xb1] sm:$0xff]
        %s2534 = scalar_lea.vmem [#allocation10], 128
        %v2535 = vld [vmem:[%s2534] sm:$0xff]
        %v2536 = vld [vmem:[%s2534 + $0x8] sm:$0xff]
        %v2537 = vld [vmem:[%s2534 + $0x10] sm:$0xff]
        %v2538 = vld [vmem:[%s2534 + $0x18] sm:$0xff]
        %v2539 = vld [vmem:[%s2534 + $0x20] sm:$0xff]
        %v2540 = vld [vmem:[%s2534 + $0x28] sm:$0xff]
        %v2541 = vld [vmem:[%s2534 + $0x30] sm:$0xff]
        %v2542 = vld [vmem:[%s2534 + $0x38] sm:$0xff]
        %v2543 = vld [vmem:[%s2534 + $0x40] sm:$0xff]
        %v2544 = vld [vmem:[%s2534 + $0x48] sm:$0xff]
        %v2545 = vld [vmem:[%s2534 + $0x50] sm:$0xff]
        %v2546 = vld [vmem:[%s2534 + $0x58] sm:$0xff]
        %v2547 = vld [vmem:[%s2534 + $0x60] sm:$0xff]
        %v2548 = vld [vmem:[%s2534 + $0x68] sm:$0xff]
        %v2549 = vld [vmem:[%s2534 + $0x70] sm:$0xff]
        %v2550 = vld [vmem:[%s2534 + $0x78] sm:$0xff]
        %2551 = vmatprep.subr.mxu0 0.0
        %2552 = vmatpush1.msra.mxu0 %v2535
        %2553 = vmatprep.subr.mxu0 0.0
        %2554 = vmatpush1.msra.mxu0 %v2536
        %2555 = vmatprep.subr.mxu0 0.0
        %2556 = vmatpush1.msra.mxu0 %v2537
        %2557 = vmatprep.subr.mxu0 0.0
        %2558 = vmatpush1.msra.mxu0 %v2538
        %2559 = vmatprep.subr.mxu0 0.0
        %2560 = vmatpush1.msra.mxu0 %v2539
        %2561 = vmatprep.subr.mxu0 0.0
        %2562 = vmatpush1.msra.mxu0 %v2540
        %2563 = vmatprep.subr.mxu0 0.0
        %2564 = vmatpush1.msra.mxu0 %v2541
        %2565 = vmatprep.subr.mxu0 0.0
        %2566 = vmatpush1.msra.mxu0 %v2542
        %2567 = vmatprep.subr.mxu0 0.0
        %2568 = vmatpush1.msra.mxu0 %v2543
        %2569 = vmatprep.subr.mxu0 0.0
        %2570 = vmatpush1.msra.mxu0 %v2544
        %2571 = vmatprep.subr.mxu0 0.0
        %2572 = vmatpush1.msra.mxu0 %v2545
        %2573 = vmatprep.subr.mxu0 0.0
        %2574 = vmatpush1.msra.mxu0 %v2546
        %2575 = vmatprep.subr.mxu0 0.0
        %2576 = vmatpush1.msra.mxu0 %v2547
        %2577 = vmatprep.subr.mxu0 0.0
        %2578 = vmatpush1.msra.mxu0 %v2548
        %2579 = vmatprep.subr.mxu0 0.0
        %2580 = vmatpush1.msra.mxu0 %v2549
        %2581 = vmatprep.subr.mxu0 0.0
        %2582 = vmatpush1.msra.mxu0 %v2550
        %2583 = vmatprep.subr.mxu0 0.0
        %2584 = vmatpush1.msra.mxu0 0.0
        %2585 = vmatprep.subr.mxu0 0.0
        %2586 = vmatpush1.msra.mxu0 0.0
        %2587 = vmatprep.subr.mxu0 0.0
        %2588 = vmatpush1.msra.mxu0 0.0
        %2589 = vmatprep.subr.mxu0 0.0
        %2590 = vmatpush1.msra.mxu0 0.0
        %2591 = vmatprep.subr.mxu0 0.0
        %2592 = vmatpush1.msra.mxu0 0.0
        %2593 = vmatprep.subr.mxu0 0.0
        %2594 = vmatpush1.msra.mxu0 0.0
        %2595 = vmatprep.subr.mxu0 0.0
        %2596 = vmatpush1.msra.mxu0 0.0
        %2597 = vmatprep.subr.mxu0 0.0
        %2598 = vmatpush1.msra.mxu0 0.0
        %2599 = vmatprep.subr.mxu0 0.0
        %2600 = vmatpush1.msra.mxu0 0.0
        %2601 = vmatprep.subr.mxu0 0.0
        %2602 = vmatpush1.msra.mxu0 0.0
        %2603 = vmatprep.subr.mxu0 0.0
        %2604 = vmatpush1.msra.mxu0 0.0
        %2605 = vmatprep.subr.mxu0 0.0
        %2606 = vmatpush1.msra.mxu0 0.0
        %2607 = vmatprep.subr.mxu0 0.0
        %2608 = vmatpush1.msra.mxu0 0.0
        %2609 = vmatprep.subr.mxu0 0.0
        %2610 = vmatpush1.msra.mxu0 0.0
        %2611 = vmatprep.subr.mxu0 0.0
        %2612 = vmatpush1.msra.mxu0 0.0
        %2613 = vmatprep.subr.mxu0 0.0
        %2614 = vmatpush1.msra.mxu0 0.0
        %2615 = vmatprep.mubr.f32.mxu0 0.0
        %2616 = vmatmul.mubr.f32.gmra.mrb[0].mxu0 %v2518
        %v2617 = vpop.f32.mrb[0].mxu0
        %v2618 = vadd.f32 0.0, %v2617
        %v2619 = vpop.f32.mrb[0].mxu0
        %2620 = vmatprep.mubr.f32.mxu0 0.0
        %2621 = vmatmul.mubr.f32.gmra.mrb[0].mxu0 %v2519
        %v2622 = vpop.f32.mrb[0].mxu0
        %v2623 = vadd.f32 0.0, %v2622
        %v2624 = vpop.f32.mrb[0].mxu0
        %2625 = vmatprep.mubr.f32.mxu0 0.0
        %2626 = vmatmul.mubr.f32.gmra.mrb[0].mxu0 %v2520
        %v2627 = vpop.f32.mrb[0].mxu0
        %v2628 = vadd.f32 0.0, %v2627
        %v2629 = vpop.f32.mrb[0].mxu0
        %2630 = vmatprep.mubr.f32.mxu0 0.0
        %2631 = vmatmul.mubr.f32.gmra.mrb[0].mxu0 %v2521
        %v2632 = vpop.f32.mrb[0].mxu0
        %v2633 = vadd.f32 0.0, %v2632
        %v2634 = vpop.f32.mrb[0].mxu0
        %2635 = vmatprep.mubr.f32.mxu0 0.0
        %2636 = vmatmul.mubr.f32.gmra.mrb[0].mxu0 %v2522
        %v2637 = vpop.f32.mrb[0].mxu0
        %v2638 = vadd.f32 0.0, %v2637
        %v2639 = vpop.f32.mrb[0].mxu0
        %2640 = vmatprep.mubr.f32.mxu0 0.0
        %2641 = vmatmul.mubr.f32.gmra.mrb[0].mxu0 %v2523
        %v2642 = vpop.f32.mrb[0].mxu0
        %v2643 = vadd.f32 0.0, %v2642
        %v2644 = vpop.f32.mrb[0].mxu0
        %2645 = vmatprep.mubr.f32.mxu0 0.0
        %2646 = vmatmul.mubr.f32.gmra.mrb[0].mxu0 %v2524
        %v2647 = vpop.f32.mrb[0].mxu0
        %v2648 = vadd.f32 0.0, %v2647
        %v2649 = vpop.f32.mrb[0].mxu0
        %2650 = vmatprep.mubr.f32.mxu0 0.0
        %2651 = vmatmul.mubr.f32.gmra.mrb[0].mxu0 %v2525
        %v2652 = vpop.f32.mrb[0].mxu0
        %v2653 = vadd.f32 0.0, %v2652
        %v2654 = vpop.f32.mrb[0].mxu0
        %2655 = vmatprep.mubr.f32.mxu0 0.0
        %2656 = vmatmul.mubr.f32.gmra.mrb[0].mxu0 %v2526
        %v2657 = vpop.f32.mrb[0].mxu0
        %v2658 = vadd.f32 0.0, %v2657
        %v2659 = vpop.f32.mrb[0].mxu0
        %2660 = vmatprep.mubr.f32.mxu0 0.0
        %2661 = vmatmul.mubr.f32.gmra.mrb[0].mxu0 %v2527
        %v2662 = vpop.f32.mrb[0].mxu0
        %v2663 = vadd.f32 0.0, %v2662
        %v2664 = vpop.f32.mrb[0].mxu0
        %2665 = vmatprep.mubr.f32.mxu0 0.0
        %2666 = vmatmul.mubr.f32.gmra.mrb[0].mxu0 %v2528
        %v2667 = vpop.f32.mrb[0].mxu0
        %v2668 = vadd.f32 0.0, %v2667
        %v2669 = vpop.f32.mrb[0].mxu0
        %2670 = vmatprep.mubr.f32.mxu0 0.0
        %2671 = vmatmul.mubr.f32.gmra.mrb[0].mxu0 %v2529
        %v2672 = vpop.f32.mrb[0].mxu0
        %v2673 = vadd.f32 0.0, %v2672
        %v2674 = vpop.f32.mrb[0].mxu0
        %2675 = vmatprep.mubr.f32.mxu0 0.0
        %2676 = vmatmul.mubr.f32.gmra.mrb[0].mxu0 %v2530
        %v2677 = vpop.f32.mrb[0].mxu0
        %v2678 = vadd.f32 0.0, %v2677
        %v2679 = vpop.f32.mrb[0].mxu0
        %2680 = vmatprep.mubr.f32.mxu0 0.0
        %2681 = vmatmul.mubr.f32.gmra.mrb[0].mxu0 %v2531
        %v2682 = vpop.f32.mrb[0].mxu0
        %v2683 = vadd.f32 0.0, %v2682
        %v2684 = vpop.f32.mrb[0].mxu0
        %2685 = vmatprep.mubr.f32.mxu0 0.0
        %2686 = vmatmul.mubr.f32.gmra.mrb[0].mxu0 %v2532
        %v2687 = vpop.f32.mrb[0].mxu0
        %v2688 = vadd.f32 0.0, %v2687
        %v2689 = vpop.f32.mrb[0].mxu0
        %2690 = vmatprep.mubr.f32.mxu0 0.0
        %2691 = vmatmul.mubr.f32.gmra.mrb[0].mxu0 %v2533
        %v2692 = vpop.f32.mrb[0].mxu0
        %v2693 = vadd.f32 0.0, %v2692
        %v2694 = vpop.f32.mrb[0].mxu0
        %2695 = vdwg.mxu0
        %2696 = vmatprep.subr.mxu0 0.0
        %2697 = vmatpush1.msra.mxu0 %v2502
        %2698 = vmatprep.subr.mxu0 0.0
        %2699 = vmatpush1.msra.mxu0 %v2503
        %2700 = vmatprep.subr.mxu0 0.0
        %2701 = vmatpush1.msra.mxu0 %v2504
        %2702 = vmatprep.subr.mxu0 0.0
        %2703 = vmatpush1.msra.mxu0 %v2505
        %2704 = vmatprep.subr.mxu0 0.0
        %2705 = vmatpush1.msra.mxu0 %v2506
        %2706 = vmatprep.subr.mxu0 0.0
        %2707 = vmatpush1.msra.mxu0 %v2507
        %2708 = vmatprep.subr.mxu0 0.0
        %2709 = vmatpush1.msra.mxu0 %v2508
        %2710 = vmatprep.subr.mxu0 0.0
        %2711 = vmatpush1.msra.mxu0 %v2509
        %2712 = vmatprep.subr.mxu0 0.0
        %2713 = vmatpush1.msra.mxu0 %v2510
        %2714 = vmatprep.subr.mxu0 0.0
        %2715 = vmatpush1.msra.mxu0 %v2511
        %2716 = vmatprep.subr.mxu0 0.0
        %2717 = vmatpush1.msra.mxu0 %v2512
        %2718 = vmatprep.subr.mxu0 0.0
        %2719 = vmatpush1.msra.mxu0 %v2513
        %2720 = vmatprep.subr.mxu0 0.0
        %2721 = vmatpush1.msra.mxu0 %v2514
        %2722 = vmatprep.subr.mxu0 0.0
        %2723 = vmatpush1.msra.mxu0 %v2515
        %2724 = vmatprep.subr.mxu0 0.0
        %2725 = vmatpush1.msra.mxu0 %v2516
        %2726 = vmatprep.subr.mxu0 0.0
        %2727 = vmatpush1.msra.mxu0 %v2517
        %2728 = vmatprep.subr.mxu0 0.0
        %2729 = vmatpush1.msra.mxu0 0.0
        %2730 = vmatprep.subr.mxu0 0.0
        %2731 = vmatpush1.msra.mxu0 0.0
        %2732 = vmatprep.subr.mxu0 0.0
        %2733 = vmatpush1.msra.mxu0 0.0
        %2734 = vmatprep.subr.mxu0 0.0
        %2735 = vmatpush1.msra.mxu0 0.0
        %2736 = vmatprep.subr.mxu0 0.0
        %2737 = vmatpush1.msra.mxu0 0.0
        %2738 = vmatprep.subr.mxu0 0.0
        %2739 = vmatpush1.msra.mxu0 0.0
        %2740 = vmatprep.subr.mxu0 0.0
        %2741 = vmatpush1.msra.mxu0 0.0
        %2742 = vmatprep.subr.mxu0 0.0
        %2743 = vmatpush1.msra.mxu0 0.0
        %2744 = vmatprep.subr.mxu0 0.0
        %2745 = vmatpush1.msra.mxu0 0.0
        %2746 = vmatprep.subr.mxu0 0.0
        %2747 = vmatpush1.msra.mxu0 0.0
        %2748 = vmatprep.subr.mxu0 0.0
        %2749 = vmatpush1.msra.mxu0 0.0
        %2750 = vmatprep.subr.mxu0 0.0
        %2751 = vmatpush1.msra.mxu0 0.0
        %2752 = vmatprep.subr.mxu0 0.0
        %2753 = vmatpush1.msra.mxu0 0.0
        %2754 = vmatprep.subr.mxu0 0.0
        %2755 = vmatpush1.msra.mxu0 0.0
        %2756 = vmatprep.subr.mxu0 0.0
        %2757 = vmatpush1.msra.mxu0 0.0
        %2758 = vmatprep.subr.mxu0 0.0
        %2759 = vmatpush1.msra.mxu0 0.0
        %2760 = vmatprep.mubr.f32.mxu0 0.0
        %2761 = vmatmul.mubr.f32.gmra.mrb[0].mxu0 %v2486
        %v2762 = vpop.f32.mrb[0].mxu0
        %v2763 = vadd.f32 %v2618, %v2762
        %v2764 = vpop.f32.mrb[0].mxu0
        %2765 = vmatprep.mubr.f32.mxu0 0.0
        %2766 = vmatmul.mubr.f32.gmra.mrb[0].mxu0 %v2487
        %v2767 = vpop.f32.mrb[0].mxu0
        %v2768 = vadd.f32 %v2623, %v2767
        %v2769 = vpop.f32.mrb[0].mxu0
        %2770 = vmatprep.mubr.f32.mxu0 0.0
        %2771 = vmatmul.mubr.f32.gmra.mrb[0].mxu0 %v2488
        %v2772 = vpop.f32.mrb[0].mxu0
        %v2773 = vadd.f32 %v2628, %v2772
        %v2774 = vpop.f32.mrb[0].mxu0
        %2775 = vmatprep.mubr.f32.mxu0 0.0
        %2776 = vmatmul.mubr.f32.gmra.mrb[0].mxu0 %v2489
        %v2777 = vpop.f32.mrb[0].mxu0
        %v2778 = vadd.f32 %v2633, %v2777
        %v2779 = vpop.f32.mrb[0].mxu0
        %2780 = vmatprep.mubr.f32.mxu0 0.0
        %2781 = vmatmul.mubr.f32.gmra.mrb[0].mxu0 %v2490
        %v2782 = vpop.f32.mrb[0].mxu0
        %v2783 = vadd.f32 %v2638, %v2782
        %v2784 = vpop.f32.mrb[0].mxu0
        %2785 = vmatprep.mubr.f32.mxu0 0.0
        %2786 = vmatmul.mubr.f32.gmra.mrb[0].mxu0 %v2491
        %v2787 = vpop.f32.mrb[0].mxu0
        %v2788 = vadd.f32 %v2643, %v2787
        %v2789 = vpop.f32.mrb[0].mxu0
        %2790 = vmatprep.mubr.f32.mxu0 0.0
        %2791 = vmatmul.mubr.f32.gmra.mrb[0].mxu0 %v2492
        %v2792 = vpop.f32.mrb[0].mxu0
        %v2793 = vadd.f32 %v2648, %v2792
        %v2794 = vpop.f32.mrb[0].mxu0
        %2795 = vmatprep.mubr.f32.mxu0 0.0
        %2796 = vmatmul.mubr.f32.gmra.mrb[0].mxu0 %v2493
        %v2797 = vpop.f32.mrb[0].mxu0
        %v2798 = vadd.f32 %v2653, %v2797
        %v2799 = vpop.f32.mrb[0].mxu0
        %2800 = vmatprep.mubr.f32.mxu0 0.0
        %2801 = vmatmul.mubr.f32.gmra.mrb[0].mxu0 %v2494
        %v2802 = vpop.f32.mrb[0].mxu0
        %v2803 = vadd.f32 %v2658, %v2802
        %v2804 = vpop.f32.mrb[0].mxu0
        %2805 = vmatprep.mubr.f32.mxu0 0.0
        %2806 = vmatmul.mubr.f32.gmra.mrb[0].mxu0 %v2495
        %v2807 = vpop.f32.mrb[0].mxu0
        %v2808 = vadd.f32 %v2663, %v2807
        %v2809 = vpop.f32.mrb[0].mxu0
        %2810 = vmatprep.mubr.f32.mxu0 0.0
        %2811 = vmatmul.mubr.f32.gmra.mrb[0].mxu0 %v2496
        %v2812 = vpop.f32.mrb[0].mxu0
        %v2813 = vadd.f32 %v2668, %v2812
        %v2814 = vpop.f32.mrb[0].mxu0
        %2815 = vmatprep.mubr.f32.mxu0 0.0
        %2816 = vmatmul.mubr.f32.gmra.mrb[0].mxu0 %v2497
        %v2817 = vpop.f32.mrb[0].mxu0
        %v2818 = vadd.f32 %v2673, %v2817
        %v2819 = vpop.f32.mrb[0].mxu0
        %2820 = vmatprep.mubr.f32.mxu0 0.0
        %2821 = vmatmul.mubr.f32.gmra.mrb[0].mxu0 %v2498
        %v2822 = vpop.f32.mrb[0].mxu0
        %v2823 = vadd.f32 %v2678, %v2822
        %v2824 = vpop.f32.mrb[0].mxu0
        %2825 = vmatprep.mubr.f32.mxu0 0.0
        %2826 = vmatmul.mubr.f32.gmra.mrb[0].mxu0 %v2499
        %v2827 = vpop.f32.mrb[0].mxu0
        %v2828 = vadd.f32 %v2683, %v2827
        %v2829 = vpop.f32.mrb[0].mxu0
        %2830 = vmatprep.mubr.f32.mxu0 0.0
        %2831 = vmatmul.mubr.f32.gmra.mrb[0].mxu0 %v2500
        %v2832 = vpop.f32.mrb[0].mxu0
        %v2833 = vadd.f32 %v2688, %v2832
        %v2834 = vpop.f32.mrb[0].mxu0
        %2835 = vmatprep.mubr.f32.mxu0 0.0
        %2836 = vmatmul.mubr.f32.gmra.mrb[0].mxu0 %v2501
        %v2837 = vpop.f32.mrb[0].mxu0
        %v2838 = vadd.f32 %v2693, %v2837
        %v2839 = vpop.f32.mrb[0].mxu0
        %2840 = vdwg.mxu0
        %v2841 = vld [vmem:[#allocation4 + $0x2] sm:$0xff]
        %v2842 = vld [vmem:[#allocation4 + $0xa] sm:$0xff]
        %v2843 = vld [vmem:[#allocation4 + $0x1a] sm:$0xff]
        %v2844 = vld [vmem:[#allocation4 + $0x22] sm:$0xff]
        %v2845 = vld [vmem:[#allocation4 + $0x32] sm:$0xff]
        %v2846 = vld [vmem:[#allocation4 + $0x3a] sm:$0xff]
        %v2847 = vld [vmem:[#allocation4 + $0x4a] sm:$0xff]
        %v2848 = vld [vmem:[#allocation4 + $0x52] sm:$0xff]
        %v2849 = vld [vmem:[#allocation4 + $0x62] sm:$0xff]
        %v2850 = vld [vmem:[#allocation4 + $0x6a] sm:$0xff]
        %v2851 = vld [vmem:[#allocation4 + $0x7a] sm:$0xff]
        %v2852 = vld [vmem:[#allocation4 + $0x82] sm:$0xff]
        %v2853 = vld [vmem:[#allocation4 + $0x92] sm:$0xff]
        %v2854 = vld [vmem:[#allocation4 + $0x9a] sm:$0xff]
        %v2855 = vld [vmem:[#allocation4 + $0xaa] sm:$0xff]
        %v2856 = vld [vmem:[#allocation4 + $0xb2] sm:$0xff]
        %s2857 = scalar_lea.vmem [#allocation10], 256
        %v2858 = vld [vmem:[%s2857] sm:$0xff]
        %v2859 = vld [vmem:[%s2857 + $0x8] sm:$0xff]
        %v2860 = vld [vmem:[%s2857 + $0x10] sm:$0xff]
        %v2861 = vld [vmem:[%s2857 + $0x18] sm:$0xff]
        %v2862 = vld [vmem:[%s2857 + $0x20] sm:$0xff]
        %v2863 = vld [vmem:[%s2857 + $0x28] sm:$0xff]
        %v2864 = vld [vmem:[%s2857 + $0x30] sm:$0xff]
        %v2865 = vld [vmem:[%s2857 + $0x38] sm:$0xff]
        %v2866 = vld [vmem:[%s2857 + $0x40] sm:$0xff]
        %v2867 = vld [vmem:[%s2857 + $0x48] sm:$0xff]
        %v2868 = vld [vmem:[%s2857 + $0x50] sm:$0xff]
        %v2869 = vld [vmem:[%s2857 + $0x58] sm:$0xff]
        %v2870 = vld [vmem:[%s2857 + $0x60] sm:$0xff]
        %v2871 = vld [vmem:[%s2857 + $0x68] sm:$0xff]
        %v2872 = vld [vmem:[%s2857 + $0x70] sm:$0xff]
        %v2873 = vld [vmem:[%s2857 + $0x78] sm:$0xff]
        %2874 = vmatprep.subr.mxu0 0.0
        %2875 = vmatpush1.msra.mxu0 %v2858
        %2876 = vmatprep.subr.mxu0 0.0
        %2877 = vmatpush1.msra.mxu0 %v2859
        %2878 = vmatprep.subr.mxu0 0.0
        %2879 = vmatpush1.msra.mxu0 %v2860
        %2880 = vmatprep.subr.mxu0 0.0
        %2881 = vmatpush1.msra.mxu0 %v2861
        %2882 = vmatprep.subr.mxu0 0.0
        %2883 = vmatpush1.msra.mxu0 %v2862
        %2884 = vmatprep.subr.mxu0 0.0
        %2885 = vmatpush1.msra.mxu0 %v2863
        %2886 = vmatprep.subr.mxu0 0.0
        %2887 = vmatpush1.msra.mxu0 %v2864
        %2888 = vmatprep.subr.mxu0 0.0
        %2889 = vmatpush1.msra.mxu0 %v2865
        %2890 = vmatprep.subr.mxu0 0.0
        %2891 = vmatpush1.msra.mxu0 %v2866
        %2892 = vmatprep.subr.mxu0 0.0
        %2893 = vmatpush1.msra.mxu0 %v2867
        %2894 = vmatprep.subr.mxu0 0.0
        %2895 = vmatpush1.msra.mxu0 %v2868
        %2896 = vmatprep.subr.mxu0 0.0
        %2897 = vmatpush1.msra.mxu0 %v2869
        %2898 = vmatprep.subr.mxu0 0.0
        %2899 = vmatpush1.msra.mxu0 %v2870
        %2900 = vmatprep.subr.mxu0 0.0
        %2901 = vmatpush1.msra.mxu0 %v2871
        %2902 = vmatprep.subr.mxu0 0.0
        %2903 = vmatpush1.msra.mxu0 %v2872
        %2904 = vmatprep.subr.mxu0 0.0
        %2905 = vmatpush1.msra.mxu0 %v2873
        %2906 = vmatprep.subr.mxu0 0.0
        %2907 = vmatpush1.msra.mxu0 0.0
        %2908 = vmatprep.subr.mxu0 0.0
        %2909 = vmatpush1.msra.mxu0 0.0
        %2910 = vmatprep.subr.mxu0 0.0
        %2911 = vmatpush1.msra.mxu0 0.0
        %2912 = vmatprep.subr.mxu0 0.0
        %2913 = vmatpush1.msra.mxu0 0.0
        %2914 = vmatprep.subr.mxu0 0.0
        %2915 = vmatpush1.msra.mxu0 0.0
        %2916 = vmatprep.subr.mxu0 0.0
        %2917 = vmatpush1.msra.mxu0 0.0
        %2918 = vmatprep.subr.mxu0 0.0
        %2919 = vmatpush1.msra.mxu0 0.0
        %2920 = vmatprep.subr.mxu0 0.0
        %2921 = vmatpush1.msra.mxu0 0.0
        %2922 = vmatprep.subr.mxu0 0.0
        %2923 = vmatpush1.msra.mxu0 0.0
        %2924 = vmatprep.subr.mxu0 0.0
        %2925 = vmatpush1.msra.mxu0 0.0
        %2926 = vmatprep.subr.mxu0 0.0
        %2927 = vmatpush1.msra.mxu0 0.0
        %2928 = vmatprep.subr.mxu0 0.0
        %2929 = vmatpush1.msra.mxu0 0.0
        %2930 = vmatprep.subr.mxu0 0.0
        %2931 = vmatpush1.msra.mxu0 0.0
        %2932 = vmatprep.subr.mxu0 0.0
        %2933 = vmatpush1.msra.mxu0 0.0
        %2934 = vmatprep.subr.mxu0 0.0
        %2935 = vmatpush1.msra.mxu0 0.0
        %2936 = vmatprep.subr.mxu0 0.0
        %2937 = vmatpush1.msra.mxu0 0.0
        %2938 = vmatprep.mubr.f32.mxu0 0.0
        %2939 = vmatmul.mubr.f32.gmra.mrb[0].mxu0 %v2841
        %v2940 = vpop.f32.mrb[0].mxu0
        %v2941 = vadd.f32 0.0, %v2940
        %v2942 = vpop.f32.mrb[0].mxu0
        %2943 = vmatprep.mubr.f32.mxu0 0.0
        %2944 = vmatmul.mubr.f32.gmra.mrb[0].mxu0 %v2842
        %v2945 = vpop.f32.mrb[0].mxu0
        %v2946 = vadd.f32 0.0, %v2945
        %v2947 = vpop.f32.mrb[0].mxu0
        %2948 = vmatprep.mubr.f32.mxu0 0.0
        %2949 = vmatmul.mubr.f32.gmra.mrb[0].mxu0 %v2843
        %v2950 = vpop.f32.mrb[0].mxu0
        %v2951 = vadd.f32 0.0, %v2950
        %v2952 = vpop.f32.mrb[0].mxu0
        %2953 = vmatprep.mubr.f32.mxu0 0.0
        %2954 = vmatmul.mubr.f32.gmra.mrb[0].mxu0 %v2844
        %v2955 = vpop.f32.mrb[0].mxu0
        %v2956 = vadd.f32 0.0, %v2955
        %v2957 = vpop.f32.mrb[0].mxu0
        %2958 = vmatprep.mubr.f32.mxu0 0.0
        %2959 = vmatmul.mubr.f32.gmra.mrb[0].mxu0 %v2845
        %v2960 = vpop.f32.mrb[0].mxu0
        %v2961 = vadd.f32 0.0, %v2960
        %v2962 = vpop.f32.mrb[0].mxu0
        %2963 = vmatprep.mubr.f32.mxu0 0.0
        %2964 = vmatmul.mubr.f32.gmra.mrb[0].mxu0 %v2846
        %v2965 = vpop.f32.mrb[0].mxu0
        %v2966 = vadd.f32 0.0, %v2965
        %v2967 = vpop.f32.mrb[0].mxu0
        %2968 = vmatprep.mubr.f32.mxu0 0.0
        %2969 = vmatmul.mubr.f32.gmra.mrb[0].mxu0 %v2847
        %v2970 = vpop.f32.mrb[0].mxu0
        %v2971 = vadd.f32 0.0, %v2970
        %v2972 = vpop.f32.mrb[0].mxu0
        %2973 = vmatprep.mubr.f32.mxu0 0.0
        %2974 = vmatmul.mubr.f32.gmra.mrb[0].mxu0 %v2848
        %v2975 = vpop.f32.mrb[0].mxu0
        %v2976 = vadd.f32 0.0, %v2975
        %v2977 = vpop.f32.mrb[0].mxu0
        %2978 = vmatprep.mubr.f32.mxu0 0.0
        %2979 = vmatmul.mubr.f32.gmra.mrb[0].mxu0 %v2849
        %v2980 = vpop.f32.mrb[0].mxu0
        %v2981 = vadd.f32 0.0, %v2980
        %v2982 = vpop.f32.mrb[0].mxu0
        %2983 = vmatprep.mubr.f32.mxu0 0.0
        %2984 = vmatmul.mubr.f32.gmra.mrb[0].mxu0 %v2850
        %v2985 = vpop.f32.mrb[0].mxu0
        %v2986 = vadd.f32 0.0, %v2985
        %v2987 = vpop.f32.mrb[0].mxu0
        %2988 = vmatprep.mubr.f32.mxu0 0.0
        %2989 = vmatmul.mubr.f32.gmra.mrb[0].mxu0 %v2851
        %v2990 = vpop.f32.mrb[0].mxu0
        %v2991 = vadd.f32 0.0, %v2990
        %v2992 = vpop.f32.mrb[0].mxu0
        %2993 = vmatprep.mubr.f32.mxu0 0.0
        %2994 = vmatmul.mubr.f32.gmra.mrb[0].mxu0 %v2852
        %v2995 = vpop.f32.mrb[0].mxu0
        %v2996 = vadd.f32 0.0, %v2995
        %v2997 = vpop.f32.mrb[0].mxu0
        %2998 = vmatprep.mubr.f32.mxu0 0.0
        %2999 = vmatmul.mubr.f32.gmra.mrb[0].mxu0 %v2853
        %v3000 = vpop.f32.mrb[0].mxu0
        %v3001 = vadd.f32 0.0, %v3000
        %v3002 = vpop.f32.mrb[0].mxu0
        %3003 = vmatprep.mubr.f32.mxu0 0.0
        %3004 = vmatmul.mubr.f32.gmra.mrb[0].mxu0 %v2854
        %v3005 = vpop.f32.mrb[0].mxu0
        %v3006 = vadd.f32 0.0, %v3005
        %v3007 = vpop.f32.mrb[0].mxu0
        %3008 = vmatprep.mubr.f32.mxu0 0.0
        %3009 = vmatmul.mubr.f32.gmra.mrb[0].mxu0 %v2855
        %v3010 = vpop.f32.mrb[0].mxu0
        %v3011 = vadd.f32 0.0, %v3010
        %v3012 = vpop.f32.mrb[0].mxu0
        %3013 = vmatprep.mubr.f32.mxu0 0.0
        %3014 = vmatmul.mubr.f32.gmra.mrb[0].mxu0 %v2856
        %v3015 = vpop.f32.mrb[0].mxu0
        %v3016 = vadd.f32 0.0, %v3015
        %v3017 = vpop.f32.mrb[0].mxu0
        %3018 = vdwg.mxu0
        %v3019 = vadd.f32 %v2763, %v2941
        %v3020 = vadd.f32 %v2768, %v2946
        %v3021 = vadd.f32 %v2773, %v2951
        %v3022 = vadd.f32 %v2778, %v2956
        %v3023 = vadd.f32 %v2783, %v2961
        %v3024 = vadd.f32 %v2788, %v2966
        %v3025 = vadd.f32 %v2793, %v2971
        %v3026 = vadd.f32 %v2798, %v2976
        %v3027 = vadd.f32 %v2803, %v2981
        %v3028 = vadd.f32 %v2808, %v2986
        %v3029 = vadd.f32 %v2813, %v2991
        %v3030 = vadd.f32 %v2818, %v2996
        %v3031 = vadd.f32 %v2823, %v3001
        %v3032 = vadd.f32 %v2828, %v3006
        %v3033 = vadd.f32 %v2833, %v3011
        %v3034 = vadd.f32 %v2838, %v3016
        %s3035 = scalar_lea.vmem [#allocation4], 24
        %v3036 = vld [vmem:[%s3035] sm:$0xff]
        %v3037 = vld [vmem:[%s3035 + $0x8] sm:$0xff]
        %v3038 = vld [vmem:[%s3035 + $0x18] sm:$0xff]
        %v3039 = vld [vmem:[%s3035 + $0x20] sm:$0xff]
        %v3040 = vld [vmem:[%s3035 + $0x30] sm:$0xff]
        %v3041 = vld [vmem:[%s3035 + $0x38] sm:$0xff]
        %v3042 = vld [vmem:[%s3035 + $0x48] sm:$0xff]
        %v3043 = vld [vmem:[%s3035 + $0x50] sm:$0xff]
        %v3044 = vld [vmem:[%s3035 + $0x60] sm:$0xff]
        %v3045 = vld [vmem:[%s3035 + $0x68] sm:$0xff]
        %v3046 = vld [vmem:[%s3035 + $0x78] sm:$0xff]
        %v3047 = vld [vmem:[%s3035 + $0x80] sm:$0xff]
        %v3048 = vld [vmem:[%s3035 + $0x90] sm:$0xff]
        %v3049 = vld [vmem:[%s3035 + $0x98] sm:$0xff]
        %v3050 = vld [vmem:[%s3035 + $0xa8] sm:$0xff]
        %v3051 = vld [vmem:[%s3035 + $0xb0] sm:$0xff]
        %s3052 = scalar_lea.vmem [#allocation10], 384
        %v3053 = vld [vmem:[%s3052] sm:$0xff]
        %v3054 = vld [vmem:[%s3052 + $0x8] sm:$0xff]
        %v3055 = vld [vmem:[%s3052 + $0x10] sm:$0xff]
        %v3056 = vld [vmem:[%s3052 + $0x18] sm:$0xff]
        %v3057 = vld [vmem:[%s3052 + $0x20] sm:$0xff]
        %v3058 = vld [vmem:[%s3052 + $0x28] sm:$0xff]
        %v3059 = vld [vmem:[%s3052 + $0x30] sm:$0xff]
        %v3060 = vld [vmem:[%s3052 + $0x38] sm:$0xff]
        %v3061 = vld [vmem:[%s3052 + $0x40] sm:$0xff]
        %v3062 = vld [vmem:[%s3052 + $0x48] sm:$0xff]
        %v3063 = vld [vmem:[%s3052 + $0x50] sm:$0xff]
        %v3064 = vld [vmem:[%s3052 + $0x58] sm:$0xff]
        %v3065 = vld [vmem:[%s3052 + $0x60] sm:$0xff]
        %v3066 = vld [vmem:[%s3052 + $0x68] sm:$0xff]
        %v3067 = vld [vmem:[%s3052 + $0x70] sm:$0xff]
        %v3068 = vld [vmem:[%s3052 + $0x78] sm:$0xff]
        %3069 = vmatprep.subr.mxu0 0.0
        %3070 = vmatpush1.msra.mxu0 %v3053
        %3071 = vmatprep.subr.mxu0 0.0
        %3072 = vmatpush1.msra.mxu0 %v3054
        %3073 = vmatprep.subr.mxu0 0.0
        %3074 = vmatpush1.msra.mxu0 %v3055
        %3075 = vmatprep.subr.mxu0 0.0
        %3076 = vmatpush1.msra.mxu0 %v3056
        %3077 = vmatprep.subr.mxu0 0.0
        %3078 = vmatpush1.msra.mxu0 %v3057
        %3079 = vmatprep.subr.mxu0 0.0
        %3080 = vmatpush1.msra.mxu0 %v3058
        %3081 = vmatprep.subr.mxu0 0.0
        %3082 = vmatpush1.msra.mxu0 %v3059
        %3083 = vmatprep.subr.mxu0 0.0
        %3084 = vmatpush1.msra.mxu0 %v3060
        %3085 = vmatprep.subr.mxu0 0.0
        %3086 = vmatpush1.msra.mxu0 %v3061
        %3087 = vmatprep.subr.mxu0 0.0
        %3088 = vmatpush1.msra.mxu0 %v3062
        %3089 = vmatprep.subr.mxu0 0.0
        %3090 = vmatpush1.msra.mxu0 %v3063
        %3091 = vmatprep.subr.mxu0 0.0
        %3092 = vmatpush1.msra.mxu0 %v3064
        %3093 = vmatprep.subr.mxu0 0.0
        %3094 = vmatpush1.msra.mxu0 %v3065
        %3095 = vmatprep.subr.mxu0 0.0
        %3096 = vmatpush1.msra.mxu0 %v3066
        %3097 = vmatprep.subr.mxu0 0.0
        %3098 = vmatpush1.msra.mxu0 %v3067
        %3099 = vmatprep.subr.mxu0 0.0
        %3100 = vmatpush1.msra.mxu0 %v3068
        %3101 = vmatprep.subr.mxu0 0.0
        %3102 = vmatpush1.msra.mxu0 0.0
        %3103 = vmatprep.subr.mxu0 0.0
        %3104 = vmatpush1.msra.mxu0 0.0
        %3105 = vmatprep.subr.mxu0 0.0
        %3106 = vmatpush1.msra.mxu0 0.0
        %3107 = vmatprep.subr.mxu0 0.0
        %3108 = vmatpush1.msra.mxu0 0.0
        %3109 = vmatprep.subr.mxu0 0.0
        %3110 = vmatpush1.msra.mxu0 0.0
        %3111 = vmatprep.subr.mxu0 0.0
        %3112 = vmatpush1.msra.mxu0 0.0
        %3113 = vmatprep.subr.mxu0 0.0
        %3114 = vmatpush1.msra.mxu0 0.0
        %3115 = vmatprep.subr.mxu0 0.0
        %3116 = vmatpush1.msra.mxu0 0.0
        %3117 = vmatprep.subr.mxu0 0.0
        %3118 = vmatpush1.msra.mxu0 0.0
        %3119 = vmatprep.subr.mxu0 0.0
        %3120 = vmatpush1.msra.mxu0 0.0
        %3121 = vmatprep.subr.mxu0 0.0
        %3122 = vmatpush1.msra.mxu0 0.0
        %3123 = vmatprep.subr.mxu0 0.0
        %3124 = vmatpush1.msra.mxu0 0.0
        %3125 = vmatprep.subr.mxu0 0.0
        %3126 = vmatpush1.msra.mxu0 0.0
        %3127 = vmatprep.subr.mxu0 0.0
        %3128 = vmatpush1.msra.mxu0 0.0
        %3129 = vmatprep.subr.mxu0 0.0
        %3130 = vmatpush1.msra.mxu0 0.0
        %3131 = vmatprep.subr.mxu0 0.0
        %3132 = vmatpush1.msra.mxu0 0.0
        %3133 = vmatprep.mubr.f32.mxu0 0.0
        %3134 = vmatmul.mubr.f32.gmra.mrb[0].mxu0 %v3036
        %v3135 = vpop.f32.mrb[0].mxu0
        %v3136 = vadd.f32 0.0, %v3135
        %v3137 = vpop.f32.mrb[0].mxu0
        %3138 = vmatprep.mubr.f32.mxu0 0.0
        %3139 = vmatmul.mubr.f32.gmra.mrb[0].mxu0 %v3037
        %v3140 = vpop.f32.mrb[0].mxu0
        %v3141 = vadd.f32 0.0, %v3140
        %v3142 = vpop.f32.mrb[0].mxu0
        %3143 = vmatprep.mubr.f32.mxu0 0.0
        %3144 = vmatmul.mubr.f32.gmra.mrb[0].mxu0 %v3038
        %v3145 = vpop.f32.mrb[0].mxu0
        %v3146 = vadd.f32 0.0, %v3145
        %v3147 = vpop.f32.mrb[0].mxu0
        %3148 = vmatprep.mubr.f32.mxu0 0.0
        %3149 = vmatmul.mubr.f32.gmra.mrb[0].mxu0 %v3039
        %v3150 = vpop.f32.mrb[0].mxu0
        %v3151 = vadd.f32 0.0, %v3150
        %v3152 = vpop.f32.mrb[0].mxu0
        %3153 = vmatprep.mubr.f32.mxu0 0.0
        %3154 = vmatmul.mubr.f32.gmra.mrb[0].mxu0 %v3040
        %v3155 = vpop.f32.mrb[0].mxu0
        %v3156 = vadd.f32 0.0, %v3155
        %v3157 = vpop.f32.mrb[0].mxu0
        %3158 = vmatprep.mubr.f32.mxu0 0.0
        %3159 = vmatmul.mubr.f32.gmra.mrb[0].mxu0 %v3041
        %v3160 = vpop.f32.mrb[0].mxu0
        %v3161 = vadd.f32 0.0, %v3160
        %v3162 = vpop.f32.mrb[0].mxu0
        %3163 = vmatprep.mubr.f32.mxu0 0.0
        %3164 = vmatmul.mubr.f32.gmra.mrb[0].mxu0 %v3042
        %v3165 = vpop.f32.mrb[0].mxu0
        %v3166 = vadd.f32 0.0, %v3165
        %v3167 = vpop.f32.mrb[0].mxu0
        %3168 = vmatprep.mubr.f32.mxu0 0.0
        %3169 = vmatmul.mubr.f32.gmra.mrb[0].mxu0 %v3043
        %v3170 = vpop.f32.mrb[0].mxu0
        %v3171 = vadd.f32 0.0, %v3170
        %v3172 = vpop.f32.mrb[0].mxu0
        %3173 = vmatprep.mubr.f32.mxu0 0.0
        %3174 = vmatmul.mubr.f32.gmra.mrb[0].mxu0 %v3044
        %v3175 = vpop.f32.mrb[0].mxu0
        %v3176 = vadd.f32 0.0, %v3175
        %v3177 = vpop.f32.mrb[0].mxu0
        %3178 = vmatprep.mubr.f32.mxu0 0.0
        %3179 = vmatmul.mubr.f32.gmra.mrb[0].mxu0 %v3045
        %v3180 = vpop.f32.mrb[0].mxu0
        %v3181 = vadd.f32 0.0, %v3180
        %v3182 = vpop.f32.mrb[0].mxu0
        %3183 = vmatprep.mubr.f32.mxu0 0.0
        %3184 = vmatmul.mubr.f32.gmra.mrb[0].mxu0 %v3046
        %v3185 = vpop.f32.mrb[0].mxu0
        %v3186 = vadd.f32 0.0, %v3185
        %v3187 = vpop.f32.mrb[0].mxu0
        %3188 = vmatprep.mubr.f32.mxu0 0.0
        %3189 = vmatmul.mubr.f32.gmra.mrb[0].mxu0 %v3047
        %v3190 = vpop.f32.mrb[0].mxu0
        %v3191 = vadd.f32 0.0, %v3190
        %v3192 = vpop.f32.mrb[0].mxu0
        %3193 = vmatprep.mubr.f32.mxu0 0.0
        %3194 = vmatmul.mubr.f32.gmra.mrb[0].mxu0 %v3048
        %v3195 = vpop.f32.mrb[0].mxu0
        %v3196 = vadd.f32 0.0, %v3195
        %v3197 = vpop.f32.mrb[0].mxu0
        %3198 = vmatprep.mubr.f32.mxu0 0.0
        %3199 = vmatmul.mubr.f32.gmra.mrb[0].mxu0 %v3049
        %v3200 = vpop.f32.mrb[0].mxu0
        %v3201 = vadd.f32 0.0, %v3200
        %v3202 = vpop.f32.mrb[0].mxu0
        %3203 = vmatprep.mubr.f32.mxu0 0.0
        %3204 = vmatmul.mubr.f32.gmra.mrb[0].mxu0 %v3050
        %v3205 = vpop.f32.mrb[0].mxu0
        %v3206 = vadd.f32 0.0, %v3205
        %v3207 = vpop.f32.mrb[0].mxu0
        %3208 = vmatprep.mubr.f32.mxu0 0.0
        %3209 = vmatmul.mubr.f32.gmra.mrb[0].mxu0 %v3051
        %v3210 = vpop.f32.mrb[0].mxu0
        %v3211 = vadd.f32 0.0, %v3210
        %v3212 = vpop.f32.mrb[0].mxu0
        %3213 = vdwg.mxu0
        %v3214 = vadd.f32 %v3019, %v3136
        %v3215 = vadd.f32 %v3020, %v3141
        %v3216 = vadd.f32 %v3021, %v3146
        %v3217 = vadd.f32 %v3022, %v3151
        %v3218 = vadd.f32 %v3023, %v3156
        %v3219 = vadd.f32 %v3024, %v3161
        %v3220 = vadd.f32 %v3025, %v3166
        %v3221 = vadd.f32 %v3026, %v3171
        %v3222 = vadd.f32 %v3027, %v3176
        %v3223 = vadd.f32 %v3028, %v3181
        %v3224 = vadd.f32 %v3029, %v3186
        %v3225 = vadd.f32 %v3030, %v3191
        %v3226 = vadd.f32 %v3031, %v3196
        %v3227 = vadd.f32 %v3032, %v3201
        %v3228 = vadd.f32 %v3033, %v3206
        %v3229 = vadd.f32 %v3034, %v3211
        %v3230 = vld [vmem:[%s3035 + $0x1] sm:$0xff]
        %v3231 = vld [vmem:[%s3035 + $0x9] sm:$0xff]
        %v3232 = vld [vmem:[%s3035 + $0x19] sm:$0xff]
        %v3233 = vld [vmem:[%s3035 + $0x21] sm:$0xff]
        %v3234 = vld [vmem:[%s3035 + $0x31] sm:$0xff]
        %v3235 = vld [vmem:[%s3035 + $0x39] sm:$0xff]
        %v3236 = vld [vmem:[%s3035 + $0x49] sm:$0xff]
        %v3237 = vld [vmem:[%s3035 + $0x51] sm:$0xff]
        %v3238 = vld [vmem:[%s3035 + $0x61] sm:$0xff]
        %v3239 = vld [vmem:[%s3035 + $0x69] sm:$0xff]
        %v3240 = vld [vmem:[%s3035 + $0x79] sm:$0xff]
        %v3241 = vld [vmem:[%s3035 + $0x81] sm:$0xff]
        %v3242 = vld [vmem:[%s3035 + $0x91] sm:$0xff]
        %v3243 = vld [vmem:[%s3035 + $0x99] sm:$0xff]
        %v3244 = vld [vmem:[%s3035 + $0xa9] sm:$0xff]
        %v3245 = vld [vmem:[%s3035 + $0xb1] sm:$0xff]
        %s3246 = scalar_lea.vmem [#allocation10], 512
        %v3247 = vld [vmem:[%s3246] sm:$0xff]
        %v3248 = vld [vmem:[%s3246 + $0x8] sm:$0xff]
        %v3249 = vld [vmem:[%s3246 + $0x10] sm:$0xff]
        %v3250 = vld [vmem:[%s3246 + $0x18] sm:$0xff]
        %v3251 = vld [vmem:[%s3246 + $0x20] sm:$0xff]
        %v3252 = vld [vmem:[%s3246 + $0x28] sm:$0xff]
        %v3253 = vld [vmem:[%s3246 + $0x30] sm:$0xff]
        %v3254 = vld [vmem:[%s3246 + $0x38] sm:$0xff]
        %v3255 = vld [vmem:[%s3246 + $0x40] sm:$0xff]
        %v3256 = vld [vmem:[%s3246 + $0x48] sm:$0xff]
        %v3257 = vld [vmem:[%s3246 + $0x50] sm:$0xff]
        %v3258 = vld [vmem:[%s3246 + $0x58] sm:$0xff]
        %v3259 = vld [vmem:[%s3246 + $0x60] sm:$0xff]
        %v3260 = vld [vmem:[%s3246 + $0x68] sm:$0xff]
        %v3261 = vld [vmem:[%s3246 + $0x70] sm:$0xff]
        %v3262 = vld [vmem:[%s3246 + $0x78] sm:$0xff]
        %3263 = vmatprep.subr.mxu0 0.0
        %3264 = vmatpush1.msra.mxu0 %v3247
        %3265 = vmatprep.subr.mxu0 0.0
        %3266 = vmatpush1.msra.mxu0 %v3248
        %3267 = vmatprep.subr.mxu0 0.0
        %3268 = vmatpush1.msra.mxu0 %v3249
        %3269 = vmatprep.subr.mxu0 0.0
        %3270 = vmatpush1.msra.mxu0 %v3250
        %3271 = vmatprep.subr.mxu0 0.0
        %3272 = vmatpush1.msra.mxu0 %v3251
        %3273 = vmatprep.subr.mxu0 0.0
        %3274 = vmatpush1.msra.mxu0 %v3252
        %3275 = vmatprep.subr.mxu0 0.0
        %3276 = vmatpush1.msra.mxu0 %v3253
        %3277 = vmatprep.subr.mxu0 0.0
        %3278 = vmatpush1.msra.mxu0 %v3254
        %3279 = vmatprep.subr.mxu0 0.0
        %3280 = vmatpush1.msra.mxu0 %v3255
        %3281 = vmatprep.subr.mxu0 0.0
        %3282 = vmatpush1.msra.mxu0 %v3256
        %3283 = vmatprep.subr.mxu0 0.0
        %3284 = vmatpush1.msra.mxu0 %v3257
        %3285 = vmatprep.subr.mxu0 0.0
        %3286 = vmatpush1.msra.mxu0 %v3258
        %3287 = vmatprep.subr.mxu0 0.0
        %3288 = vmatpush1.msra.mxu0 %v3259
        %3289 = vmatprep.subr.mxu0 0.0
        %3290 = vmatpush1.msra.mxu0 %v3260
        %3291 = vmatprep.subr.mxu0 0.0
        %3292 = vmatpush1.msra.mxu0 %v3261
        %3293 = vmatprep.subr.mxu0 0.0
        %3294 = vmatpush1.msra.mxu0 %v3262
        %3295 = vmatprep.subr.mxu0 0.0
        %3296 = vmatpush1.msra.mxu0 0.0
        %3297 = vmatprep.subr.mxu0 0.0
        %3298 = vmatpush1.msra.mxu0 0.0
        %3299 = vmatprep.subr.mxu0 0.0
        %3300 = vmatpush1.msra.mxu0 0.0
        %3301 = vmatprep.subr.mxu0 0.0
        %3302 = vmatpush1.msra.mxu0 0.0
        %3303 = vmatprep.subr.mxu0 0.0
        %3304 = vmatpush1.msra.mxu0 0.0
        %3305 = vmatprep.subr.mxu0 0.0
        %3306 = vmatpush1.msra.mxu0 0.0
        %3307 = vmatprep.subr.mxu0 0.0
        %3308 = vmatpush1.msra.mxu0 0.0
        %3309 = vmatprep.subr.mxu0 0.0
        %3310 = vmatpush1.msra.mxu0 0.0
        %3311 = vmatprep.subr.mxu0 0.0
        %3312 = vmatpush1.msra.mxu0 0.0
        %3313 = vmatprep.subr.mxu0 0.0
        %3314 = vmatpush1.msra.mxu0 0.0
        %3315 = vmatprep.subr.mxu0 0.0
        %3316 = vmatpush1.msra.mxu0 0.0
        %3317 = vmatprep.subr.mxu0 0.0
        %3318 = vmatpush1.msra.mxu0 0.0
        %3319 = vmatprep.subr.mxu0 0.0
        %3320 = vmatpush1.msra.mxu0 0.0
        %3321 = vmatprep.subr.mxu0 0.0
        %3322 = vmatpush1.msra.mxu0 0.0
        %3323 = vmatprep.subr.mxu0 0.0
        %3324 = vmatpush1.msra.mxu0 0.0
        %3325 = vmatprep.subr.mxu0 0.0
        %3326 = vmatpush1.msra.mxu0 0.0
        %3327 = vmatprep.mubr.f32.mxu0 0.0
        %3328 = vmatmul.mubr.f32.gmra.mrb[0].mxu0 %v3230
        %v3329 = vpop.f32.mrb[0].mxu0
        %v3330 = vadd.f32 0.0, %v3329
        %v3331 = vpop.f32.mrb[0].mxu0
        %3332 = vmatprep.mubr.f32.mxu0 0.0
        %3333 = vmatmul.mubr.f32.gmra.mrb[0].mxu0 %v3231
        %v3334 = vpop.f32.mrb[0].mxu0
        %v3335 = vadd.f32 0.0, %v3334
        %v3336 = vpop.f32.mrb[0].mxu0
        %3337 = vmatprep.mubr.f32.mxu0 0.0
        %3338 = vmatmul.mubr.f32.gmra.mrb[0].mxu0 %v3232
        %v3339 = vpop.f32.mrb[0].mxu0
        %v3340 = vadd.f32 0.0, %v3339
        %v3341 = vpop.f32.mrb[0].mxu0
        %3342 = vmatprep.mubr.f32.mxu0 0.0
        %3343 = vmatmul.mubr.f32.gmra.mrb[0].mxu0 %v3233
        %v3344 = vpop.f32.mrb[0].mxu0
        %v3345 = vadd.f32 0.0, %v3344
        %v3346 = vpop.f32.mrb[0].mxu0
        %3347 = vmatprep.mubr.f32.mxu0 0.0
        %3348 = vmatmul.mubr.f32.gmra.mrb[0].mxu0 %v3234
        %v3349 = vpop.f32.mrb[0].mxu0
        %v3350 = vadd.f32 0.0, %v3349
        %v3351 = vpop.f32.mrb[0].mxu0
        %3352 = vmatprep.mubr.f32.mxu0 0.0
        %3353 = vmatmul.mubr.f32.gmra.mrb[0].mxu0 %v3235
        %v3354 = vpop.f32.mrb[0].mxu0
        %v3355 = vadd.f32 0.0, %v3354
        %v3356 = vpop.f32.mrb[0].mxu0
        %3357 = vmatprep.mubr.f32.mxu0 0.0
        %3358 = vmatmul.mubr.f32.gmra.mrb[0].mxu0 %v3236
        %v3359 = vpop.f32.mrb[0].mxu0
        %v3360 = vadd.f32 0.0, %v3359
        %v3361 = vpop.f32.mrb[0].mxu0
        %3362 = vmatprep.mubr.f32.mxu0 0.0
        %3363 = vmatmul.mubr.f32.gmra.mrb[0].mxu0 %v3237
        %v3364 = vpop.f32.mrb[0].mxu0
        %v3365 = vadd.f32 0.0, %v3364
        %v3366 = vpop.f32.mrb[0].mxu0
        %3367 = vmatprep.mubr.f32.mxu0 0.0
        %3368 = vmatmul.mubr.f32.gmra.mrb[0].mxu0 %v3238
        %v3369 = vpop.f32.mrb[0].mxu0
        %v3370 = vadd.f32 0.0, %v3369
        %v3371 = vpop.f32.mrb[0].mxu0
        %3372 = vmatprep.mubr.f32.mxu0 0.0
        %3373 = vmatmul.mubr.f32.gmra.mrb[0].mxu0 %v3239
        %v3374 = vpop.f32.mrb[0].mxu0
        %v3375 = vadd.f32 0.0, %v3374
        %v3376 = vpop.f32.mrb[0].mxu0
        %3377 = vmatprep.mubr.f32.mxu0 0.0
        %3378 = vmatmul.mubr.f32.gmra.mrb[0].mxu0 %v3240
        %v3379 = vpop.f32.mrb[0].mxu0
        %v3380 = vadd.f32 0.0, %v3379
        %v3381 = vpop.f32.mrb[0].mxu0
        %3382 = vmatprep.mubr.f32.mxu0 0.0
        %3383 = vmatmul.mubr.f32.gmra.mrb[0].mxu0 %v3241
        %v3384 = vpop.f32.mrb[0].mxu0
        %v3385 = vadd.f32 0.0, %v3384
        %v3386 = vpop.f32.mrb[0].mxu0
        %3387 = vmatprep.mubr.f32.mxu0 0.0
        %3388 = vmatmul.mubr.f32.gmra.mrb[0].mxu0 %v3242
        %v3389 = vpop.f32.mrb[0].mxu0
        %v3390 = vadd.f32 0.0, %v3389
        %v3391 = vpop.f32.mrb[0].mxu0
        %3392 = vmatprep.mubr.f32.mxu0 0.0
        %3393 = vmatmul.mubr.f32.gmra.mrb[0].mxu0 %v3243
        %v3394 = vpop.f32.mrb[0].mxu0
        %v3395 = vadd.f32 0.0, %v3394
        %v3396 = vpop.f32.mrb[0].mxu0
        %3397 = vmatprep.mubr.f32.mxu0 0.0
        %3398 = vmatmul.mubr.f32.gmra.mrb[0].mxu0 %v3244
        %v3399 = vpop.f32.mrb[0].mxu0
        %v3400 = vadd.f32 0.0, %v3399
        %v3401 = vpop.f32.mrb[0].mxu0
        %3402 = vmatprep.mubr.f32.mxu0 0.0
        %3403 = vmatmul.mubr.f32.gmra.mrb[0].mxu0 %v3245
        %v3404 = vpop.f32.mrb[0].mxu0
        %v3405 = vadd.f32 0.0, %v3404
        %v3406 = vpop.f32.mrb[0].mxu0
        %3407 = vdwg.mxu0
        %v3408 = vadd.f32 %v3214, %v3330
        %v3409 = vadd.f32 %v3215, %v3335
        %v3410 = vadd.f32 %v3216, %v3340
        %v3411 = vadd.f32 %v3217, %v3345
        %v3412 = vadd.f32 %v3218, %v3350
        %v3413 = vadd.f32 %v3219, %v3355
        %v3414 = vadd.f32 %v3220, %v3360
        %v3415 = vadd.f32 %v3221, %v3365
        %v3416 = vadd.f32 %v3222, %v3370
        %v3417 = vadd.f32 %v3223, %v3375
        %v3418 = vadd.f32 %v3224, %v3380
        %v3419 = vadd.f32 %v3225, %v3385
        %v3420 = vadd.f32 %v3226, %v3390
        %v3421 = vadd.f32 %v3227, %v3395
        %v3422 = vadd.f32 %v3228, %v3400
        %v3423 = vadd.f32 %v3229, %v3405
        %v3424 = vld [vmem:[%s3035 + $0x2] sm:$0xff]
        %v3425 = vld [vmem:[%s3035 + $0xa] sm:$0xff]
        %v3426 = vld [vmem:[%s3035 + $0x1a] sm:$0xff]
        %v3427 = vld [vmem:[%s3035 + $0x22] sm:$0xff]
        %v3428 = vld [vmem:[%s3035 + $0x32] sm:$0xff]
        %v3429 = vld [vmem:[%s3035 + $0x3a] sm:$0xff]
        %v3430 = vld [vmem:[%s3035 + $0x4a] sm:$0xff]
        %v3431 = vld [vmem:[%s3035 + $0x52] sm:$0xff]
        %v3432 = vld [vmem:[%s3035 + $0x62] sm:$0xff]
        %v3433 = vld [vmem:[%s3035 + $0x6a] sm:$0xff]
        %v3434 = vld [vmem:[%s3035 + $0x7a] sm:$0xff]
        %v3435 = vld [vmem:[%s3035 + $0x82] sm:$0xff]
        %v3436 = vld [vmem:[%s3035 + $0x92] sm:$0xff]
        %v3437 = vld [vmem:[%s3035 + $0x9a] sm:$0xff]
        %v3438 = vld [vmem:[%s3035 + $0xaa] sm:$0xff]
        %v3439 = vld [vmem:[%s3035 + $0xb2] sm:$0xff]
        %s3440 = scalar_lea.vmem [#allocation10], 640
        %v3441 = vld [vmem:[%s3440] sm:$0xff]
        %v3442 = vld [vmem:[%s3440 + $0x8] sm:$0xff]
        %v3443 = vld [vmem:[%s3440 + $0x10] sm:$0xff]
        %v3444 = vld [vmem:[%s3440 + $0x18] sm:$0xff]
        %v3445 = vld [vmem:[%s3440 + $0x20] sm:$0xff]
        %v3446 = vld [vmem:[%s3440 + $0x28] sm:$0xff]
        %v3447 = vld [vmem:[%s3440 + $0x30] sm:$0xff]
        %v3448 = vld [vmem:[%s3440 + $0x38] sm:$0xff]
        %v3449 = vld [vmem:[%s3440 + $0x40] sm:$0xff]
        %v3450 = vld [vmem:[%s3440 + $0x48] sm:$0xff]
        %v3451 = vld [vmem:[%s3440 + $0x50] sm:$0xff]
        %v3452 = vld [vmem:[%s3440 + $0x58] sm:$0xff]
        %v3453 = vld [vmem:[%s3440 + $0x60] sm:$0xff]
        %v3454 = vld [vmem:[%s3440 + $0x68] sm:$0xff]
        %v3455 = vld [vmem:[%s3440 + $0x70] sm:$0xff]
        %v3456 = vld [vmem:[%s3440 + $0x78] sm:$0xff]
        %3457 = vmatprep.subr.mxu0 0.0
        %3458 = vmatpush1.msra.mxu0 %v3441
        %3459 = vmatprep.subr.mxu0 0.0
        %3460 = vmatpush1.msra.mxu0 %v3442
        %3461 = vmatprep.subr.mxu0 0.0
        %3462 = vmatpush1.msra.mxu0 %v3443
        %3463 = vmatprep.subr.mxu0 0.0
        %3464 = vmatpush1.msra.mxu0 %v3444
        %3465 = vmatprep.subr.mxu0 0.0
        %3466 = vmatpush1.msra.mxu0 %v3445
        %3467 = vmatprep.subr.mxu0 0.0
        %3468 = vmatpush1.msra.mxu0 %v3446
        %3469 = vmatprep.subr.mxu0 0.0
        %3470 = vmatpush1.msra.mxu0 %v3447
        %3471 = vmatprep.subr.mxu0 0.0
        %3472 = vmatpush1.msra.mxu0 %v3448
        %3473 = vmatprep.subr.mxu0 0.0
        %3474 = vmatpush1.msra.mxu0 %v3449
        %3475 = vmatprep.subr.mxu0 0.0
        %3476 = vmatpush1.msra.mxu0 %v3450
        %3477 = vmatprep.subr.mxu0 0.0
        %3478 = vmatpush1.msra.mxu0 %v3451
        %3479 = vmatprep.subr.mxu0 0.0
        %3480 = vmatpush1.msra.mxu0 %v3452
        %3481 = vmatprep.subr.mxu0 0.0
        %3482 = vmatpush1.msra.mxu0 %v3453
        %3483 = vmatprep.subr.mxu0 0.0
        %3484 = vmatpush1.msra.mxu0 %v3454
        %3485 = vmatprep.subr.mxu0 0.0
        %3486 = vmatpush1.msra.mxu0 %v3455
        %3487 = vmatprep.subr.mxu0 0.0
        %3488 = vmatpush1.msra.mxu0 %v3456
        %3489 = vmatprep.subr.mxu0 0.0
        %3490 = vmatpush1.msra.mxu0 0.0
        %3491 = vmatprep.subr.mxu0 0.0
        %3492 = vmatpush1.msra.mxu0 0.0
        %3493 = vmatprep.subr.mxu0 0.0
        %3494 = vmatpush1.msra.mxu0 0.0
        %3495 = vmatprep.subr.mxu0 0.0
        %3496 = vmatpush1.msra.mxu0 0.0
        %3497 = vmatprep.subr.mxu0 0.0
        %3498 = vmatpush1.msra.mxu0 0.0
        %3499 = vmatprep.subr.mxu0 0.0
        %3500 = vmatpush1.msra.mxu0 0.0
        %3501 = vmatprep.subr.mxu0 0.0
        %3502 = vmatpush1.msra.mxu0 0.0
        %3503 = vmatprep.subr.mxu0 0.0
        %3504 = vmatpush1.msra.mxu0 0.0
        %3505 = vmatprep.subr.mxu0 0.0
        %3506 = vmatpush1.msra.mxu0 0.0
        %3507 = vmatprep.subr.mxu0 0.0
        %3508 = vmatpush1.msra.mxu0 0.0
        %3509 = vmatprep.subr.mxu0 0.0
        %3510 = vmatpush1.msra.mxu0 0.0
        %3511 = vmatprep.subr.mxu0 0.0
        %3512 = vmatpush1.msra.mxu0 0.0
        %3513 = vmatprep.subr.mxu0 0.0
        %3514 = vmatpush1.msra.mxu0 0.0
        %3515 = vmatprep.subr.mxu0 0.0
        %3516 = vmatpush1.msra.mxu0 0.0
        %3517 = vmatprep.subr.mxu0 0.0
        %3518 = vmatpush1.msra.mxu0 0.0
        %3519 = vmatprep.subr.mxu0 0.0
        %3520 = vmatpush1.msra.mxu0 0.0
        %3521 = vmatprep.mubr.f32.mxu0 0.0
        %3522 = vmatmul.mubr.f32.gmra.mrb[0].mxu0 %v3424
        %v3523 = vpop.f32.mrb[0].mxu0
        %v3524 = vadd.f32 0.0, %v3523
        %v3525 = vpop.f32.mrb[0].mxu0
        %3526 = vmatprep.mubr.f32.mxu0 0.0
        %3527 = vmatmul.mubr.f32.gmra.mrb[0].mxu0 %v3425
        %v3528 = vpop.f32.mrb[0].mxu0
        %v3529 = vadd.f32 0.0, %v3528
        %v3530 = vpop.f32.mrb[0].mxu0
        %3531 = vmatprep.mubr.f32.mxu0 0.0
        %3532 = vmatmul.mubr.f32.gmra.mrb[0].mxu0 %v3426
        %v3533 = vpop.f32.mrb[0].mxu0
        %v3534 = vadd.f32 0.0, %v3533
        %v3535 = vpop.f32.mrb[0].mxu0
        %3536 = vmatprep.mubr.f32.mxu0 0.0
        %3537 = vmatmul.mubr.f32.gmra.mrb[0].mxu0 %v3427
        %v3538 = vpop.f32.mrb[0].mxu0
        %v3539 = vadd.f32 0.0, %v3538
        %v3540 = vpop.f32.mrb[0].mxu0
        %3541 = vmatprep.mubr.f32.mxu0 0.0
        %3542 = vmatmul.mubr.f32.gmra.mrb[0].mxu0 %v3428
        %v3543 = vpop.f32.mrb[0].mxu0
        %v3544 = vadd.f32 0.0, %v3543
        %v3545 = vpop.f32.mrb[0].mxu0
        %3546 = vmatprep.mubr.f32.mxu0 0.0
        %3547 = vmatmul.mubr.f32.gmra.mrb[0].mxu0 %v3429
        %v3548 = vpop.f32.mrb[0].mxu0
        %v3549 = vadd.f32 0.0, %v3548
        %v3550 = vpop.f32.mrb[0].mxu0
        %3551 = vmatprep.mubr.f32.mxu0 0.0
        %3552 = vmatmul.mubr.f32.gmra.mrb[0].mxu0 %v3430
        %v3553 = vpop.f32.mrb[0].mxu0
        %v3554 = vadd.f32 0.0, %v3553
        %v3555 = vpop.f32.mrb[0].mxu0
        %3556 = vmatprep.mubr.f32.mxu0 0.0
        %3557 = vmatmul.mubr.f32.gmra.mrb[0].mxu0 %v3431
        %v3558 = vpop.f32.mrb[0].mxu0
        %v3559 = vadd.f32 0.0, %v3558
        %v3560 = vpop.f32.mrb[0].mxu0
        %3561 = vmatprep.mubr.f32.mxu0 0.0
        %3562 = vmatmul.mubr.f32.gmra.mrb[0].mxu0 %v3432
        %v3563 = vpop.f32.mrb[0].mxu0
        %v3564 = vadd.f32 0.0, %v3563
        %v3565 = vpop.f32.mrb[0].mxu0
        %3566 = vmatprep.mubr.f32.mxu0 0.0
        %3567 = vmatmul.mubr.f32.gmra.mrb[0].mxu0 %v3433
        %v3568 = vpop.f32.mrb[0].mxu0
        %v3569 = vadd.f32 0.0, %v3568
        %v3570 = vpop.f32.mrb[0].mxu0
        %3571 = vmatprep.mubr.f32.mxu0 0.0
        %3572 = vmatmul.mubr.f32.gmra.mrb[0].mxu0 %v3434
        %v3573 = vpop.f32.mrb[0].mxu0
        %v3574 = vadd.f32 0.0, %v3573
        %v3575 = vpop.f32.mrb[0].mxu0
        %3576 = vmatprep.mubr.f32.mxu0 0.0
        %3577 = vmatmul.mubr.f32.gmra.mrb[0].mxu0 %v3435
        %v3578 = vpop.f32.mrb[0].mxu0
        %v3579 = vadd.f32 0.0, %v3578
        %v3580 = vpop.f32.mrb[0].mxu0
        %3581 = vmatprep.mubr.f32.mxu0 0.0
        %3582 = vmatmul.mubr.f32.gmra.mrb[0].mxu0 %v3436
        %v3583 = vpop.f32.mrb[0].mxu0
        %v3584 = vadd.f32 0.0, %v3583
        %v3585 = vpop.f32.mrb[0].mxu0
        %3586 = vmatprep.mubr.f32.mxu0 0.0
        %3587 = vmatmul.mubr.f32.gmra.mrb[0].mxu0 %v3437
        %v3588 = vpop.f32.mrb[0].mxu0
        %v3589 = vadd.f32 0.0, %v3588
        %v3590 = vpop.f32.mrb[0].mxu0
        %3591 = vmatprep.mubr.f32.mxu0 0.0
        %3592 = vmatmul.mubr.f32.gmra.mrb[0].mxu0 %v3438
        %v3593 = vpop.f32.mrb[0].mxu0
        %v3594 = vadd.f32 0.0, %v3593
        %v3595 = vpop.f32.mrb[0].mxu0
        %3596 = vmatprep.mubr.f32.mxu0 0.0
        %3597 = vmatmul.mubr.f32.gmra.mrb[0].mxu0 %v3439
        %v3598 = vpop.f32.mrb[0].mxu0
        %v3599 = vadd.f32 0.0, %v3598
        %v3600 = vpop.f32.mrb[0].mxu0
        %3601 = vdwg.mxu0
        %v3602 = vadd.f32 %v3408, %v3524
        %v3603 = vadd.f32 %v3409, %v3529
        %v3604 = vadd.f32 %v3410, %v3534
        %v3605 = vadd.f32 %v3411, %v3539
        %v3606 = vadd.f32 %v3412, %v3544
        %v3607 = vadd.f32 %v3413, %v3549
        %v3608 = vadd.f32 %v3414, %v3554
        %v3609 = vadd.f32 %v3415, %v3559
        %v3610 = vadd.f32 %v3416, %v3564
        %v3611 = vadd.f32 %v3417, %v3569
        %v3612 = vadd.f32 %v3418, %v3574
        %v3613 = vadd.f32 %v3419, %v3579
        %v3614 = vadd.f32 %v3420, %v3584
        %v3615 = vadd.f32 %v3421, %v3589
        %v3616 = vadd.f32 %v3422, %v3594
        %v3617 = vadd.f32 %v3423, %v3599
        %s3618 = scalar_lea.vmem [#allocation4], 48
        %v3619 = vld [vmem:[%s3618] sm:$0xff]
        %v3620 = vld [vmem:[%s3618 + $0x8] sm:$0xff]
        %v3621 = vld [vmem:[%s3618 + $0x18] sm:$0xff]
        %v3622 = vld [vmem:[%s3618 + $0x20] sm:$0xff]
        %v3623 = vld [vmem:[%s3618 + $0x30] sm:$0xff]
        %v3624 = vld [vmem:[%s3618 + $0x38] sm:$0xff]
        %v3625 = vld [vmem:[%s3618 + $0x48] sm:$0xff]
        %v3626 = vld [vmem:[%s3618 + $0x50] sm:$0xff]
        %v3627 = vld [vmem:[%s3618 + $0x60] sm:$0xff]
        %v3628 = vld [vmem:[%s3618 + $0x68] sm:$0xff]
        %v3629 = vld [vmem:[%s3618 + $0x78] sm:$0xff]
        %v3630 = vld [vmem:[%s3618 + $0x80] sm:$0xff]
        %v3631 = vld [vmem:[%s3618 + $0x90] sm:$0xff]
        %v3632 = vld [vmem:[%s3618 + $0x98] sm:$0xff]
        %v3633 = vld [vmem:[%s3618 + $0xa8] sm:$0xff]
        %v3634 = vld [vmem:[%s3618 + $0xb0] sm:$0xff]
        %s3635 = scalar_lea.vmem [#allocation10], 768
        %v3636 = vld [vmem:[%s3635] sm:$0xff]
        %v3637 = vld [vmem:[%s3635 + $0x8] sm:$0xff]
        %v3638 = vld [vmem:[%s3635 + $0x10] sm:$0xff]
        %v3639 = vld [vmem:[%s3635 + $0x18] sm:$0xff]
        %v3640 = vld [vmem:[%s3635 + $0x20] sm:$0xff]
        %v3641 = vld [vmem:[%s3635 + $0x28] sm:$0xff]
        %v3642 = vld [vmem:[%s3635 + $0x30] sm:$0xff]
        %v3643 = vld [vmem:[%s3635 + $0x38] sm:$0xff]
        %v3644 = vld [vmem:[%s3635 + $0x40] sm:$0xff]
        %v3645 = vld [vmem:[%s3635 + $0x48] sm:$0xff]
        %v3646 = vld [vmem:[%s3635 + $0x50] sm:$0xff]
        %v3647 = vld [vmem:[%s3635 + $0x58] sm:$0xff]
        %v3648 = vld [vmem:[%s3635 + $0x60] sm:$0xff]
        %v3649 = vld [vmem:[%s3635 + $0x68] sm:$0xff]
        %v3650 = vld [vmem:[%s3635 + $0x70] sm:$0xff]
        %v3651 = vld [vmem:[%s3635 + $0x78] sm:$0xff]
        %3652 = vmatprep.subr.mxu0 0.0
        %3653 = vmatpush1.msra.mxu0 %v3636
        %3654 = vmatprep.subr.mxu0 0.0
        %3655 = vmatpush1.msra.mxu0 %v3637
        %3656 = vmatprep.subr.mxu0 0.0
        %3657 = vmatpush1.msra.mxu0 %v3638
        %3658 = vmatprep.subr.mxu0 0.0
        %3659 = vmatpush1.msra.mxu0 %v3639
        %3660 = vmatprep.subr.mxu0 0.0
        %3661 = vmatpush1.msra.mxu0 %v3640
        %3662 = vmatprep.subr.mxu0 0.0
        %3663 = vmatpush1.msra.mxu0 %v3641
        %3664 = vmatprep.subr.mxu0 0.0
        %3665 = vmatpush1.msra.mxu0 %v3642
        %3666 = vmatprep.subr.mxu0 0.0
        %3667 = vmatpush1.msra.mxu0 %v3643
        %3668 = vmatprep.subr.mxu0 0.0
        %3669 = vmatpush1.msra.mxu0 %v3644
        %3670 = vmatprep.subr.mxu0 0.0
        %3671 = vmatpush1.msra.mxu0 %v3645
        %3672 = vmatprep.subr.mxu0 0.0
        %3673 = vmatpush1.msra.mxu0 %v3646
        %3674 = vmatprep.subr.mxu0 0.0
        %3675 = vmatpush1.msra.mxu0 %v3647
        %3676 = vmatprep.subr.mxu0 0.0
        %3677 = vmatpush1.msra.mxu0 %v3648
        %3678 = vmatprep.subr.mxu0 0.0
        %3679 = vmatpush1.msra.mxu0 %v3649
        %3680 = vmatprep.subr.mxu0 0.0
        %3681 = vmatpush1.msra.mxu0 %v3650
        %3682 = vmatprep.subr.mxu0 0.0
        %3683 = vmatpush1.msra.mxu0 %v3651
        %3684 = vmatprep.subr.mxu0 0.0
        %3685 = vmatpush1.msra.mxu0 0.0
        %3686 = vmatprep.subr.mxu0 0.0
        %3687 = vmatpush1.msra.mxu0 0.0
        %3688 = vmatprep.subr.mxu0 0.0
        %3689 = vmatpush1.msra.mxu0 0.0
        %3690 = vmatprep.subr.mxu0 0.0
        %3691 = vmatpush1.msra.mxu0 0.0
        %3692 = vmatprep.subr.mxu0 0.0
        %3693 = vmatpush1.msra.mxu0 0.0
        %3694 = vmatprep.subr.mxu0 0.0
        %3695 = vmatpush1.msra.mxu0 0.0
        %3696 = vmatprep.subr.mxu0 0.0
        %3697 = vmatpush1.msra.mxu0 0.0
        %3698 = vmatprep.subr.mxu0 0.0
        %3699 = vmatpush1.msra.mxu0 0.0
        %3700 = vmatprep.subr.mxu0 0.0
        %3701 = vmatpush1.msra.mxu0 0.0
        %3702 = vmatprep.subr.mxu0 0.0
        %3703 = vmatpush1.msra.mxu0 0.0
        %3704 = vmatprep.subr.mxu0 0.0
        %3705 = vmatpush1.msra.mxu0 0.0
        %3706 = vmatprep.subr.mxu0 0.0
        %3707 = vmatpush1.msra.mxu0 0.0
        %3708 = vmatprep.subr.mxu0 0.0
        %3709 = vmatpush1.msra.mxu0 0.0
        %3710 = vmatprep.subr.mxu0 0.0
        %3711 = vmatpush1.msra.mxu0 0.0
        %3712 = vmatprep.subr.mxu0 0.0
        %3713 = vmatpush1.msra.mxu0 0.0
        %3714 = vmatprep.subr.mxu0 0.0
        %3715 = vmatpush1.msra.mxu0 0.0
        %3716 = vmatprep.mubr.f32.mxu0 0.0
        %3717 = vmatmul.mubr.f32.gmra.mrb[0].mxu0 %v3619
        %v3718 = vpop.f32.mrb[0].mxu0
        %v3719 = vadd.f32 0.0, %v3718
        %v3720 = vpop.f32.mrb[0].mxu0
        %3721 = vmatprep.mubr.f32.mxu0 0.0
        %3722 = vmatmul.mubr.f32.gmra.mrb[0].mxu0 %v3620
        %v3723 = vpop.f32.mrb[0].mxu0
        %v3724 = vadd.f32 0.0, %v3723
        %v3725 = vpop.f32.mrb[0].mxu0
        %3726 = vmatprep.mubr.f32.mxu0 0.0
        %3727 = vmatmul.mubr.f32.gmra.mrb[0].mxu0 %v3621
        %v3728 = vpop.f32.mrb[0].mxu0
        %v3729 = vadd.f32 0.0, %v3728
        %v3730 = vpop.f32.mrb[0].mxu0
        %3731 = vmatprep.mubr.f32.mxu0 0.0
        %3732 = vmatmul.mubr.f32.gmra.mrb[0].mxu0 %v3622
        %v3733 = vpop.f32.mrb[0].mxu0
        %v3734 = vadd.f32 0.0, %v3733
        %v3735 = vpop.f32.mrb[0].mxu0
        %3736 = vmatprep.mubr.f32.mxu0 0.0
        %3737 = vmatmul.mubr.f32.gmra.mrb[0].mxu0 %v3623
        %v3738 = vpop.f32.mrb[0].mxu0
        %v3739 = vadd.f32 0.0, %v3738
        %v3740 = vpop.f32.mrb[0].mxu0
        %3741 = vmatprep.mubr.f32.mxu0 0.0
        %3742 = vmatmul.mubr.f32.gmra.mrb[0].mxu0 %v3624
        %v3743 = vpop.f32.mrb[0].mxu0
        %v3744 = vadd.f32 0.0, %v3743
        %v3745 = vpop.f32.mrb[0].mxu0
        %3746 = vmatprep.mubr.f32.mxu0 0.0
        %3747 = vmatmul.mubr.f32.gmra.mrb[0].mxu0 %v3625
        %v3748 = vpop.f32.mrb[0].mxu0
        %v3749 = vadd.f32 0.0, %v3748
        %v3750 = vpop.f32.mrb[0].mxu0
        %3751 = vmatprep.mubr.f32.mxu0 0.0
        %3752 = vmatmul.mubr.f32.gmra.mrb[0].mxu0 %v3626
        %v3753 = vpop.f32.mrb[0].mxu0
        %v3754 = vadd.f32 0.0, %v3753
        %v3755 = vpop.f32.mrb[0].mxu0
        %3756 = vmatprep.mubr.f32.mxu0 0.0
        %3757 = vmatmul.mubr.f32.gmra.mrb[0].mxu0 %v3627
        %v3758 = vpop.f32.mrb[0].mxu0
        %v3759 = vadd.f32 0.0, %v3758
        %v3760 = vpop.f32.mrb[0].mxu0
        %3761 = vmatprep.mubr.f32.mxu0 0.0
        %3762 = vmatmul.mubr.f32.gmra.mrb[0].mxu0 %v3628
        %v3763 = vpop.f32.mrb[0].mxu0
        %v3764 = vadd.f32 0.0, %v3763
        %v3765 = vpop.f32.mrb[0].mxu0
        %3766 = vmatprep.mubr.f32.mxu0 0.0
        %3767 = vmatmul.mubr.f32.gmra.mrb[0].mxu0 %v3629
        %v3768 = vpop.f32.mrb[0].mxu0
        %v3769 = vadd.f32 0.0, %v3768
        %v3770 = vpop.f32.mrb[0].mxu0
        %3771 = vmatprep.mubr.f32.mxu0 0.0
        %3772 = vmatmul.mubr.f32.gmra.mrb[0].mxu0 %v3630
        %v3773 = vpop.f32.mrb[0].mxu0
        %v3774 = vadd.f32 0.0, %v3773
        %v3775 = vpop.f32.mrb[0].mxu0
        %3776 = vmatprep.mubr.f32.mxu0 0.0
        %3777 = vmatmul.mubr.f32.gmra.mrb[0].mxu0 %v3631
        %v3778 = vpop.f32.mrb[0].mxu0
        %v3779 = vadd.f32 0.0, %v3778
        %v3780 = vpop.f32.mrb[0].mxu0
        %3781 = vmatprep.mubr.f32.mxu0 0.0
        %3782 = vmatmul.mubr.f32.gmra.mrb[0].mxu0 %v3632
        %v3783 = vpop.f32.mrb[0].mxu0
        %v3784 = vadd.f32 0.0, %v3783
        %v3785 = vpop.f32.mrb[0].mxu0
        %3786 = vmatprep.mubr.f32.mxu0 0.0
        %3787 = vmatmul.mubr.f32.gmra.mrb[0].mxu0 %v3633
        %v3788 = vpop.f32.mrb[0].mxu0
        %v3789 = vadd.f32 0.0, %v3788
        %v3790 = vpop.f32.mrb[0].mxu0
        %3791 = vmatprep.mubr.f32.mxu0 0.0
        %3792 = vmatmul.mubr.f32.gmra.mrb[0].mxu0 %v3634
        %v3793 = vpop.f32.mrb[0].mxu0
        %v3794 = vadd.f32 0.0, %v3793
        %v3795 = vpop.f32.mrb[0].mxu0
        %3796 = vdwg.mxu0
        %v3797 = vadd.f32 %v3602, %v3719
        %v3798 = vadd.f32 %v3603, %v3724
        %v3799 = vadd.f32 %v3604, %v3729
        %v3800 = vadd.f32 %v3605, %v3734
        %v3801 = vadd.f32 %v3606, %v3739
        %v3802 = vadd.f32 %v3607, %v3744
        %v3803 = vadd.f32 %v3608, %v3749
        %v3804 = vadd.f32 %v3609, %v3754
        %v3805 = vadd.f32 %v3610, %v3759
        %v3806 = vadd.f32 %v3611, %v3764
        %v3807 = vadd.f32 %v3612, %v3769
        %v3808 = vadd.f32 %v3613, %v3774
        %v3809 = vadd.f32 %v3614, %v3779
        %v3810 = vadd.f32 %v3615, %v3784
        %v3811 = vadd.f32 %v3616, %v3789
        %v3812 = vadd.f32 %v3617, %v3794
        %v3813 = vld [vmem:[%s3618 + $0x1] sm:$0xff]
        %v3814 = vld [vmem:[%s3618 + $0x9] sm:$0xff]
        %v3815 = vld [vmem:[%s3618 + $0x19] sm:$0xff]
        %v3816 = vld [vmem:[%s3618 + $0x21] sm:$0xff]
        %v3817 = vld [vmem:[%s3618 + $0x31] sm:$0xff]
        %v3818 = vld [vmem:[%s3618 + $0x39] sm:$0xff]
        %v3819 = vld [vmem:[%s3618 + $0x49] sm:$0xff]
        %v3820 = vld [vmem:[%s3618 + $0x51] sm:$0xff]
        %v3821 = vld [vmem:[%s3618 + $0x61] sm:$0xff]
        %v3822 = vld [vmem:[%s3618 + $0x69] sm:$0xff]
        %v3823 = vld [vmem:[%s3618 + $0x79] sm:$0xff]
        %v3824 = vld [vmem:[%s3618 + $0x81] sm:$0xff]
        %v3825 = vld [vmem:[%s3618 + $0x91] sm:$0xff]
        %v3826 = vld [vmem:[%s3618 + $0x99] sm:$0xff]
        %v3827 = vld [vmem:[%s3618 + $0xa9] sm:$0xff]
        %v3828 = vld [vmem:[%s3618 + $0xb1] sm:$0xff]
        %s3829 = scalar_lea.vmem [#allocation10], 896
        %v3830 = vld [vmem:[%s3829] sm:$0xff]
        %v3831 = vld [vmem:[%s3829 + $0x8] sm:$0xff]
        %v3832 = vld [vmem:[%s3829 + $0x10] sm:$0xff]
        %v3833 = vld [vmem:[%s3829 + $0x18] sm:$0xff]
        %v3834 = vld [vmem:[%s3829 + $0x20] sm:$0xff]
        %v3835 = vld [vmem:[%s3829 + $0x28] sm:$0xff]
        %v3836 = vld [vmem:[%s3829 + $0x30] sm:$0xff]
        %v3837 = vld [vmem:[%s3829 + $0x38] sm:$0xff]
        %v3838 = vld [vmem:[%s3829 + $0x40] sm:$0xff]
        %v3839 = vld [vmem:[%s3829 + $0x48] sm:$0xff]
        %v3840 = vld [vmem:[%s3829 + $0x50] sm:$0xff]
        %v3841 = vld [vmem:[%s3829 + $0x58] sm:$0xff]
        %v3842 = vld [vmem:[%s3829 + $0x60] sm:$0xff]
        %v3843 = vld [vmem:[%s3829 + $0x68] sm:$0xff]
        %v3844 = vld [vmem:[%s3829 + $0x70] sm:$0xff]
        %v3845 = vld [vmem:[%s3829 + $0x78] sm:$0xff]
        %3846 = vmatprep.subr.mxu0 0.0
        %3847 = vmatpush1.msra.mxu0 %v3830
        %3848 = vmatprep.subr.mxu0 0.0
        %3849 = vmatpush1.msra.mxu0 %v3831
        %3850 = vmatprep.subr.mxu0 0.0
        %3851 = vmatpush1.msra.mxu0 %v3832
        %3852 = vmatprep.subr.mxu0 0.0
        %3853 = vmatpush1.msra.mxu0 %v3833
        %3854 = vmatprep.subr.mxu0 0.0
        %3855 = vmatpush1.msra.mxu0 %v3834
        %3856 = vmatprep.subr.mxu0 0.0
        %3857 = vmatpush1.msra.mxu0 %v3835
        %3858 = vmatprep.subr.mxu0 0.0
        %3859 = vmatpush1.msra.mxu0 %v3836
        %3860 = vmatprep.subr.mxu0 0.0
        %3861 = vmatpush1.msra.mxu0 %v3837
        %3862 = vmatprep.subr.mxu0 0.0
        %3863 = vmatpush1.msra.mxu0 %v3838
        %3864 = vmatprep.subr.mxu0 0.0
        %3865 = vmatpush1.msra.mxu0 %v3839
        %3866 = vmatprep.subr.mxu0 0.0
        %3867 = vmatpush1.msra.mxu0 %v3840
        %3868 = vmatprep.subr.mxu0 0.0
        %3869 = vmatpush1.msra.mxu0 %v3841
        %3870 = vmatprep.subr.mxu0 0.0
        %3871 = vmatpush1.msra.mxu0 %v3842
        %3872 = vmatprep.subr.mxu0 0.0
        %3873 = vmatpush1.msra.mxu0 %v3843
        %3874 = vmatprep.subr.mxu0 0.0
        %3875 = vmatpush1.msra.mxu0 %v3844
        %3876 = vmatprep.subr.mxu0 0.0
        %3877 = vmatpush1.msra.mxu0 %v3845
        %3878 = vmatprep.subr.mxu0 0.0
        %3879 = vmatpush1.msra.mxu0 0.0
        %3880 = vmatprep.subr.mxu0 0.0
        %3881 = vmatpush1.msra.mxu0 0.0
        %3882 = vmatprep.subr.mxu0 0.0
        %3883 = vmatpush1.msra.mxu0 0.0
        %3884 = vmatprep.subr.mxu0 0.0
        %3885 = vmatpush1.msra.mxu0 0.0
        %3886 = vmatprep.subr.mxu0 0.0
        %3887 = vmatpush1.msra.mxu0 0.0
        %3888 = vmatprep.subr.mxu0 0.0
        %3889 = vmatpush1.msra.mxu0 0.0
        %3890 = vmatprep.subr.mxu0 0.0
        %3891 = vmatpush1.msra.mxu0 0.0
        %3892 = vmatprep.subr.mxu0 0.0
        %3893 = vmatpush1.msra.mxu0 0.0
        %3894 = vmatprep.subr.mxu0 0.0
        %3895 = vmatpush1.msra.mxu0 0.0
        %3896 = vmatprep.subr.mxu0 0.0
        %3897 = vmatpush1.msra.mxu0 0.0
        %3898 = vmatprep.subr.mxu0 0.0
        %3899 = vmatpush1.msra.mxu0 0.0
        %3900 = vmatprep.subr.mxu0 0.0
        %3901 = vmatpush1.msra.mxu0 0.0
        %3902 = vmatprep.subr.mxu0 0.0
        %3903 = vmatpush1.msra.mxu0 0.0
        %3904 = vmatprep.subr.mxu0 0.0
        %3905 = vmatpush1.msra.mxu0 0.0
        %3906 = vmatprep.subr.mxu0 0.0
        %3907 = vmatpush1.msra.mxu0 0.0
        %3908 = vmatprep.subr.mxu0 0.0
        %3909 = vmatpush1.msra.mxu0 0.0
        %3910 = vmatprep.mubr.f32.mxu0 0.0
        %3911 = vmatmul.mubr.f32.gmra.mrb[0].mxu0 %v3813
        %v3912 = vpop.f32.mrb[0].mxu0
        %v3913 = vadd.f32 0.0, %v3912
        %v3914 = vpop.f32.mrb[0].mxu0
        %3915 = vmatprep.mubr.f32.mxu0 0.0
        %3916 = vmatmul.mubr.f32.gmra.mrb[0].mxu0 %v3814
        %v3917 = vpop.f32.mrb[0].mxu0
        %v3918 = vadd.f32 0.0, %v3917
        %v3919 = vpop.f32.mrb[0].mxu0
        %3920 = vmatprep.mubr.f32.mxu0 0.0
        %3921 = vmatmul.mubr.f32.gmra.mrb[0].mxu0 %v3815
        %v3922 = vpop.f32.mrb[0].mxu0
        %v3923 = vadd.f32 0.0, %v3922
        %v3924 = vpop.f32.mrb[0].mxu0
        %3925 = vmatprep.mubr.f32.mxu0 0.0
        %3926 = vmatmul.mubr.f32.gmra.mrb[0].mxu0 %v3816
        %v3927 = vpop.f32.mrb[0].mxu0
        %v3928 = vadd.f32 0.0, %v3927
        %v3929 = vpop.f32.mrb[0].mxu0
        %3930 = vmatprep.mubr.f32.mxu0 0.0
        %3931 = vmatmul.mubr.f32.gmra.mrb[0].mxu0 %v3817
        %v3932 = vpop.f32.mrb[0].mxu0
        %v3933 = vadd.f32 0.0, %v3932
        %v3934 = vpop.f32.mrb[0].mxu0
        %3935 = vmatprep.mubr.f32.mxu0 0.0
        %3936 = vmatmul.mubr.f32.gmra.mrb[0].mxu0 %v3818
        %v3937 = vpop.f32.mrb[0].mxu0
        %v3938 = vadd.f32 0.0, %v3937
        %v3939 = vpop.f32.mrb[0].mxu0
        %3940 = vmatprep.mubr.f32.mxu0 0.0
        %3941 = vmatmul.mubr.f32.gmra.mrb[0].mxu0 %v3819
        %v3942 = vpop.f32.mrb[0].mxu0
        %v3943 = vadd.f32 0.0, %v3942
        %v3944 = vpop.f32.mrb[0].mxu0
        %3945 = vmatprep.mubr.f32.mxu0 0.0
        %3946 = vmatmul.mubr.f32.gmra.mrb[0].mxu0 %v3820
        %v3947 = vpop.f32.mrb[0].mxu0
        %v3948 = vadd.f32 0.0, %v3947
        %v3949 = vpop.f32.mrb[0].mxu0
        %3950 = vmatprep.mubr.f32.mxu0 0.0
        %3951 = vmatmul.mubr.f32.gmra.mrb[0].mxu0 %v3821
        %v3952 = vpop.f32.mrb[0].mxu0
        %v3953 = vadd.f32 0.0, %v3952
        %v3954 = vpop.f32.mrb[0].mxu0
        %3955 = vmatprep.mubr.f32.mxu0 0.0
        %3956 = vmatmul.mubr.f32.gmra.mrb[0].mxu0 %v3822
        %v3957 = vpop.f32.mrb[0].mxu0
        %v3958 = vadd.f32 0.0, %v3957
        %v3959 = vpop.f32.mrb[0].mxu0
        %3960 = vmatprep.mubr.f32.mxu0 0.0
        %3961 = vmatmul.mubr.f32.gmra.mrb[0].mxu0 %v3823
        %v3962 = vpop.f32.mrb[0].mxu0
        %v3963 = vadd.f32 0.0, %v3962
        %v3964 = vpop.f32.mrb[0].mxu0
        %3965 = vmatprep.mubr.f32.mxu0 0.0
        %3966 = vmatmul.mubr.f32.gmra.mrb[0].mxu0 %v3824
        %v3967 = vpop.f32.mrb[0].mxu0
        %v3968 = vadd.f32 0.0, %v3967
        %v3969 = vpop.f32.mrb[0].mxu0
        %3970 = vmatprep.mubr.f32.mxu0 0.0
        %3971 = vmatmul.mubr.f32.gmra.mrb[0].mxu0 %v3825
        %v3972 = vpop.f32.mrb[0].mxu0
        %v3973 = vadd.f32 0.0, %v3972
        %v3974 = vpop.f32.mrb[0].mxu0
        %3975 = vmatprep.mubr.f32.mxu0 0.0
        %3976 = vmatmul.mubr.f32.gmra.mrb[0].mxu0 %v3826
        %v3977 = vpop.f32.mrb[0].mxu0
        %v3978 = vadd.f32 0.0, %v3977
        %v3979 = vpop.f32.mrb[0].mxu0
        %3980 = vmatprep.mubr.f32.mxu0 0.0
        %3981 = vmatmul.mubr.f32.gmra.mrb[0].mxu0 %v3827
        %v3982 = vpop.f32.mrb[0].mxu0
        %v3983 = vadd.f32 0.0, %v3982
        %v3984 = vpop.f32.mrb[0].mxu0
        %3985 = vmatprep.mubr.f32.mxu0 0.0
        %3986 = vmatmul.mubr.f32.gmra.mrb[0].mxu0 %v3828
        %v3987 = vpop.f32.mrb[0].mxu0
        %v3988 = vadd.f32 0.0, %v3987
        %v3989 = vpop.f32.mrb[0].mxu0
        %3990 = vdwg.mxu0
        %v3991 = vadd.f32 %v3797, %v3913
        %v3992 = vadd.f32 %v3798, %v3918
        %v3993 = vadd.f32 %v3799, %v3923
        %v3994 = vadd.f32 %v3800, %v3928
        %v3995 = vadd.f32 %v3801, %v3933
        %v3996 = vadd.f32 %v3802, %v3938
        %v3997 = vadd.f32 %v3803, %v3943
        %v3998 = vadd.f32 %v3804, %v3948
        %v3999 = vadd.f32 %v3805, %v3953
        %v4000 = vadd.f32 %v3806, %v3958
        %v4001 = vadd.f32 %v3807, %v3963
        %v4002 = vadd.f32 %v3808, %v3968
        %v4003 = vadd.f32 %v3809, %v3973
        %v4004 = vadd.f32 %v3810, %v3978
        %v4005 = vadd.f32 %v3811, %v3983
        %v4006 = vadd.f32 %v3812, %v3988
        %v4007 = vld [vmem:[%s3618 + $0x2] sm:$0xff]
        %v4008 = vld [vmem:[%s3618 + $0xa] sm:$0xff]
        %v4009 = vld [vmem:[%s3618 + $0x1a] sm:$0xff]
        %v4010 = vld [vmem:[%s3618 + $0x22] sm:$0xff]
        %v4011 = vld [vmem:[%s3618 + $0x32] sm:$0xff]
        %v4012 = vld [vmem:[%s3618 + $0x3a] sm:$0xff]
        %v4013 = vld [vmem:[%s3618 + $0x4a] sm:$0xff]
        %v4014 = vld [vmem:[%s3618 + $0x52] sm:$0xff]
        %v4015 = vld [vmem:[%s3618 + $0x62] sm:$0xff]
        %v4016 = vld [vmem:[%s3618 + $0x6a] sm:$0xff]
        %v4017 = vld [vmem:[%s3618 + $0x7a] sm:$0xff]
        %v4018 = vld [vmem:[%s3618 + $0x82] sm:$0xff]
        %v4019 = vld [vmem:[%s3618 + $0x92] sm:$0xff]
        %v4020 = vld [vmem:[%s3618 + $0x9a] sm:$0xff]
        %v4021 = vld [vmem:[%s3618 + $0xaa] sm:$0xff]
        %v4022 = vld [vmem:[%s3618 + $0xb2] sm:$0xff]
        %s4023 = scalar_lea.vmem [#allocation10], 1024
        %v4024 = vld [vmem:[%s4023] sm:$0xff]
        %v4025 = vld [vmem:[%s4023 + $0x8] sm:$0xff]
        %v4026 = vld [vmem:[%s4023 + $0x10] sm:$0xff]
        %v4027 = vld [vmem:[%s4023 + $0x18] sm:$0xff]
        %v4028 = vld [vmem:[%s4023 + $0x20] sm:$0xff]
        %v4029 = vld [vmem:[%s4023 + $0x28] sm:$0xff]
        %v4030 = vld [vmem:[%s4023 + $0x30] sm:$0xff]
        %v4031 = vld [vmem:[%s4023 + $0x38] sm:$0xff]
        %v4032 = vld [vmem:[%s4023 + $0x40] sm:$0xff]
        %v4033 = vld [vmem:[%s4023 + $0x48] sm:$0xff]
        %v4034 = vld [vmem:[%s4023 + $0x50] sm:$0xff]
        %v4035 = vld [vmem:[%s4023 + $0x58] sm:$0xff]
        %v4036 = vld [vmem:[%s4023 + $0x60] sm:$0xff]
        %v4037 = vld [vmem:[%s4023 + $0x68] sm:$0xff]
        %v4038 = vld [vmem:[%s4023 + $0x70] sm:$0xff]
        %v4039 = vld [vmem:[%s4023 + $0x78] sm:$0xff]
        %4040 = vmatprep.subr.mxu0 0.0
        %4041 = vmatpush1.msra.mxu0 %v4024
        %4042 = vmatprep.subr.mxu0 0.0
        %4043 = vmatpush1.msra.mxu0 %v4025
        %4044 = vmatprep.subr.mxu0 0.0
        %4045 = vmatpush1.msra.mxu0 %v4026
        %4046 = vmatprep.subr.mxu0 0.0
        %4047 = vmatpush1.msra.mxu0 %v4027
        %4048 = vmatprep.subr.mxu0 0.0
        %4049 = vmatpush1.msra.mxu0 %v4028
        %4050 = vmatprep.subr.mxu0 0.0
        %4051 = vmatpush1.msra.mxu0 %v4029
        %4052 = vmatprep.subr.mxu0 0.0
        %4053 = vmatpush1.msra.mxu0 %v4030
        %4054 = vmatprep.subr.mxu0 0.0
        %4055 = vmatpush1.msra.mxu0 %v4031
        %4056 = vmatprep.subr.mxu0 0.0
        %4057 = vmatpush1.msra.mxu0 %v4032
        %4058 = vmatprep.subr.mxu0 0.0
        %4059 = vmatpush1.msra.mxu0 %v4033
        %4060 = vmatprep.subr.mxu0 0.0
        %4061 = vmatpush1.msra.mxu0 %v4034
        %4062 = vmatprep.subr.mxu0 0.0
        %4063 = vmatpush1.msra.mxu0 %v4035
        %4064 = vmatprep.subr.mxu0 0.0
        %4065 = vmatpush1.msra.mxu0 %v4036
        %4066 = vmatprep.subr.mxu0 0.0
        %4067 = vmatpush1.msra.mxu0 %v4037
        %4068 = vmatprep.subr.mxu0 0.0
        %4069 = vmatpush1.msra.mxu0 %v4038
        %4070 = vmatprep.subr.mxu0 0.0
        %4071 = vmatpush1.msra.mxu0 %v4039
        %4072 = vmatprep.subr.mxu0 0.0
        %4073 = vmatpush1.msra.mxu0 0.0
        %4074 = vmatprep.subr.mxu0 0.0
        %4075 = vmatpush1.msra.mxu0 0.0
        %4076 = vmatprep.subr.mxu0 0.0
        %4077 = vmatpush1.msra.mxu0 0.0
        %4078 = vmatprep.subr.mxu0 0.0
        %4079 = vmatpush1.msra.mxu0 0.0
        %4080 = vmatprep.subr.mxu0 0.0
        %4081 = vmatpush1.msra.mxu0 0.0
        %4082 = vmatprep.subr.mxu0 0.0
        %4083 = vmatpush1.msra.mxu0 0.0
        %4084 = vmatprep.subr.mxu0 0.0
        %4085 = vmatpush1.msra.mxu0 0.0
        %4086 = vmatprep.subr.mxu0 0.0
        %4087 = vmatpush1.msra.mxu0 0.0
        %4088 = vmatprep.subr.mxu0 0.0
        %4089 = vmatpush1.msra.mxu0 0.0
        %4090 = vmatprep.subr.mxu0 0.0
        %4091 = vmatpush1.msra.mxu0 0.0
        %4092 = vmatprep.subr.mxu0 0.0
        %4093 = vmatpush1.msra.mxu0 0.0
        %4094 = vmatprep.subr.mxu0 0.0
        %4095 = vmatpush1.msra.mxu0 0.0
        %4096 = vmatprep.subr.mxu0 0.0
        %4097 = vmatpush1.msra.mxu0 0.0
        %4098 = vmatprep.subr.mxu0 0.0
        %4099 = vmatpush1.msra.mxu0 0.0
        %4100 = vmatprep.subr.mxu0 0.0
        %4101 = vmatpush1.msra.mxu0 0.0
        %4102 = vmatprep.subr.mxu0 0.0
        %4103 = vmatpush1.msra.mxu0 0.0
        %4104 = vmatprep.mubr.f32.mxu0 0.0
        %4105 = vmatmul.mubr.f32.gmra.mrb[0].mxu0 %v4007
        %v4106 = vpop.f32.mrb[0].mxu0
        %v4107 = vadd.f32 0.0, %v4106
        %v4108 = vpop.f32.mrb[0].mxu0
        %4109 = vmatprep.mubr.f32.mxu0 0.0
        %4110 = vmatmul.mubr.f32.gmra.mrb[0].mxu0 %v4008
        %v4111 = vpop.f32.mrb[0].mxu0
        %v4112 = vadd.f32 0.0, %v4111
        %v4113 = vpop.f32.mrb[0].mxu0
        %4114 = vmatprep.mubr.f32.mxu0 0.0
        %4115 = vmatmul.mubr.f32.gmra.mrb[0].mxu0 %v4009
        %v4116 = vpop.f32.mrb[0].mxu0
        %v4117 = vadd.f32 0.0, %v4116
        %v4118 = vpop.f32.mrb[0].mxu0
        %4119 = vmatprep.mubr.f32.mxu0 0.0
        %4120 = vmatmul.mubr.f32.gmra.mrb[0].mxu0 %v4010
        %v4121 = vpop.f32.mrb[0].mxu0
        %v4122 = vadd.f32 0.0, %v4121
        %v4123 = vpop.f32.mrb[0].mxu0
        %4124 = vmatprep.mubr.f32.mxu0 0.0
        %4125 = vmatmul.mubr.f32.gmra.mrb[0].mxu0 %v4011
        %v4126 = vpop.f32.mrb[0].mxu0
        %v4127 = vadd.f32 0.0, %v4126
        %v4128 = vpop.f32.mrb[0].mxu0
        %4129 = vmatprep.mubr.f32.mxu0 0.0
        %4130 = vmatmul.mubr.f32.gmra.mrb[0].mxu0 %v4012
        %v4131 = vpop.f32.mrb[0].mxu0
        %v4132 = vadd.f32 0.0, %v4131
        %v4133 = vpop.f32.mrb[0].mxu0
        %4134 = vmatprep.mubr.f32.mxu0 0.0
        %4135 = vmatmul.mubr.f32.gmra.mrb[0].mxu0 %v4013
        %v4136 = vpop.f32.mrb[0].mxu0
        %v4137 = vadd.f32 0.0, %v4136
        %v4138 = vpop.f32.mrb[0].mxu0
        %4139 = vmatprep.mubr.f32.mxu0 0.0
        %4140 = vmatmul.mubr.f32.gmra.mrb[0].mxu0 %v4014
        %v4141 = vpop.f32.mrb[0].mxu0
        %v4142 = vadd.f32 0.0, %v4141
        %v4143 = vpop.f32.mrb[0].mxu0
        %4144 = vmatprep.mubr.f32.mxu0 0.0
        %4145 = vmatmul.mubr.f32.gmra.mrb[0].mxu0 %v4015
        %v4146 = vpop.f32.mrb[0].mxu0
        %v4147 = vadd.f32 0.0, %v4146
        %v4148 = vpop.f32.mrb[0].mxu0
        %4149 = vmatprep.mubr.f32.mxu0 0.0
        %4150 = vmatmul.mubr.f32.gmra.mrb[0].mxu0 %v4016
        %v4151 = vpop.f32.mrb[0].mxu0
        %v4152 = vadd.f32 0.0, %v4151
        %v4153 = vpop.f32.mrb[0].mxu0
        %4154 = vmatprep.mubr.f32.mxu0 0.0
        %4155 = vmatmul.mubr.f32.gmra.mrb[0].mxu0 %v4017
        %v4156 = vpop.f32.mrb[0].mxu0
        %v4157 = vadd.f32 0.0, %v4156
        %v4158 = vpop.f32.mrb[0].mxu0
        %4159 = vmatprep.mubr.f32.mxu0 0.0
        %4160 = vmatmul.mubr.f32.gmra.mrb[0].mxu0 %v4018
        %v4161 = vpop.f32.mrb[0].mxu0
        %v4162 = vadd.f32 0.0, %v4161
        %v4163 = vpop.f32.mrb[0].mxu0
        %4164 = vmatprep.mubr.f32.mxu0 0.0
        %4165 = vmatmul.mubr.f32.gmra.mrb[0].mxu0 %v4019
        %v4166 = vpop.f32.mrb[0].mxu0
        %v4167 = vadd.f32 0.0, %v4166
        %v4168 = vpop.f32.mrb[0].mxu0
        %4169 = vmatprep.mubr.f32.mxu0 0.0
        %4170 = vmatmul.mubr.f32.gmra.mrb[0].mxu0 %v4020
        %v4171 = vpop.f32.mrb[0].mxu0
        %v4172 = vadd.f32 0.0, %v4171
        %v4173 = vpop.f32.mrb[0].mxu0
        %4174 = vmatprep.mubr.f32.mxu0 0.0
        %4175 = vmatmul.mubr.f32.gmra.mrb[0].mxu0 %v4021
        %v4176 = vpop.f32.mrb[0].mxu0
        %v4177 = vadd.f32 0.0, %v4176
        %v4178 = vpop.f32.mrb[0].mxu0
        %4179 = vmatprep.mubr.f32.mxu0 0.0
        %4180 = vmatmul.mubr.f32.gmra.mrb[0].mxu0 %v4022
        %v4181 = vpop.f32.mrb[0].mxu0
        %v4182 = vadd.f32 0.0, %v4181
        %v4183 = vpop.f32.mrb[0].mxu0
        %4184 = vdwg.mxu0
        %v4185 = vadd.f32 %v3991, %v4107
        %v4186 = vadd.f32 %v3992, %v4112
        %v4187 = vadd.f32 %v3993, %v4117
        %v4188 = vadd.f32 %v3994, %v4122
        %v4189 = vadd.f32 %v3995, %v4127
        %v4190 = vadd.f32 %v3996, %v4132
        %v4191 = vadd.f32 %v3997, %v4137
        %v4192 = vadd.f32 %v3998, %v4142
        %v4193 = vadd.f32 %v3999, %v4147
        %v4194 = vadd.f32 %v4000, %v4152
        %v4195 = vadd.f32 %v4001, %v4157
        %v4196 = vadd.f32 %v4002, %v4162
        %v4197 = vadd.f32 %v4003, %v4167
        %v4198 = vadd.f32 %v4004, %v4172
        %v4199 = vadd.f32 %v4005, %v4177
        %v4200 = vadd.f32 %v4006, %v4182
        %v4201 = vld [vmem:[#allocation11] sm:$0x1]
        %v4203 = vlaneseq
        %v4204 = vshrl.u32 %v4203, 7
        %v4205 = vsub.s32 0, %v4204
        %v4206 = vrot.slane %v4201, %v4205
        %v4208 = vadd.f32 %v4185, %v4206
        %v4209 = vadd.f32 %v4186, %v4206
        %v4210 = vadd.f32 %v4187, %v4206
        %v4211 = vadd.f32 %v4188, %v4206
        %v4212 = vadd.f32 %v4189, %v4206
        %v4213 = vadd.f32 %v4190, %v4206
        %v4214 = vadd.f32 %v4191, %v4206
        %v4215 = vadd.f32 %v4192, %v4206
        %v4216 = vadd.f32 %v4193, %v4206
        %v4217 = vadd.f32 %v4194, %v4206
        %v4218 = vadd.f32 %v4195, %v4206
        %v4219 = vadd.f32 %v4196, %v4206
        %v4220 = vadd.f32 %v4197, %v4206
        %v4221 = vadd.f32 %v4198, %v4206
        %v4222 = vadd.f32 %v4199, %v4206
        %v4223 = vadd.f32 %v4200, %v4206
        %v4224 = vmax.f32 %v4208, 0.0
        %v4225 = vmax.f32 %v4209, 0.0
        %v4226 = vmax.f32 %v4210, 0.0
        %v4227 = vmax.f32 %v4211, 0.0
        %v4228 = vmax.f32 %v4212, 0.0
        %v4229 = vmax.f32 %v4213, 0.0
        %v4230 = vmax.f32 %v4214, 0.0
        %v4231 = vmax.f32 %v4215, 0.0
        %v4232 = vmax.f32 %v4216, 0.0
        %v4233 = vmax.f32 %v4217, 0.0
        %v4234 = vmax.f32 %v4218, 0.0
        %v4235 = vmax.f32 %v4219, 0.0
        %v4236 = vmax.f32 %v4220, 0.0
        %v4237 = vmax.f32 %v4221, 0.0
        %v4238 = vmax.f32 %v4222, 0.0
        %v4239 = vmax.f32 %v4223, 0.0
        %4240 = vst [vmem:[%s245] sm:$0xff] %v4224
        %4241 = vst [vmem:[%s245 + $0x8] sm:$0xff] %v4225
        %4242 = vst [vmem:[%s245 + $0x10] sm:$0xff] %v4226
        %4243 = vst [vmem:[%s245 + $0x18] sm:$0xff] %v4227
        %4244 = vst [vmem:[%s245 + $0x20] sm:$0xff] %v4228
        %4245 = vst [vmem:[%s245 + $0x28] sm:$0xff] %v4229
        %4246 = vst [vmem:[%s245 + $0x30] sm:$0xff] %v4230
        %4247 = vst [vmem:[%s245 + $0x38] sm:$0xff] %v4231
        %4248 = vst [vmem:[%s245 + $0x40] sm:$0xff] %v4232
        %4249 = vst [vmem:[%s245 + $0x48] sm:$0xff] %v4233
        %4250 = vst [vmem:[%s245 + $0x50] sm:$0xff] %v4234
        %4251 = vst [vmem:[%s245 + $0x58] sm:$0xff] %v4235
        %4252 = vst [vmem:[%s245 + $0x60] sm:$0xff] %v4236
        %4253 = vst [vmem:[%s245 + $0x68] sm:$0xff] %v4237
        %4254 = vst [vmem:[%s245 + $0x70] sm:$0xff] %v4238
        %4255 = vst [vmem:[%s245 + $0x78] sm:$0xff] %v4239
        %s4256 = sand.u32 %s128, 1
        %s4257 = scalar_lea.sflag [#allocation7], %s4256
        %s4258 = sand.u32 %s128, 1
        %s4259 = smul.addr %s4258, 128
        %s4260 = scalar_lea.vmem [#allocation13], %s4259
        // Predicated region
        $region61: #{double_conv.1} parent=35 // pred_check
          %p4261 = pneg %p138
        $region62: #{double_conv.1} parent=35 // pred_check_branch
          %4263 = sbr.rel (%p4261) target = $region64
        $region63: #{double_conv.1} parent=35 // pred_region
          %s4264 = smul.u32 8, %s27
          %s4266 = ssub.s32 2048, 2048
          %4267 = vsyncadd %s4257, %s4266
          %s4268 = smul.addr %s4264, 2
          %s4269 = smul.addr %s26, 32
          %s4270 = sadd.s32 %s4268, %s4269
          %s4271 = smul.addr %s4270, 128
          %s4272 = scalar_lea.hbm %s5, %s4271
          %s4273 = sshll.u32 %s4260, 4
          %s4274 = int_to_ptr.vmem [resolvable:$true] %s4273
          %4279 = dma.vmem_to_hbm [thread:$0]  %s4274, 2048, %s4272, %s4257, 128, 128, 8
        $region64: #{double_conv.1} parent=35 // pred_fallthru
          _
      $region36: #{double_conv.1} parent=5 // pred_fallthru
        _
      %p4280 = scmp.le.s32.totalorder 2, %s17
      // Predicated region
      $region65: #{double_conv.1} parent=5 // pred_check
        %p4281 = pneg %p4280
      $region66: #{double_conv.1} parent=5 // pred_check_branch
        %4283 = sbr.rel (%p4281) target = $region68
      $region67: #{double_conv.1} parent=5 // pred_region
        %s4284 = ssub.s32 %s17, 2
        // Predicated region
        $region69: #{double_conv.1} parent=67 // pred_check
          %p4285 = pneg %p144
        $region70: #{double_conv.1} parent=67 // pred_check_branch
          %4287 = sbr.rel (%p4285) target = $region72
        $region71: #{double_conv.1} parent=67 // pred_region
          %s4288 = sand.u32 %s129, 1
          %s4289 = scalar_lea.sflag [#allocation7], %s4288
          %s4290 = sand.u32 %s129, 1
          %s4291 = smul.addr %s4290, 128
          %s4292 = scalar_lea.vmem [#allocation13], %s4291
          %4293 = dma.done %s4289, 2048
        $region72: #{double_conv.1} parent=67 // pred_fallthru
          _
      $region68: #{double_conv.1} parent=5 // pred_fallthru
        _
    $region6: #{double_conv.1} parent=1 // loop_footer
      %s21 = sadd.s32 1, %s17
    $region7: #{double_conv.1} parent=1 // loop_footer_branch
      %16 = sbr.rel target = $region3
    $region8: #{double_conv.1} parent=1 // loop_exit
      _
    %4294 = vsyncpa [#allocation6], 1
    %s4295 = scalar_lea.sflag [#allocation6], 1
    %4296 = vsyncpa %s4295, 1
    %4297 = vsyncpa [#allocation9], 1
    %4298 = vsyncpa [#allocation12], 1
    %4299 = vsyncpa [#allocation7], 1
    %s4300 = scalar_lea.sflag [#allocation7], 1
    %4301 = vsyncpa %s4300, 1
  %4302 = vsyncmov [#allocation3]
  %s4303 = vpop.sfrf %4302
  %p4304 = scmp.eq.s32.totalorder %s4303, 0
  %p4305 = pneg %p4304
  %4307 = shalt.err (%p4305)
  %s4308 = scalar_lea.sflag [#allocation3], 1
  %4309 = vsyncmov %s4308
  %s4310 = vpop.sfrf %4309
  %p4311 = scmp.eq.s32.totalorder %s4310, 0
  %p4312 = pneg %p4311
  %4314 = shalt.err (%p4312)

</llo_original>
